<compile_context>
chip_gen: v6e
topology: v6e:2x2x1
jax: 0.10.0
libtpu: 0.0.40
codegen_flags: <defaults>
</compile_context>

<pallas_src>
import functools

import jax
import jax.numpy as jnp
from jax.experimental import pallas as pl
from jax.experimental.pallas import tpu as pltpu


def _round_up(n, m):
    return (n + m - 1) // m * m


def _pick_tile_h(H, W, Cp, budget_bytes=4 << 20):
    """Largest stripe height (<=32) dividing H, with >=2 stripes and a modest
    per-stripe input footprint (keeps double-buffered tiles small on v7x's
    64 MiB VMEM and under v5e's 16 MiB default scoped limit)."""
    for th in (32, 16, 8, 4, 2, 1):
        if H % th != 0 or H // th < 2:
            continue
        if (th + 4) * (W + 2) * Cp * 4 > budget_bytes and th > 1:
            continue
        return th
    return H  # tiny images: single stripe


def _rcab_kernel(xs_ref, w1_ref, b1_ref, w2_ref, b2_ref, o_ref, mid_ref, *,
                 TH, W, Cp, nT, res_scale):
    # xs_ref : (1, TH+4, W+2, Cp) f32  input stripe: 2-row H halo, 1-col W pad,
    #                                  channels zero-padded to Cp
    # w*_ref : (3, 3*Cp, Cp)      bf16 per-dy weights, dx taps folded into K
    # b*_ref : (1, 1, Cp)         f32
    # o_ref  : (1, TH, W, Cp)
    # mid_ref: (TH+2, W+2, Cp)    f32  VMEM scratch: relu(conv1) + conv2 halo
    t = pl.program_id(1)

    # ---------------- conv1 + bias + ReLU over TH+2 rows ---------------------
    m1 = (TH + 2) * W
    acc1 = jnp.broadcast_to(b1_ref[...].reshape(1, Cp), (m1, Cp)).astype(jnp.float32)
    for dy in range(3):
        x_dy = xs_ref[0, dy:dy + TH + 2, :, :]                      # (TH+2, W+2, Cp)
        patch = jnp.concatenate(
            [x_dy[:, 0:W, :], x_dy[:, 1:W + 1, :], x_dy[:, 2:W + 2, :]],
            axis=-1).reshape(m1, 3 * Cp).astype(jnp.bfloat16)       # K = 3*Cp
        acc1 = acc1 + jnp.dot(patch, w1_ref[dy],
                              preferred_element_type=jnp.float32)
    y1 = jnp.maximum(acc1, 0.0).reshape(TH + 2, W, Cp)

    # interior is fully rewritten every step; only thin borders need zeros.
    mid_ref[:, 1:W + 1, :] = y1
    zcol = jnp.zeros((TH + 2, 1, Cp), jnp.float32)
    mid_ref[:, 0:1, :] = zcol
    mid_ref[:, W + 1:W + 2, :] = zcol

    # stripe halo rows that fall outside the image are conv2's zero padding
    @pl.when(t == 0)
    def _():
        mid_ref[0:1, :, :] = jnp.zeros((1, W + 2, Cp), jnp.float32)

    @pl.when(t == nT - 1)
    def _():
        mid_ref[TH + 1:TH + 2, :, :] = jnp.zeros((1, W + 2, Cp), jnp.float32)

    # ---------------- conv2 + bias over TH rows ------------------------------
    m2 = TH * W
    acc2 = jnp.broadcast_to(b2_ref[...].reshape(1, Cp), (m2, Cp)).astype(jnp.float32)
    for dy in range(3):
        m_dy = mid_ref[dy:dy + TH, :, :]                            # (TH, W+2, Cp)
        patch = jnp.concatenate(
            [m_dy[:, 0:W, :], m_dy[:, 1:W + 1, :], m_dy[:, 2:W + 2, :]],
            axis=-1).reshape(m2, 3 * Cp).astype(jnp.bfloat16)
        acc2 = acc2 + jnp.dot(patch, w2_ref[dy],
                              preferred_element_type=jnp.float32)
    res = acc2.reshape(TH, W, Cp) * res_scale

    # ---------------- residual add -------------------------------------------
    x_res = xs_ref[0, 2:TH + 2, 1:W + 1, :]
    o_ref[0] = (res + x_res).astype(o_ref.dtype)


def rcab_no_ca(x_nchw, w1, b1, w2, b2, res_scale=1.0):
    """x_nchw: (B, C, H, W) float32.  w*: (3,3,C,C) HWIO.  b*: (C,)."""
    B, C, H, W = x_nchw.shape
    Cp = _round_up(max(C, 128), 128)        # lane-dense channel axis
    TH = _pick_tile_h(H, W, Cp)
    nT = H // TH

    # ---- layout: NCHW -> NHWC, pad H by 2, W by 1, channels to Cp ----------
    x = jnp.transpose(x_nchw, (0, 2, 3, 1))
    xp = jnp.pad(x, ((0, 0), (2, 2), (1, 1), (0, Cp - C)))          # (B,H+4,W+2,Cp)
    # overlapping H stripes (2-row halo) -> plain non-overlapping BlockSpecs.
    # TODO(synk): for very large images a manual-DMA halo load from an HBM
    # (pl.ANY) ref would avoid materializing the ~(TH+4)/TH duplicated rows.
    xs = jnp.stack([xp[:, t * TH:t * TH + TH + 4] for t in range(nT)], axis=1)
    xs = xs.reshape(B * nT, TH + 4, W + 2, Cp)

    # ---- weights: pad channels, fold dx into K, cast to bf16 ---------------
    def fold(w):
        wpad = jnp.pad(w, ((0, 0), (0, 0), (0, Cp - C), (0, Cp - C)))
        return wpad.reshape(3, 3 * Cp, Cp).astype(jnp.bfloat16)     # [dy, dx*Cp+ci, co]

    w1f, w2f = fold(w1), fold(w2)
    b1r = jnp.pad(b1, (0, Cp - C)).reshape(1, 1, Cp).astype(jnp.float32)
    b2r = jnp.pad(b2, (0, Cp - C)).reshape(1, 1, Cp).astype(jnp.float32)

    kernel = functools.partial(_rcab_kernel, TH=TH, W=W, Cp=Cp, nT=nT,
                               res_scale=float(res_scale))

    flops = 2 * 2 * B * H * W * 9 * Cp * Cp                         # two convs
    bytes_accessed = (xs.size + B * H * W * Cp) * 4 + (w1f.size + w2f.size) * 2

    out_nhwc = pl.pallas_call(
        kernel,
        out_shape=jax.ShapeDtypeStruct((B, H, W, Cp), x_nchw.dtype),
        grid_spec=pltpu.PrefetchScalarGridSpec(
            num_scalar_prefetch=0,
            grid=(B, nT),
            in_specs=[
                pl.BlockSpec((1, TH + 4, W + 2, Cp),
                             lambda b, t: (b * nT + t, 0, 0, 0)),
                pl.BlockSpec((3, 3 * Cp, Cp), lambda b, t: (0, 0, 0)),
                pl.BlockSpec((1, 1, Cp), lambda b, t: (0, 0, 0)),
                pl.BlockSpec((3, 3 * Cp, Cp), lambda b, t: (0, 0, 0)),
                pl.BlockSpec((1, 1, Cp), lambda b, t: (0, 0, 0)),
            ],
            out_specs=pl.BlockSpec((1, TH, W, Cp), lambda b, t: (b, t, 0, 0)),
            scratch_shapes=[pltpu.VMEM((TH + 2, W + 2, Cp), jnp.float32)],
        ),
        compiler_params=pltpu.CompilerParams(
            dimension_semantics=("parallel", "parallel"),
            vmem_limit_bytes=32 * 1024 * 1024),
        cost_estimate=pl.CostEstimate(flops=flops, transcendentals=0,
                                      bytes_accessed=bytes_accessed),
    )(xs, w1f, b1r, w2f, b2r)

    out = out_nhwc[..., :C]                                          # drop channel pad
    return jnp.transpose(out, (0, 3, 1, 2))                          # -> NCHW


def _reference(x_nchw, w1, b1, w2, b2, res_scale=1.0):
    """Pure-JAX reference (lax conv) for correctness checking."""
    def conv(x, w, b):
        dnn = jax.lax.conv_dimension_numbers(x.shape, w.shape,
                                             ("NCHW", "HWIO", "NCHW"))
        y = jax.lax.conv_general_dilated(x, w, (1, 1), "SAME",
                                         dimension_numbers=dnn)
        return y + b.reshape(1, -1, 1, 1)
    y = jax.nn.relu(conv(x_nchw, w1, b1))
    y = conv(y, w2, b2)
    return y * res_scale + x_nchw


if __name__ == "__main__":
    B, C, H, W = 2, 4, 16, 16
    res_scale = 1.0
    key = jax.random.PRNGKey(0)
    k_x, k_w1, k_b1, k_w2, k_b2 = jax.random.split(key, 5)

    x = jax.random.normal(k_x, (B, C, H, W), jnp.float32)
    w1 = 0.1 * jax.random.normal(k_w1, (3, 3, C, C), jnp.float32)   # HWIO
    b1 = 0.1 * jax.random.normal(k_b1, (C,), jnp.float32)
    w2 = 0.1 * jax.random.normal(k_w2, (3, 3, C, C), jnp.float32)
    b2 = 0.1 * jax.random.normal(k_b2, (C,), jnp.float32)

    out = rcab_no_ca(x, w1, b1, w2, b2, res_scale)
    out = jax.block_until_ready(out)

    ref = _reference(x, w1, b1, w2, b2, res_scale)
    assert out.shape == (B, C, H, W)
    err = float(jnp.max(jnp.abs(out - ref)))
    # bf16 MXU operands (f32 accumulation) -> loosened tolerance vs f32 ref
    assert err < 5e-2, f"max abs err {err}"

    print("KERNEL_OK")
</pallas_src>

<mosaic_0001>
module attributes {stable_mosaic.version = 11 : i64} {
  func.func @_rcab_kernel(%arg0: i32, %arg1: i32, %arg2: memref<1x12x18x128xf32, #tpu.memory_space<vmem>>, %arg3: memref<3x384x128xbf16, #tpu.memory_space<vmem>>, %arg4: memref<1x1x128xf32, #tpu.memory_space<vmem>>, %arg5: memref<3x384x128xbf16, #tpu.memory_space<vmem>>, %arg6: memref<1x1x128xf32, #tpu.memory_space<vmem>>, %arg7: memref<1x8x16x128xf32, #tpu.memory_space<vmem>>, %arg8: memref<10x18x128xf32, #tpu.memory_space<vmem>>) attributes {dimension_semantics = [#tpu.dimension_semantics<parallel>, #tpu.dimension_semantics<parallel>], iteration_bounds = array<i64: 2, 2>, scalar_prefetch = 0 : i64, scratch_operands = 1 : i64, tpu.core_type = #tpu.core_type<tc>, window_params = [{transform_indices = @transform_0, window_bounds = array<i64: 1, 12, 18, 128>}, {pipeline_mode = #tpu.pipeline_mode<synchronous>, transform_indices = @transform_1, window_bounds = array<i64: 3, 384, 128>}, {pipeline_mode = #tpu.pipeline_mode<synchronous>, transform_indices = @transform_2, window_bounds = array<i64: 1, 1, 128>}, {pipeline_mode = #tpu.pipeline_mode<synchronous>, transform_indices = @transform_3, window_bounds = array<i64: 3, 384, 128>}, {pipeline_mode = #tpu.pipeline_mode<synchronous>, transform_indices = @transform_4, window_bounds = array<i64: 1, 1, 128>}, {transform_indices = @transform_5, window_bounds = array<i64: 1, 8, 16, 128>}]} {
    %c0 = arith.constant 0 : index
    %c0_0 = arith.constant 0 : index
    %c0_1 = arith.constant 0 : index
    %0 = vector.load %arg4[%c0, %c0_0, %c0_1] : memref<1x1x128xf32, #tpu.memory_space<vmem>>, vector<1x1x128xf32>
    %1 = vector.shape_cast %0 : vector<1x1x128xf32> to vector<1x128xf32>
    %2 = vector.shape_cast %1 : vector<1x128xf32> to vector<1x128xf32>
    %3 = vector.broadcast %2 : vector<1x128xf32> to vector<160x128xf32>
    %c0_2 = arith.constant 0 : index
    %c0_3 = arith.constant 0 : index
    %c0_4 = arith.constant 0 : index
    %c0_5 = arith.constant 0 : index
    %4 = vector.load %arg2[%c0_2, %c0_3, %c0_4, %c0_5] : memref<1x12x18x128xf32, #tpu.memory_space<vmem>>, vector<1x10x18x128xf32>
    %5 = vector.shape_cast %4 : vector<1x10x18x128xf32> to vector<10x18x128xf32>
    %6 = vector.extract_strided_slice %5 {offsets = [0, 0, 0], sizes = [10, 16, 128], strides = [1, 1, 1]} : vector<10x18x128xf32> to vector<10x16x128xf32>
    %7 = vector.extract_strided_slice %5 {offsets = [0, 1, 0], sizes = [10, 16, 128], strides = [1, 1, 1]} : vector<10x18x128xf32> to vector<10x16x128xf32>
    %8 = vector.extract_strided_slice %5 {offsets = [0, 2, 0], sizes = [10, 16, 128], strides = [1, 1, 1]} : vector<10x18x128xf32> to vector<10x16x128xf32>
    %9 = tpu.concatenate %6, %7, %8 in 2 : vector<10x16x128xf32>, vector<10x16x128xf32>, vector<10x16x128xf32> -> vector<10x16x384xf32>
    %10 = vector.shape_cast %9 : vector<10x16x384xf32> to vector<160x384xf32>
    %11 = arith.truncf %10 : vector<160x384xf32> to vector<160x384xbf16>
    %c0_6 = arith.constant 0 : index
    %c0_7 = arith.constant 0 : index
    %c0_8 = arith.constant 0 : index
    %12 = vector.load %arg3[%c0_6, %c0_7, %c0_8] : memref<3x384x128xbf16, #tpu.memory_space<vmem>>, vector<1x384x128xbf16>
    %13 = vector.shape_cast %12 : vector<1x384x128xbf16> to vector<384x128xbf16>
    %cst = arith.constant dense<0.000000e+00> : vector<160x128xf32>
    %14 = tpu.matmul %11, %13, %cst {dimension_numbers = #tpu.dot_dimension_numbers<[1], [0], [0], [1], [0, 0, 1, 1], [], []>} : vector<160x384xbf16>, vector<384x128xbf16>, vector<160x128xf32> -> vector<160x128xf32>
    %15 = arith.addf %3, %14 : vector<160x128xf32>
    %c0_9 = arith.constant 0 : index
    %c1 = arith.constant 1 : index
    %c0_10 = arith.constant 0 : index
    %c0_11 = arith.constant 0 : index
    %16 = vector.load %arg2[%c0_9, %c1, %c0_10, %c0_11] : memref<1x12x18x128xf32, #tpu.memory_space<vmem>>, vector<1x10x18x128xf32>
    %17 = vector.shape_cast %16 : vector<1x10x18x128xf32> to vector<10x18x128xf32>
    %18 = vector.extract_strided_slice %17 {offsets = [0, 0, 0], sizes = [10, 16, 128], strides = [1, 1, 1]} : vector<10x18x128xf32> to vector<10x16x128xf32>
    %19 = vector.extract_strided_slice %17 {offsets = [0, 1, 0], sizes = [10, 16, 128], strides = [1, 1, 1]} : vector<10x18x128xf32> to vector<10x16x128xf32>
    %20 = vector.extract_strided_slice %17 {offsets = [0, 2, 0], sizes = [10, 16, 128], strides = [1, 1, 1]} : vector<10x18x128xf32> to vector<10x16x128xf32>
    %21 = tpu.concatenate %18, %19, %20 in 2 : vector<10x16x128xf32>, vector<10x16x128xf32>, vector<10x16x128xf32> -> vector<10x16x384xf32>
    %22 = vector.shape_cast %21 : vector<10x16x384xf32> to vector<160x384xf32>
    %23 = arith.truncf %22 : vector<160x384xf32> to vector<160x384xbf16>
    %c1_12 = arith.constant 1 : index
    %c0_13 = arith.constant 0 : index
    %c0_14 = arith.constant 0 : index
    %24 = vector.load %arg3[%c1_12, %c0_13, %c0_14] : memref<3x384x128xbf16, #tpu.memory_space<vmem>>, vector<1x384x128xbf16>
    %25 = vector.shape_cast %24 : vector<1x384x128xbf16> to vector<384x128xbf16>
    %cst_15 = arith.constant dense<0.000000e+00> : vector<160x128xf32>
    %26 = tpu.matmul %23, %25, %cst_15 {dimension_numbers = #tpu.dot_dimension_numbers<[1], [0], [0], [1], [0, 0, 1, 1], [], []>} : vector<160x384xbf16>, vector<384x128xbf16>, vector<160x128xf32> -> vector<160x128xf32>
    %27 = arith.addf %15, %26 : vector<160x128xf32>
    %c0_16 = arith.constant 0 : index
    %c2 = arith.constant 2 : index
    %c0_17 = arith.constant 0 : index
    %c0_18 = arith.constant 0 : index
    %28 = vector.load %arg2[%c0_16, %c2, %c0_17, %c0_18] : memref<1x12x18x128xf32, #tpu.memory_space<vmem>>, vector<1x10x18x128xf32>
    %29 = vector.shape_cast %28 : vector<1x10x18x128xf32> to vector<10x18x128xf32>
    %30 = vector.extract_strided_slice %29 {offsets = [0, 0, 0], sizes = [10, 16, 128], strides = [1, 1, 1]} : vector<10x18x128xf32> to vector<10x16x128xf32>
    %31 = vector.extract_strided_slice %29 {offsets = [0, 1, 0], sizes = [10, 16, 128], strides = [1, 1, 1]} : vector<10x18x128xf32> to vector<10x16x128xf32>
    %32 = vector.extract_strided_slice %29 {offsets = [0, 2, 0], sizes = [10, 16, 128], strides = [1, 1, 1]} : vector<10x18x128xf32> to vector<10x16x128xf32>
    %33 = tpu.concatenate %30, %31, %32 in 2 : vector<10x16x128xf32>, vector<10x16x128xf32>, vector<10x16x128xf32> -> vector<10x16x384xf32>
    %34 = vector.shape_cast %33 : vector<10x16x384xf32> to vector<160x384xf32>
    %35 = arith.truncf %34 : vector<160x384xf32> to vector<160x384xbf16>
    %c2_19 = arith.constant 2 : index
    %c0_20 = arith.constant 0 : index
    %c0_21 = arith.constant 0 : index
    %36 = vector.load %arg3[%c2_19, %c0_20, %c0_21] : memref<3x384x128xbf16, #tpu.memory_space<vmem>>, vector<1x384x128xbf16>
    %37 = vector.shape_cast %36 : vector<1x384x128xbf16> to vector<384x128xbf16>
    %cst_22 = arith.constant dense<0.000000e+00> : vector<160x128xf32>
    %38 = tpu.matmul %35, %37, %cst_22 {dimension_numbers = #tpu.dot_dimension_numbers<[1], [0], [0], [1], [0, 0, 1, 1], [], []>} : vector<160x384xbf16>, vector<384x128xbf16>, vector<160x128xf32> -> vector<160x128xf32>
    %39 = arith.addf %27, %38 : vector<160x128xf32>
    %cst_23 = arith.constant 0.000000e+00 : f32
    %40 = vector.broadcast %cst_23 : f32 to vector<160x128xf32>
    %41 = arith.maximumf %39, %40 : vector<160x128xf32>
    %42 = vector.shape_cast %41 : vector<160x128xf32> to vector<10x16x128xf32>
    %c0_24 = arith.constant 0 : index
    %c1_25 = arith.constant 1 : index
    %c0_26 = arith.constant 0 : index
    %43 = vector.load %arg8[%c0_24, %c1_25, %c0_26] : memref<10x18x128xf32, #tpu.memory_space<vmem>>, vector<10x16x128xf32>
    tpu.vector_store %arg8[%c0_24, %c1_25, %c0_26], %42 {strides = array<i32>} : memref<10x18x128xf32, #tpu.memory_space<vmem>>, vector<10x16x128xf32>,
    %cst_27 = arith.constant 0.000000e+00 : f32
    %44 = vector.broadcast %cst_27 : f32 to vector<10x1x128xf32>
    %c0_28 = arith.constant 0 : index
    %c0_29 = arith.constant 0 : index
    %c0_30 = arith.constant 0 : index
    %45 = vector.load %arg8[%c0_28, %c0_29, %c0_30] : memref<10x18x128xf32, #tpu.memory_space<vmem>>, vector<10x1x128xf32>
    tpu.vector_store %arg8[%c0_28, %c0_29, %c0_30], %44 {strides = array<i32>} : memref<10x18x128xf32, #tpu.memory_space<vmem>>, vector<10x1x128xf32>,
    %c0_31 = arith.constant 0 : index
    %c17 = arith.constant 17 : index
    %c0_32 = arith.constant 0 : index
    %46 = vector.load %arg8[%c0_31, %c17, %c0_32] : memref<10x18x128xf32, #tpu.memory_space<vmem>>, vector<10x1x128xf32>
    tpu.vector_store %arg8[%c0_31, %c17, %c0_32], %44 {strides = array<i32>} : memref<10x18x128xf32, #tpu.memory_space<vmem>>, vector<10x1x128xf32>,
    %c0_i32 = arith.constant 0 : i32
    %47 = arith.cmpi eq, %arg1, %c0_i32 : i32
    %48 = arith.extui %47 : i1 to i32
    %c0_i32_33 = arith.constant 0 : i32
    %49 = arith.cmpi ne, %48, %c0_i32_33 : i32
    scf.if %49 {
      %cst_68 = arith.constant 0.000000e+00 : f32
      %99 = vector.broadcast %cst_68 : f32 to vector<1x18x128xf32>
      %c0_69 = arith.constant 0 : index
      %c0_70 = arith.constant 0 : index
      %c0_71 = arith.constant 0 : index
      %100 = vector.load %arg8[%c0_69, %c0_70, %c0_71] : memref<10x18x128xf32, #tpu.memory_space<vmem>>, vector<1x18x128xf32>
      tpu.vector_store %arg8[%c0_69, %c0_70, %c0_71], %99 {strides = array<i32>} : memref<10x18x128xf32, #tpu.memory_space<vmem>>, vector<1x18x128xf32>,
    } else {
    }
    %c1_i32 = arith.constant 1 : i32
    %50 = arith.cmpi eq, %arg1, %c1_i32 : i32
    %51 = arith.extui %50 : i1 to i32
    %c0_i32_34 = arith.constant 0 : i32
    %52 = arith.cmpi ne, %51, %c0_i32_34 : i32
    scf.if %52 {
      %cst_68 = arith.constant 0.000000e+00 : f32
      %99 = vector.broadcast %cst_68 : f32 to vector<1x18x128xf32>
      %c9 = arith.constant 9 : index
      %c0_69 = arith.constant 0 : index
      %c0_70 = arith.constant 0 : index
      %100 = vector.load %arg8[%c9, %c0_69, %c0_70] : memref<10x18x128xf32, #tpu.memory_space<vmem>>, vector<1x18x128xf32>
      tpu.vector_store %arg8[%c9, %c0_69, %c0_70], %99 {strides = array<i32>} : memref<10x18x128xf32, #tpu.memory_space<vmem>>, vector<1x18x128xf32>,
    } else {
    }
    %c0_35 = arith.constant 0 : index
    %c0_36 = arith.constant 0 : index
    %c0_37 = arith.constant 0 : index
    %53 = vector.load %arg6[%c0_35, %c0_36, %c0_37] : memref<1x1x128xf32, #tpu.memory_space<vmem>>, vector<1x1x128xf32>
    %54 = vector.shape_cast %53 : vector<1x1x128xf32> to vector<1x128xf32>
    %55 = vector.shape_cast %54 : vector<1x128xf32> to vector<1x128xf32>
    %56 = vector.broadcast %55 : vector<1x128xf32> to vector<128x128xf32>
    %c0_38 = arith.constant 0 : index
    %c0_39 = arith.constant 0 : index
    %c0_40 = arith.constant 0 : index
    %57 = vector.load %arg8[%c0_38, %c0_39, %c0_40] : memref<10x18x128xf32, #tpu.memory_space<vmem>>, vector<8x18x128xf32>
    %58 = vector.extract_strided_slice %57 {offsets = [0, 0, 0], sizes = [8, 16, 128], strides = [1, 1, 1]} : vector<8x18x128xf32> to vector<8x16x128xf32>
    %59 = vector.extract_strided_slice %57 {offsets = [0, 1, 0], sizes = [8, 16, 128], strides = [1, 1, 1]} : vector<8x18x128xf32> to vector<8x16x128xf32>
    %60 = vector.extract_strided_slice %57 {offsets = [0, 2, 0], sizes = [8, 16, 128], strides = [1, 1, 1]} : vector<8x18x128xf32> to vector<8x16x128xf32>
    %61 = tpu.concatenate %58, %59, %60 in 2 : vector<8x16x128xf32>, vector<8x16x128xf32>, vector<8x16x128xf32> -> vector<8x16x384xf32>
    %62 = vector.shape_cast %61 : vector<8x16x384xf32> to vector<128x384xf32>
    %63 = arith.truncf %62 : vector<128x384xf32> to vector<128x384xbf16>
    %c0_41 = arith.constant 0 : index
    %c0_42 = arith.constant 0 : index
    %c0_43 = arith.constant 0 : index
    %64 = vector.load %arg5[%c0_41, %c0_42, %c0_43] : memref<3x384x128xbf16, #tpu.memory_space<vmem>>, vector<1x384x128xbf16>
    %65 = vector.shape_cast %64 : vector<1x384x128xbf16> to vector<384x128xbf16>
    %cst_44 = arith.constant dense<0.000000e+00> : vector<128x128xf32>
    %66 = tpu.matmul %63, %65, %cst_44 {dimension_numbers = #tpu.dot_dimension_numbers<[1], [0], [0], [1], [0, 0, 1, 1], [], []>} : vector<128x384xbf16>, vector<384x128xbf16>, vector<128x128xf32> -> vector<128x128xf32>
    %67 = arith.addf %56, %66 : vector<128x128xf32>
    %c1_45 = arith.constant 1 : index
    %c0_46 = arith.constant 0 : index
    %c0_47 = arith.constant 0 : index
    %68 = vector.load %arg8[%c1_45, %c0_46, %c0_47] : memref<10x18x128xf32, #tpu.memory_space<vmem>>, vector<8x18x128xf32>
    %69 = vector.extract_strided_slice %68 {offsets = [0, 0, 0], sizes = [8, 16, 128], strides = [1, 1, 1]} : vector<8x18x128xf32> to vector<8x16x128xf32>
    %70 = vector.extract_strided_slice %68 {offsets = [0, 1, 0], sizes = [8, 16, 128], strides = [1, 1, 1]} : vector<8x18x128xf32> to vector<8x16x128xf32>
    %71 = vector.extract_strided_slice %68 {offsets = [0, 2, 0], sizes = [8, 16, 128], strides = [1, 1, 1]} : vector<8x18x128xf32> to vector<8x16x128xf32>
    %72 = tpu.concatenate %69, %70, %71 in 2 : vector<8x16x128xf32>, vector<8x16x128xf32>, vector<8x16x128xf32> -> vector<8x16x384xf32>
    %73 = vector.shape_cast %72 : vector<8x16x384xf32> to vector<128x384xf32>
    %74 = arith.truncf %73 : vector<128x384xf32> to vector<128x384xbf16>
    %c1_48 = arith.constant 1 : index
    %c0_49 = arith.constant 0 : index
    %c0_50 = arith.constant 0 : index
    %75 = vector.load %arg5[%c1_48, %c0_49, %c0_50] : memref<3x384x128xbf16, #tpu.memory_space<vmem>>, vector<1x384x128xbf16>
    %76 = vector.shape_cast %75 : vector<1x384x128xbf16> to vector<384x128xbf16>
    %cst_51 = arith.constant dense<0.000000e+00> : vector<128x128xf32>
    %77 = tpu.matmul %74, %76, %cst_51 {dimension_numbers = #tpu.dot_dimension_numbers<[1], [0], [0], [1], [0, 0, 1, 1], [], []>} : vector<128x384xbf16>, vector<384x128xbf16>, vector<128x128xf32> -> vector<128x128xf32>
    %78 = arith.addf %67, %77 : vector<128x128xf32>
    %c2_52 = arith.constant 2 : index
    %c0_53 = arith.constant 0 : index
    %c0_54 = arith.constant 0 : index
    %79 = vector.load %arg8[%c2_52, %c0_53, %c0_54] : memref<10x18x128xf32, #tpu.memory_space<vmem>>, vector<8x18x128xf32>
    %80 = vector.extract_strided_slice %79 {offsets = [0, 0, 0], sizes = [8, 16, 128], strides = [1, 1, 1]} : vector<8x18x128xf32> to vector<8x16x128xf32>
    %81 = vector.extract_strided_slice %79 {offsets = [0, 1, 0], sizes = [8, 16, 128], strides = [1, 1, 1]} : vector<8x18x128xf32> to vector<8x16x128xf32>
    %82 = vector.extract_strided_slice %79 {offsets = [0, 2, 0], sizes = [8, 16, 128], strides = [1, 1, 1]} : vector<8x18x128xf32> to vector<8x16x128xf32>
    %83 = tpu.concatenate %80, %81, %82 in 2 : vector<8x16x128xf32>, vector<8x16x128xf32>, vector<8x16x128xf32> -> vector<8x16x384xf32>
    %84 = vector.shape_cast %83 : vector<8x16x384xf32> to vector<128x384xf32>
    %85 = arith.truncf %84 : vector<128x384xf32> to vector<128x384xbf16>
    %c2_55 = arith.constant 2 : index
    %c0_56 = arith.constant 0 : index
    %c0_57 = arith.constant 0 : index
    %86 = vector.load %arg5[%c2_55, %c0_56, %c0_57] : memref<3x384x128xbf16, #tpu.memory_space<vmem>>, vector<1x384x128xbf16>
    %87 = vector.shape_cast %86 : vector<1x384x128xbf16> to vector<384x128xbf16>
    %cst_58 = arith.constant dense<0.000000e+00> : vector<128x128xf32>
    %88 = tpu.matmul %85, %87, %cst_58 {dimension_numbers = #tpu.dot_dimension_numbers<[1], [0], [0], [1], [0, 0, 1, 1], [], []>} : vector<128x384xbf16>, vector<384x128xbf16>, vector<128x128xf32> -> vector<128x128xf32>
    %89 = arith.addf %78, %88 : vector<128x128xf32>
    %90 = vector.shape_cast %89 : vector<128x128xf32> to vector<8x16x128xf32>
    %cst_59 = arith.constant 1.000000e+00 : f32
    %91 = vector.broadcast %cst_59 : f32 to vector<8x16x128xf32>
    %92 = arith.mulf %90, %91 : vector<8x16x128xf32>
    %c0_60 = arith.constant 0 : index
    %c2_61 = arith.constant 2 : index
    %c1_62 = arith.constant 1 : index
    %c0_63 = arith.constant 0 : index
    %93 = vector.load %arg2[%c0_60, %c2_61, %c1_62, %c0_63] : memref<1x12x18x128xf32, #tpu.memory_space<vmem>>, vector<1x8x16x128xf32>
    %94 = vector.shape_cast %93 : vector<1x8x16x128xf32> to vector<8x16x128xf32>
    %95 = arith.addf %92, %94 : vector<8x16x128xf32>
    %c0_64 = arith.constant 0 : index
    %c0_65 = arith.constant 0 : index
    %c0_66 = arith.constant 0 : index
    %c0_67 = arith.constant 0 : index
    %96 = vector.load %arg7[%c0_64, %c0_65, %c0_66, %c0_67] : memref<1x8x16x128xf32, #tpu.memory_space<vmem>>, vector<1x8x16x128xf32>
    %97 = vector.shape_cast %96 : vector<1x8x16x128xf32> to vector<8x16x128xf32>
    %98 = vector.shape_cast %95 : vector<8x16x128xf32> to vector<1x8x16x128xf32>
    tpu.vector_store %arg7[%c0_64, %c0_65, %c0_66, %c0_67], %98 {strides = array<i32>} : memref<1x8x16x128xf32, #tpu.memory_space<vmem>>, vector<1x8x16x128xf32>,
    return
  }
  func.func @transform_0(%arg0: i32, %arg1: i32) -> (i32, i32, i32, i32) {
    %c2_i32 = arith.constant 2 : i32
    %0 = arith.muli %arg0, %c2_i32 : i32
    %1 = arith.addi %0, %arg1 : i32
    %c0_i32 = arith.constant 0 : i32
    %c0_i32_0 = arith.constant 0 : i32
    %c0_i32_1 = arith.constant 0 : i32
    %c0_i32_2 = arith.constant 0 : i32
    return %1, %c0_i32, %c0_i32_0, %c0_i32_1 : i32, i32, i32, i32
  }
  func.func @transform_1(%arg0: i32, %arg1: i32) -> (i32, i32, i32) {
    %c0_i32 = arith.constant 0 : i32
    %c0_i32_0 = arith.constant 0 : i32
    %c0_i32_1 = arith.constant 0 : i32
    %c0_i32_2 = arith.constant 0 : i32
    return %c0_i32, %c0_i32_0, %c0_i32_1 : i32, i32, i32
  }
  func.func @transform_2(%arg0: i32, %arg1: i32) -> (i32, i32, i32) {
    %c0_i32 = arith.constant 0 : i32
    %c0_i32_0 = arith.constant 0 : i32
    %c0_i32_1 = arith.constant 0 : i32
    %c0_i32_2 = arith.constant 0 : i32
    return %c0_i32, %c0_i32_0, %c0_i32_1 : i32, i32, i32
  }
  func.func @transform_3(%arg0: i32, %arg1: i32) -> (i32, i32, i32) {
    %c0_i32 = arith.constant 0 : i32
    %c0_i32_0 = arith.constant 0 : i32
    %c0_i32_1 = arith.constant 0 : i32
    %c0_i32_2 = arith.constant 0 : i32
    return %c0_i32, %c0_i32_0, %c0_i32_1 : i32, i32, i32
  }
  func.func @transform_4(%arg0: i32, %arg1: i32) -> (i32, i32, i32) {
    %c0_i32 = arith.constant 0 : i32
    %c0_i32_0 = arith.constant 0 : i32
    %c0_i32_1 = arith.constant 0 : i32
    %c0_i32_2 = arith.constant 0 : i32
    return %c0_i32, %c0_i32_0, %c0_i32_1 : i32, i32, i32
  }
  func.func @transform_5(%arg0: i32, %arg1: i32) -> (i32, i32, i32, i32) {
    %c0_i32 = arith.constant 0 : i32
    %c0_i32_0 = arith.constant 0 : i32
    %c0_i32_1 = arith.constant 0 : i32
    return %arg0, %arg1, %c0_i32, %c0_i32_0 : i32, i32, i32, i32
  }
}

</mosaic_0001>

<llo_original>
// kernel: tpu_custom_call.1
$region0: #{tpu_custom_call.1}
  #allocation0 [shape = 'u32[]', space=smem, size = 0x4, offset = 0x4, fixed_abs, tag = 'smem constant byte address 0x4 - core index']
  #allocation1 [shape = 'u32[144,128]{1,0:T(1,128)}', space=vmem, size = 0x12000, scoped, tag = 'internal scratch']
  #allocation2 [shape = 'f32[10,18,128]{2,1,0:T(8,128)}', space=vmem, size = 0x1e000, scoped, tag = 'scratch operand']
  %s0 = inlined_call_operand.vmem [shape: f32[4,12,18,128], index: 0, kind: input, shape index: {}]
  %s1 = inlined_call_operand.vmem [shape: bf16[3,384,128], index: 1, kind: input, shape index: {}]
  %s2 = inlined_call_operand.vmem [shape: f32[1,1,128], index: 2, kind: input, shape index: {}]
  %s3 = inlined_call_operand.vmem [shape: bf16[3,384,128], index: 3, kind: input, shape index: {}]
  %s4 = inlined_call_operand.vmem [shape: f32[1,1,128], index: 4, kind: input, shape index: {}]
  %s5 = inlined_call_operand.hbm [shape: f32[2,16,16,128], index: 5, kind: output, shape index: {}]
  %s6 = sld [smem:[#allocation0]]
  $region61: #{tpu_custom_call.1} parent=0
    _
  %s8 = ssub.s32 1, %s6
  %s9 = scalar_select 0, %s8, %s6
  $region1: #{tpu_custom_call.1} parent=0
    #allocation3 [shape = 'u8[131072]{0}', space=vmem, size = 0x20000, scoped, tag = 'output window, operand 0']
    #allocation4 [shape = 's32[2]{0}', space=sflag, size = 0x8, scoped, tag = 'scoped memory for tpu_custom_call.1']
    %10 = vsyncpa [#allocation4], 0
    %s11 = scalar_lea.sflag [#allocation4], 1
    %12 = vsyncpa %s11, 0
    loop: start=0, step=1, limit=6
    $region2: #{tpu_custom_call.1} parent=1 // loop_pre_header
      _
    $region3: #{tpu_custom_call.1} parent=1 // loop_header
      %s14 = sphi 0, %s18
      %p15 = scmp.ge.s32.totalorder %s14, 6
      %s21 = sphi 0, %s33
      %s22 = sphi 0, %s29
      %s23 = sphi 0, %s21
      %s24 = sphi 0, %s22
      %s25 = sphi 0, %s23
      %s26 = sphi 0, %s24
      %s40 = sphi 0, %s42
      %s43 = sphi 0, %s40
      %s44 = sphi 0, %s43
      %s60 = sphi 0, %s44
      %s64 = sphi 0, %s64
      %s66 = sphi 0, %s64
      %s67 = sphi 0, %s66
      %s81 = sphi 0, %s67
      %s85 = sphi 0, %s85
      %s87 = sphi 0, %s85
      %s88 = sphi 0, %s87
      %s102 = sphi 0, %s88
      %s106 = sphi 0, %s106
      %s108 = sphi 0, %s106
      %s109 = sphi 0, %s108
      %s123 = sphi 0, %s109
      %s127 = sphi 0, %s127
      %s129 = sphi 0, %s127
      %s130 = sphi 0, %s129
      %s144 = sphi 0, %s130
      %s152 = sphi 0, %s154
      %s155 = sphi 0, %s152
      %s156 = sphi 0, %s155
      %s172 = sphi 0, %s156
    $region4: #{tpu_custom_call.1} parent=1 // loop_header_branch
      %17 = sbr.rel (%p15) target = $region8
    $region5: #{tpu_custom_call.1} parent=1 // loop_body
      %s19 = ssub.s32 %s14, 1
      %s20 = ssub.s32 %s14, 2
      %s27 = sadd.s32 1, %s22
      %p28 = scmp.ge.s32.totalorder %s27, 2
      %s29 = scalar_select %p28, 0, %s27
      %s30 = sadd.s32 1, %s21
      %s31 = scalar_select %p28, %s30, %s21
      %p32 = scmp.ge.s32.totalorder %s31, 2
      %s33 = scalar_select %p32, 0, %s31
      %s34 = smul.u32 %s21, 2
      %s35 = sadd.s32 %s34, %s22
      %s36 = smul.u32 %s33, 2
      %s37 = sadd.s32 %s36, %s29
      %s38 = ssub.s32 %s35, %s37
      %p39 = scmp.eq.s32.totalorder %s38, 0
      %s41 = sadd.s32 %s40, 1
      %s42 = scalar_select %p39, %s40, %s41
      %p45 = pneg %p39
      %p46 = scmp.eq.s32.totalorder %s14, 3
      %p47 = por %p45, %p46
      %p48 = scmp.ne.s32.totalorder %s40, %s43
      %p49 = scmp.eq.s32.totalorder %s14, 0
      %p50 = por %p48, %p49
      %p51 = scmp.ne.s32.totalorder %s40, %s43
      %p52 = scmp.eq.s32.totalorder %s19, 3
      %p53 = por %p51, %p52
      %p54 = scmp.ne.s32.totalorder %s43, %s44
      %p55 = scmp.eq.s32.totalorder %s19, 0
      %p56 = por %p54, %p55
      %p57 = scmp.ne.s32.totalorder %s43, %s44
      %p58 = scmp.eq.s32.totalorder %s20, 3
      %p59 = por %p57, %p58
      %p61 = scmp.ne.s32.totalorder %s44, %s60
      %p62 = scmp.eq.s32.totalorder %s20, 0
      %p63 = por %p61, %p62
      %s65 = sadd.s32 %s64, 1
      %p68 = scmp.eq.s32.totalorder %s14, 3
      %p69 = scmp.ne.s32.totalorder %s64, %s66
      %p70 = scmp.eq.s32.totalorder %s14, 0
      %p71 = por %p69, %p70
      %p72 = scmp.ne.s32.totalorder %s64, %s66
      %p73 = scmp.eq.s32.totalorder %s19, 3
      %p74 = por %p72, %p73
      %p75 = scmp.ne.s32.totalorder %s66, %s67
      %p76 = scmp.eq.s32.totalorder %s19, 0
      %p77 = por %p75, %p76
      %p78 = scmp.ne.s32.totalorder %s66, %s67
      %p79 = scmp.eq.s32.totalorder %s20, 3
      %p80 = por %p78, %p79
      %p82 = scmp.ne.s32.totalorder %s67, %s81
      %p83 = scmp.eq.s32.totalorder %s20, 0
      %p84 = por %p82, %p83
      %s86 = sadd.s32 %s85, 1
      %p89 = scmp.eq.s32.totalorder %s14, 3
      %p90 = scmp.ne.s32.totalorder %s85, %s87
      %p91 = scmp.eq.s32.totalorder %s14, 0
      %p92 = por %p90, %p91
      %p93 = scmp.ne.s32.totalorder %s85, %s87
      %p94 = scmp.eq.s32.totalorder %s19, 3
      %p95 = por %p93, %p94
      %p96 = scmp.ne.s32.totalorder %s87, %s88
      %p97 = scmp.eq.s32.totalorder %s19, 0
      %p98 = por %p96, %p97
      %p99 = scmp.ne.s32.totalorder %s87, %s88
      %p100 = scmp.eq.s32.totalorder %s20, 3
      %p101 = por %p99, %p100
      %p103 = scmp.ne.s32.totalorder %s88, %s102
      %p104 = scmp.eq.s32.totalorder %s20, 0
      %p105 = por %p103, %p104
      %s107 = sadd.s32 %s106, 1
      %p110 = scmp.eq.s32.totalorder %s14, 3
      %p111 = scmp.ne.s32.totalorder %s106, %s108
      %p112 = scmp.eq.s32.totalorder %s14, 0
      %p113 = por %p111, %p112
      %p114 = scmp.ne.s32.totalorder %s106, %s108
      %p115 = scmp.eq.s32.totalorder %s19, 3
      %p116 = por %p114, %p115
      %p117 = scmp.ne.s32.totalorder %s108, %s109
      %p118 = scmp.eq.s32.totalorder %s19, 0
      %p119 = por %p117, %p118
      %p120 = scmp.ne.s32.totalorder %s108, %s109
      %p121 = scmp.eq.s32.totalorder %s20, 3
      %p122 = por %p120, %p121
      %p124 = scmp.ne.s32.totalorder %s109, %s123
      %p125 = scmp.eq.s32.totalorder %s20, 0
      %p126 = por %p124, %p125
      %s128 = sadd.s32 %s127, 1
      %p131 = scmp.eq.s32.totalorder %s14, 3
      %p132 = scmp.ne.s32.totalorder %s127, %s129
      %p133 = scmp.eq.s32.totalorder %s14, 0
      %p134 = por %p132, %p133
      %p135 = scmp.ne.s32.totalorder %s127, %s129
      %p136 = scmp.eq.s32.totalorder %s19, 3
      %p137 = por %p135, %p136
      %p138 = scmp.ne.s32.totalorder %s129, %s130
      %p139 = scmp.eq.s32.totalorder %s19, 0
      %p140 = por %p138, %p139
      %p141 = scmp.ne.s32.totalorder %s129, %s130
      %p142 = scmp.eq.s32.totalorder %s20, 3
      %p143 = por %p141, %p142
      %p145 = scmp.ne.s32.totalorder %s130, %s144
      %p146 = scmp.eq.s32.totalorder %s20, 0
      %p147 = por %p145, %p146
      %s148 = ssub.s32 %s21, %s33
      %s149 = ssub.s32 %s22, %s29
      %s150 = sor.u32 %s148, %s149
      %p151 = scmp.eq.s32.totalorder %s150, 0
      %s153 = sadd.s32 %s152, 1
      %s154 = scalar_select %p151, %s152, %s153
      %p157 = pneg %p151
      %p158 = scmp.eq.s32.totalorder %s14, 3
      %p159 = por %p157, %p158
      %p160 = scmp.ne.s32.totalorder %s152, %s155
      %p161 = scmp.eq.s32.totalorder %s14, 0
      %p162 = por %p160, %p161
      %p163 = scmp.ne.s32.totalorder %s152, %s155
      %p164 = scmp.eq.s32.totalorder %s19, 3
      %p165 = por %p163, %p164
      %p166 = scmp.ne.s32.totalorder %s155, %s156
      %p167 = scmp.eq.s32.totalorder %s19, 0
      %p168 = por %p166, %p167
      %p169 = scmp.ne.s32.totalorder %s155, %s156
      %p170 = scmp.eq.s32.totalorder %s20, 3
      %p171 = por %p169, %p170
      %p173 = scmp.ne.s32.totalorder %s156, %s172
      %p174 = scmp.eq.s32.totalorder %s20, 0
      %p175 = por %p173, %p174
      %p176 = scmp.le.s32.totalorder 1, %s14
      %p177 = scmp.lt.s32.totalorder %s14, 5
      %p178 = pnand %p176, %p177
      %p179 = pneg %p178
      // Predicated region
      $region9: #{tpu_custom_call.1} parent=5 // pred_check
        _
      $region10: #{tpu_custom_call.1} parent=5 // pred_check_branch
        %181 = sbr.rel (%p178) target = $region12
      $region11: #{tpu_custom_call.1} parent=5 // pred_region
        %s182 = ssub.s32 %s14, 1
        // Predicated region
        $region13: #{tpu_custom_call.1} parent=11 // pred_check
          %p183 = pneg %p77
        $region14: #{tpu_custom_call.1} parent=11 // pred_check_branch
          %185 = sbr.rel (%p183) target = $region16
        $region15: #{tpu_custom_call.1} parent=11 // pred_region
          _
        $region16: #{tpu_custom_call.1} parent=11 // pred_fallthru
          _
        // Predicated region
        $region17: #{tpu_custom_call.1} parent=11 // pred_check
          %p186 = pneg %p98
        $region18: #{tpu_custom_call.1} parent=11 // pred_check_branch
          %188 = sbr.rel (%p186) target = $region20
        $region19: #{tpu_custom_call.1} parent=11 // pred_region
          _
        $region20: #{tpu_custom_call.1} parent=11 // pred_fallthru
          _
        // Predicated region
        $region21: #{tpu_custom_call.1} parent=11 // pred_check
          %p189 = pneg %p119
        $region22: #{tpu_custom_call.1} parent=11 // pred_check_branch
          %191 = sbr.rel (%p189) target = $region24
        $region23: #{tpu_custom_call.1} parent=11 // pred_region
          _
        $region24: #{tpu_custom_call.1} parent=11 // pred_fallthru
          _
        // Predicated region
        $region25: #{tpu_custom_call.1} parent=11 // pred_check
          %p192 = pneg %p140
        $region26: #{tpu_custom_call.1} parent=11 // pred_check_branch
          %194 = sbr.rel (%p192) target = $region28
        $region27: #{tpu_custom_call.1} parent=11 // pred_region
          _
        $region28: #{tpu_custom_call.1} parent=11 // pred_fallthru
          _
      $region12: #{tpu_custom_call.1} parent=5 // pred_fallthru
        _
      %p195 = scmp.lt.s32.totalorder %s14, 4
      // Predicated region
      $region29: #{tpu_custom_call.1} parent=5 // pred_check
        %p196 = pneg %p195
      $region30: #{tpu_custom_call.1} parent=5 // pred_check_branch
        %198 = sbr.rel (%p196) target = $region32
      $region31: #{tpu_custom_call.1} parent=5 // pred_region
        // Predicated region
        $region33: #{tpu_custom_call.1} parent=31 // pred_check
          %p199 = pneg %p50
        $region34: #{tpu_custom_call.1} parent=31 // pred_check_branch
          %201 = sbr.rel (%p199) target = $region36
        $region35: #{tpu_custom_call.1} parent=31 // pred_region
          %s202 = smul.u32 %s21, 2
          %s203 = sadd.s32 %s202, %s22
          %p204 = scmp.lt.s32.totalorder %s203, 3
          %s205 = scalar_select %p204, %s203, 3
          %s206 = smul.addr %s205, 36
          %s207 = smul.addr %s206, 8
          %s208 = scalar_lea.vmem %s0, %s207
          %s209 = smul.u32 %s21, 2
          %s210 = sadd.s32 %s209, %s22
        $region36: #{tpu_custom_call.1} parent=31 // pred_fallthru
          _
      $region32: #{tpu_custom_call.1} parent=5 // pred_fallthru
        _
      %p211 = scmp.le.s32.totalorder 1, %s14
      %p212 = scmp.lt.s32.totalorder %s14, 5
      %p213 = pnand %p211, %p212
      %p214 = pneg %p213
      // Predicated region
      $region37: #{tpu_custom_call.1} parent=5 // pred_check
        _
      $region38: #{tpu_custom_call.1} parent=5 // pred_check_branch
        %216 = sbr.rel (%p213) target = $region40
      $region39: #{tpu_custom_call.1} parent=5 // pred_region
        %s217 = ssub.s32 %s14, 1
        %s218 = smul.u32 %s23, 2
        %s219 = sadd.s32 %s218, %s24
        %p220 = scmp.lt.s32.totalorder %s219, 3
        %s221 = scalar_select %p220, %s219, 3
        %s222 = smul.addr %s221, 36
        %s223 = smul.addr %s222, 8
        %s224 = scalar_lea.vmem %s0, %s223
        %p225 = pneg %p56
        %p226 = pneg %p53
        %p227 = pneg %p77
        %p228 = pneg %p74
        %p229 = pneg %p98
        %p230 = pneg %p95
        %p231 = pneg %p119
        %p232 = pneg %p116
        %p233 = pneg %p140
        %p234 = pneg %p137
        %p235 = pneg %p168
        %p236 = pneg %p165
        %s237 = sand.u32 %s155, 1
        %s238 = scalar_lea.sflag [#allocation4], %s237
        %s239 = sand.u32 %s155, 1
        %s240 = smul.addr %s239, 128
        %s241 = scalar_lea.vmem [#allocation3], %s240
        %s242 = smul.u32 %s23, 2
        %s243 = sadd.s32 %s242, %s24
        %p244 = scmp.lt.s32.totalorder %s243, 3
        %s245 = scalar_select %p244, %s243, 3
        %s246 = smul.addr %s245, 36
        %s247 = smul.addr %s246, 8
        %s248 = scalar_lea.vmem %s0, %s247
        %s249 = smul.u32 %s23, 2
        %s250 = sadd.s32 %s249, %s24
        %s251 = smul.u32 8, %s24
        %v253 = vld [vmem:[%s2] sm:$0x1]
        %v255 = vlaneseq
        %v256 = vshrl.u32 %v255, 7
        %v257 = vsub.s32 0, %v256
        %v258 = vrot.slane %v253, %v257
        %v260 = vld [vmem:[%s248] sm:$0xff]
        %v261 = vld [vmem:[%s248 + $0x8] sm:$0xff]
        %v262 = vld [vmem:[%s248 + $0x10] sm:$0x3]
        %v263 = vld [vmem:[%s248 + $0x18] sm:$0xff]
        %v264 = vld [vmem:[%s248 + $0x20] sm:$0xff]
        %v265 = vld [vmem:[%s248 + $0x28] sm:$0x3]
        %v266 = vld [vmem:[%s248 + $0x30] sm:$0xff]
        %v267 = vld [vmem:[%s248 + $0x38] sm:$0xff]
        %v268 = vld [vmem:[%s248 + $0x40] sm:$0x3]
        %v269 = vld [vmem:[%s248 + $0x48] sm:$0xff]
        %v270 = vld [vmem:[%s248 + $0x50] sm:$0xff]
        %v271 = vld [vmem:[%s248 + $0x58] sm:$0x3]
        %v272 = vld [vmem:[%s248 + $0x60] sm:$0xff]
        %v273 = vld [vmem:[%s248 + $0x68] sm:$0xff]
        %v274 = vld [vmem:[%s248 + $0x70] sm:$0x3]
        %v275 = vld [vmem:[%s248 + $0x78] sm:$0xff]
        %v276 = vld [vmem:[%s248 + $0x80] sm:$0xff]
        %v277 = vld [vmem:[%s248 + $0x88] sm:$0x3]
        %v278 = vld [vmem:[%s248 + $0x90] sm:$0xff]
        %v279 = vld [vmem:[%s248 + $0x98] sm:$0xff]
        %v280 = vld [vmem:[%s248 + $0xa0] sm:$0x3]
        %v281 = vld [vmem:[%s248 + $0xa8] sm:$0xff]
        %v282 = vld [vmem:[%s248 + $0xb0] sm:$0xff]
        %v283 = vld [vmem:[%s248 + $0xb8] sm:$0x3]
        %v284 = vld [vmem:[%s248 + $0xc0] sm:$0xff]
        %v285 = vld [vmem:[%s248 + $0xc8] sm:$0xff]
        %v286 = vld [vmem:[%s248 + $0xd0] sm:$0x3]
        %v287 = vld [vmem:[%s248 + $0xd8] sm:$0xff]
        %v288 = vld [vmem:[%s248 + $0xe0] sm:$0xff]
        %v289 = vld [vmem:[%s248 + $0xe8] sm:$0x3]
        %vm320 = vcmask 1046528
        %v321 = vrot.slane %v260, 1
        %v322 = vrot.slane %v261, 1
        %v323 = vsel %vm320, %v321, %v322
        %v324 = vrot.slane %v262, 1
        %v325 = vsel %vm320, %v322, %v324
        %v326 = vrot.slane %v263, 1
        %v327 = vrot.slane %v264, 1
        %v328 = vsel %vm320, %v326, %v327
        %v329 = vrot.slane %v265, 1
        %v330 = vsel %vm320, %v327, %v329
        %v331 = vrot.slane %v266, 1
        %v332 = vrot.slane %v267, 1
        %v333 = vsel %vm320, %v331, %v332
        %v334 = vrot.slane %v268, 1
        %v335 = vsel %vm320, %v332, %v334
        %v336 = vrot.slane %v269, 1
        %v337 = vrot.slane %v270, 1
        %v338 = vsel %vm320, %v336, %v337
        %v339 = vrot.slane %v271, 1
        %v340 = vsel %vm320, %v337, %v339
        %v341 = vrot.slane %v272, 1
        %v342 = vrot.slane %v273, 1
        %v343 = vsel %vm320, %v341, %v342
        %v344 = vrot.slane %v274, 1
        %v345 = vsel %vm320, %v342, %v344
        %v346 = vrot.slane %v275, 1
        %v347 = vrot.slane %v276, 1
        %v348 = vsel %vm320, %v346, %v347
        %v349 = vrot.slane %v277, 1
        %v350 = vsel %vm320, %v347, %v349
        %v351 = vrot.slane %v278, 1
        %v352 = vrot.slane %v279, 1
        %v353 = vsel %vm320, %v351, %v352
        %v354 = vrot.slane %v280, 1
        %v355 = vsel %vm320, %v352, %v354
        %v356 = vrot.slane %v281, 1
        %v357 = vrot.slane %v282, 1
        %v358 = vsel %vm320, %v356, %v357
        %v359 = vrot.slane %v283, 1
        %v360 = vsel %vm320, %v357, %v359
        %v361 = vrot.slane %v284, 1
        %v362 = vrot.slane %v285, 1
        %v363 = vsel %vm320, %v361, %v362
        %v364 = vrot.slane %v286, 1
        %v365 = vsel %vm320, %v362, %v364
        %v366 = vrot.slane %v287, 1
        %v367 = vrot.slane %v288, 1
        %v368 = vsel %vm320, %v366, %v367
        %v369 = vrot.slane %v289, 1
        %v370 = vsel %vm320, %v367, %v369
        %vm391 = vcmask 1045504
        %v392 = vrot.slane %v260, 2
        %v393 = vrot.slane %v261, 2
        %v394 = vsel %vm391, %v392, %v393
        %v395 = vrot.slane %v262, 2
        %v396 = vsel %vm391, %v393, %v395
        %v397 = vrot.slane %v263, 2
        %v398 = vrot.slane %v264, 2
        %v399 = vsel %vm391, %v397, %v398
        %v400 = vrot.slane %v265, 2
        %v401 = vsel %vm391, %v398, %v400
        %v402 = vrot.slane %v266, 2
        %v403 = vrot.slane %v267, 2
        %v404 = vsel %vm391, %v402, %v403
        %v405 = vrot.slane %v268, 2
        %v406 = vsel %vm391, %v403, %v405
        %v407 = vrot.slane %v269, 2
        %v408 = vrot.slane %v270, 2
        %v409 = vsel %vm391, %v407, %v408
        %v410 = vrot.slane %v271, 2
        %v411 = vsel %vm391, %v408, %v410
        %v412 = vrot.slane %v272, 2
        %v413 = vrot.slane %v273, 2
        %v414 = vsel %vm391, %v412, %v413
        %v415 = vrot.slane %v274, 2
        %v416 = vsel %vm391, %v413, %v415
        %v417 = vrot.slane %v275, 2
        %v418 = vrot.slane %v276, 2
        %v419 = vsel %vm391, %v417, %v418
        %v420 = vrot.slane %v277, 2
        %v421 = vsel %vm391, %v418, %v420
        %v422 = vrot.slane %v278, 2
        %v423 = vrot.slane %v279, 2
        %v424 = vsel %vm391, %v422, %v423
        %v425 = vrot.slane %v280, 2
        %v426 = vsel %vm391, %v423, %v425
        %v427 = vrot.slane %v281, 2
        %v428 = vrot.slane %v282, 2
        %v429 = vsel %vm391, %v427, %v428
        %v430 = vrot.slane %v283, 2
        %v431 = vsel %vm391, %v428, %v430
        %v432 = vrot.slane %v284, 2
        %v433 = vrot.slane %v285, 2
        %v434 = vsel %vm391, %v432, %v433
        %v435 = vrot.slane %v286, 2
        %v436 = vsel %vm391, %v433, %v435
        %v437 = vrot.slane %v287, 2
        %v438 = vrot.slane %v288, 2
        %v439 = vsel %vm391, %v437, %v438
        %v440 = vrot.slane %v289, 2
        %v441 = vsel %vm391, %v438, %v440
        %v462 = vpack.c.bf16 %v261, %v260
        %v463 = vpack.c.bf16 %v325, %v323
        %v464 = vpack.c.bf16 %v396, %v394
        %v465 = vpack.c.bf16 %v264, %v263
        %v466 = vpack.c.bf16 %v330, %v328
        %v467 = vpack.c.bf16 %v401, %v399
        %v468 = vpack.c.bf16 %v267, %v266
        %v469 = vpack.c.bf16 %v335, %v333
        %v470 = vpack.c.bf16 %v406, %v404
        %v471 = vpack.c.bf16 %v270, %v269
        %v472 = vpack.c.bf16 %v340, %v338
        %v473 = vpack.c.bf16 %v411, %v409
        %v474 = vpack.c.bf16 %v273, %v272
        %v475 = vpack.c.bf16 %v345, %v343
        %v476 = vpack.c.bf16 %v416, %v414
        %v477 = vpack.c.bf16 %v276, %v275
        %v478 = vpack.c.bf16 %v350, %v348
        %v479 = vpack.c.bf16 %v421, %v419
        %v480 = vpack.c.bf16 %v279, %v278
        %v481 = vpack.c.bf16 %v355, %v353
        %v482 = vpack.c.bf16 %v426, %v424
        %v483 = vpack.c.bf16 %v282, %v281
        %v484 = vpack.c.bf16 %v360, %v358
        %v485 = vpack.c.bf16 %v431, %v429
        %v486 = vpack.c.bf16 %v285, %v284
        %v487 = vpack.c.bf16 %v365, %v363
        %v488 = vpack.c.bf16 %v436, %v434
        %v489 = vpack.c.bf16 %v288, %v287
        %v490 = vpack.c.bf16 %v370, %v368
        %v491 = vpack.c.bf16 %v441, %v439
        %v492 = vld [vmem:[%s1] sm:$0xf]
        %v493 = vld [vmem:[%s1 + $0x4] sm:$0xf]
        %v494 = vld [vmem:[%s1 + $0x8] sm:$0xf]
        %v495 = vld [vmem:[%s1 + $0xc] sm:$0xf]
        %v496 = vld [vmem:[%s1 + $0x10] sm:$0xf]
        %v497 = vld [vmem:[%s1 + $0x14] sm:$0xf]
        %v498 = vld [vmem:[%s1 + $0x18] sm:$0xf]
        %v499 = vld [vmem:[%s1 + $0x1c] sm:$0xf]
        %v500 = vld [vmem:[%s1 + $0x20] sm:$0xf]
        %v501 = vld [vmem:[%s1 + $0x24] sm:$0xf]
        %v502 = vld [vmem:[%s1 + $0x28] sm:$0xf]
        %v503 = vld [vmem:[%s1 + $0x2c] sm:$0xf]
        %v504 = vld [vmem:[%s1 + $0x30] sm:$0xf]
        %v505 = vld [vmem:[%s1 + $0x34] sm:$0xf]
        %v506 = vld [vmem:[%s1 + $0x38] sm:$0xf]
        %v507 = vld [vmem:[%s1 + $0x3c] sm:$0xf]
        %v508 = vld [vmem:[%s1 + $0x40] sm:$0xf]
        %v509 = vld [vmem:[%s1 + $0x44] sm:$0xf]
        %v510 = vld [vmem:[%s1 + $0x48] sm:$0xf]
        %v511 = vld [vmem:[%s1 + $0x4c] sm:$0xf]
        %v512 = vld [vmem:[%s1 + $0x50] sm:$0xf]
        %v513 = vld [vmem:[%s1 + $0x54] sm:$0xf]
        %v514 = vld [vmem:[%s1 + $0x58] sm:$0xf]
        %v515 = vld [vmem:[%s1 + $0x5c] sm:$0xf]
        %v516 = vld [vmem:[%s1 + $0x60] sm:$0xf]
        %v517 = vld [vmem:[%s1 + $0x64] sm:$0xf]
        %v518 = vld [vmem:[%s1 + $0x68] sm:$0xf]
        %v519 = vld [vmem:[%s1 + $0x6c] sm:$0xf]
        %v520 = vld [vmem:[%s1 + $0x70] sm:$0xf]
        %v521 = vld [vmem:[%s1 + $0x74] sm:$0xf]
        %v522 = vld [vmem:[%s1 + $0x78] sm:$0xf]
        %v523 = vld [vmem:[%s1 + $0x7c] sm:$0xf]
        %v524 = vld [vmem:[%s1 + $0x80] sm:$0xf]
        %v525 = vld [vmem:[%s1 + $0x84] sm:$0xf]
        %v526 = vld [vmem:[%s1 + $0x88] sm:$0xf]
        %v527 = vld [vmem:[%s1 + $0x8c] sm:$0xf]
        %v528 = vld [vmem:[%s1 + $0x90] sm:$0xf]
        %v529 = vld [vmem:[%s1 + $0x94] sm:$0xf]
        %v530 = vld [vmem:[%s1 + $0x98] sm:$0xf]
        %v531 = vld [vmem:[%s1 + $0x9c] sm:$0xf]
        %v532 = vld [vmem:[%s1 + $0xa0] sm:$0xf]
        %v533 = vld [vmem:[%s1 + $0xa4] sm:$0xf]
        %v534 = vld [vmem:[%s1 + $0xa8] sm:$0xf]
        %v535 = vld [vmem:[%s1 + $0xac] sm:$0xf]
        %v536 = vld [vmem:[%s1 + $0xb0] sm:$0xf]
        %v537 = vld [vmem:[%s1 + $0xb4] sm:$0xf]
        %v538 = vld [vmem:[%s1 + $0xb8] sm:$0xf]
        %v539 = vld [vmem:[%s1 + $0xbc] sm:$0xf]
        %v588 = vunpack.c.l.b16 %v492
        %v589 = vunpack.c.l.b16 %v493
        %v590 = vunpack.c.l.b16 %v494
        %v591 = vunpack.c.l.b16 %v495
        %v592 = vunpack.c.l.b16 %v496
        %v593 = vunpack.c.l.b16 %v497
        %v594 = vunpack.c.l.b16 %v498
        %v595 = vunpack.c.l.b16 %v499
        %v596 = vunpack.c.l.b16 %v500
        %v597 = vunpack.c.l.b16 %v501
        %v598 = vunpack.c.l.b16 %v502
        %v599 = vunpack.c.l.b16 %v503
        %v600 = vunpack.c.l.b16 %v504
        %v601 = vunpack.c.l.b16 %v505
        %v602 = vunpack.c.l.b16 %v506
        %v603 = vunpack.c.l.b16 %v507
        %v604 = vunpack.c.l.b16 %v508
        %v605 = vunpack.c.l.b16 %v509
        %v606 = vunpack.c.l.b16 %v510
        %v607 = vunpack.c.l.b16 %v511
        %v608 = vunpack.c.l.b16 %v512
        %v609 = vunpack.c.l.b16 %v513
        %v610 = vunpack.c.l.b16 %v514
        %v611 = vunpack.c.l.b16 %v515
        %v612 = vunpack.c.l.b16 %v516
        %v613 = vunpack.c.l.b16 %v517
        %v614 = vunpack.c.l.b16 %v518
        %v615 = vunpack.c.l.b16 %v519
        %v616 = vunpack.c.l.b16 %v520
        %v617 = vunpack.c.l.b16 %v521
        %v618 = vunpack.c.l.b16 %v522
        %v619 = vunpack.c.l.b16 %v523
        %v620 = vunpack.c.l.b16 %v524
        %v621 = vunpack.c.l.b16 %v525
        %v622 = vunpack.c.l.b16 %v526
        %v623 = vunpack.c.l.b16 %v527
        %v624 = vunpack.c.l.b16 %v528
        %v625 = vunpack.c.l.b16 %v529
        %v626 = vunpack.c.l.b16 %v530
        %v627 = vunpack.c.l.b16 %v531
        %v628 = vunpack.c.l.b16 %v532
        %v629 = vunpack.c.l.b16 %v533
        %v630 = vunpack.c.l.b16 %v534
        %v631 = vunpack.c.l.b16 %v535
        %v632 = vunpack.c.l.b16 %v536
        %v633 = vunpack.c.l.b16 %v537
        %v634 = vunpack.c.l.b16 %v538
        %v635 = vunpack.c.l.b16 %v539
        %v636 = vpack.c.b16 %v589, %v588
        %v637 = vpack.c.b16 %v591, %v590
        %v638 = vpack.c.b16 %v593, %v592
        %v639 = vpack.c.b16 %v595, %v594
        %v640 = vpack.c.b16 %v597, %v596
        %v641 = vpack.c.b16 %v599, %v598
        %v642 = vpack.c.b16 %v601, %v600
        %v643 = vpack.c.b16 %v603, %v602
        %v644 = vpack.c.b16 %v605, %v604
        %v645 = vpack.c.b16 %v607, %v606
        %v646 = vpack.c.b16 %v609, %v608
        %v647 = vpack.c.b16 %v611, %v610
        %v648 = vpack.c.b16 %v613, %v612
        %v649 = vpack.c.b16 %v615, %v614
        %v650 = vpack.c.b16 %v617, %v616
        %v651 = vpack.c.b16 %v619, %v618
        %v652 = vpack.c.b16 %v621, %v620
        %v653 = vpack.c.b16 %v623, %v622
        %v654 = vpack.c.b16 %v625, %v624
        %v655 = vpack.c.b16 %v627, %v626
        %v656 = vpack.c.b16 %v629, %v628
        %v657 = vpack.c.b16 %v631, %v630
        %v658 = vpack.c.b16 %v633, %v632
        %v659 = vpack.c.b16 %v635, %v634
        %684 = vmatprep.subr.bf16.mxu0 0
        %685 = vmatpush1.bf16.msra.mxu0 %v643
        %686 = vmatprep.subr.bf16.mxu0 0
        %687 = vmatpush1.bf16.msra.mxu0 %v642
        %688 = vmatprep.subr.bf16.mxu0 0
        %689 = vmatpush1.bf16.msra.mxu0 %v641
        %690 = vmatprep.subr.bf16.mxu0 0
        %691 = vmatpush1.bf16.msra.mxu0 %v640
        %692 = vmatprep.subr.bf16.mxu0 0
        %693 = vmatpush1.bf16.msra.mxu0 %v639
        %694 = vmatprep.subr.bf16.mxu0 0
        %695 = vmatpush1.bf16.msra.mxu0 %v638
        %696 = vmatprep.subr.bf16.mxu0 0
        %697 = vmatpush1.bf16.msra.mxu0 %v637
        %698 = vmatprep.subr.bf16.mxu0 0
        %699 = vmatpush1.bf16.msra.mxu0 %v636
        %700 = vmatprep.subr.bf16.mxu0 0
        %701 = vmatpush2.bf16.msra.mxu0 %v651
        %702 = vmatprep.subr.bf16.mxu0 0
        %703 = vmatpush2.bf16.msra.mxu0 %v650
        %704 = vmatprep.subr.bf16.mxu0 0
        %705 = vmatpush2.bf16.msra.mxu0 %v649
        %706 = vmatprep.subr.bf16.mxu0 0
        %707 = vmatpush2.bf16.msra.mxu0 %v648
        %708 = vmatprep.subr.bf16.mxu0 0
        %709 = vmatpush2.bf16.msra.mxu0 %v647
        %710 = vmatprep.subr.bf16.mxu0 0
        %711 = vmatpush2.bf16.msra.mxu0 %v646
        %712 = vmatprep.subr.bf16.mxu0 0
        %713 = vmatpush2.bf16.msra.mxu0 %v645
        %714 = vmatprep.subr.bf16.mxu0 0
        %715 = vmatpush2.bf16.msra.mxu0 %v644
        %716 = vmatprep.mubr.bf16.mxu0 %v463
        %717 = vmatmul.mubr.bf16.gmra.mxu0 %v462
        %v718 = vpop.f32.mrf.mxu0
        %v719 = vadd.f32 0.0, %v718
        %v720 = vpop.f32.mrf.mxu0
        %v721 = vpop.f32.mrf.mxu0
        %v722 = vadd.f32 0.0, %v721
        %v723 = vpop.f32.mrf.mxu0
        %724 = vmatprep.mubr.bf16.mxu0 %v466
        %725 = vmatmul.mubr.bf16.gmra.mxu0 %v465
        %v726 = vpop.f32.mrf.mxu0
        %v727 = vadd.f32 0.0, %v726
        %v728 = vpop.f32.mrf.mxu0
        %v729 = vpop.f32.mrf.mxu0
        %v730 = vadd.f32 0.0, %v729
        %v731 = vpop.f32.mrf.mxu0
        %732 = vmatprep.mubr.bf16.mxu0 %v469
        %733 = vmatmul.mubr.bf16.gmra.mxu0 %v468
        %v734 = vpop.f32.mrf.mxu0
        %v735 = vadd.f32 0.0, %v734
        %v736 = vpop.f32.mrf.mxu0
        %v737 = vpop.f32.mrf.mxu0
        %v738 = vadd.f32 0.0, %v737
        %v739 = vpop.f32.mrf.mxu0
        %740 = vmatprep.mubr.bf16.mxu0 %v472
        %741 = vmatmul.mubr.bf16.gmra.mxu0 %v471
        %v742 = vpop.f32.mrf.mxu0
        %v743 = vadd.f32 0.0, %v742
        %v744 = vpop.f32.mrf.mxu0
        %v745 = vpop.f32.mrf.mxu0
        %v746 = vadd.f32 0.0, %v745
        %v747 = vpop.f32.mrf.mxu0
        %748 = vmatprep.mubr.bf16.mxu0 %v475
        %749 = vmatmul.mubr.bf16.gmra.mxu0 %v474
        %v750 = vpop.f32.mrf.mxu0
        %v751 = vadd.f32 0.0, %v750
        %v752 = vpop.f32.mrf.mxu0
        %v753 = vpop.f32.mrf.mxu0
        %v754 = vadd.f32 0.0, %v753
        %v755 = vpop.f32.mrf.mxu0
        %756 = vmatprep.mubr.bf16.mxu0 %v478
        %757 = vmatmul.mubr.bf16.gmra.mxu0 %v477
        %v758 = vpop.f32.mrf.mxu0
        %v759 = vadd.f32 0.0, %v758
        %v760 = vpop.f32.mrf.mxu0
        %v761 = vpop.f32.mrf.mxu0
        %v762 = vadd.f32 0.0, %v761
        %v763 = vpop.f32.mrf.mxu0
        %764 = vmatprep.mubr.bf16.mxu0 %v481
        %765 = vmatmul.mubr.bf16.gmra.mxu0 %v480
        %v766 = vpop.f32.mrf.mxu0
        %v767 = vadd.f32 0.0, %v766
        %v768 = vpop.f32.mrf.mxu0
        %v769 = vpop.f32.mrf.mxu0
        %v770 = vadd.f32 0.0, %v769
        %v771 = vpop.f32.mrf.mxu0
        %772 = vmatprep.mubr.bf16.mxu0 %v484
        %773 = vmatmul.mubr.bf16.gmra.mxu0 %v483
        %v774 = vpop.f32.mrf.mxu0
        %v775 = vadd.f32 0.0, %v774
        %v776 = vpop.f32.mrf.mxu0
        %v777 = vpop.f32.mrf.mxu0
        %v778 = vadd.f32 0.0, %v777
        %v779 = vpop.f32.mrf.mxu0
        %780 = vmatprep.mubr.bf16.mxu0 %v487
        %781 = vmatmul.mubr.bf16.gmra.mxu0 %v486
        %v782 = vpop.f32.mrf.mxu0
        %v783 = vadd.f32 0.0, %v782
        %v784 = vpop.f32.mrf.mxu0
        %v785 = vpop.f32.mrf.mxu0
        %v786 = vadd.f32 0.0, %v785
        %v787 = vpop.f32.mrf.mxu0
        %788 = vmatprep.mubr.bf16.mxu0 %v490
        %789 = vmatmul.mubr.bf16.gmra.mxu0 %v489
        %v790 = vpop.f32.mrf.mxu0
        %v791 = vadd.f32 0.0, %v790
        %v792 = vpop.f32.mrf.mxu0
        %v793 = vpop.f32.mrf.mxu0
        %v794 = vadd.f32 0.0, %v793
        %v795 = vpop.f32.mrf.mxu0
        %796 = vdwg.mxu0
        %797 = vmatprep.subr.bf16.mxu0 0
        %798 = vmatpush1.bf16.msra.mxu0 %v659
        %799 = vmatprep.subr.bf16.mxu0 0
        %800 = vmatpush1.bf16.msra.mxu0 %v658
        %801 = vmatprep.subr.bf16.mxu0 0
        %802 = vmatpush1.bf16.msra.mxu0 %v657
        %803 = vmatprep.subr.bf16.mxu0 0
        %804 = vmatpush1.bf16.msra.mxu0 %v656
        %805 = vmatprep.subr.bf16.mxu0 0
        %806 = vmatpush1.bf16.msra.mxu0 %v655
        %807 = vmatprep.subr.bf16.mxu0 0
        %808 = vmatpush1.bf16.msra.mxu0 %v654
        %809 = vmatprep.subr.bf16.mxu0 0
        %810 = vmatpush1.bf16.msra.mxu0 %v653
        %811 = vmatprep.subr.bf16.mxu0 0
        %812 = vmatpush1.bf16.msra.mxu0 %v652
        %813 = vmatprep.subr.bf16.mxu0 0
        %814 = vmatpush2.bf16.msra.mxu0 0
        %815 = vmatprep.subr.bf16.mxu0 0
        %816 = vmatpush2.bf16.msra.mxu0 0
        %817 = vmatprep.subr.bf16.mxu0 0
        %818 = vmatpush2.bf16.msra.mxu0 0
        %819 = vmatprep.subr.bf16.mxu0 0
        %820 = vmatpush2.bf16.msra.mxu0 0
        %821 = vmatprep.subr.bf16.mxu0 0
        %822 = vmatpush2.bf16.msra.mxu0 0
        %823 = vmatprep.subr.bf16.mxu0 0
        %824 = vmatpush2.bf16.msra.mxu0 0
        %825 = vmatprep.subr.bf16.mxu0 0
        %826 = vmatpush2.bf16.msra.mxu0 0
        %827 = vmatprep.subr.bf16.mxu0 0
        %828 = vmatpush2.bf16.msra.mxu0 0
        %829 = vmatprep.mubr.bf16.mxu0 0
        %830 = vmatmul.mubr.bf16.gmra.mxu0 %v464
        %v831 = vpop.f32.mrf.mxu0
        %v832 = vadd.f32 %v719, %v831
        %v833 = vpop.f32.mrf.mxu0
        %v834 = vpop.f32.mrf.mxu0
        %v835 = vadd.f32 %v722, %v834
        %v836 = vpop.f32.mrf.mxu0
        %837 = vmatprep.mubr.bf16.mxu0 0
        %838 = vmatmul.mubr.bf16.gmra.mxu0 %v467
        %v839 = vpop.f32.mrf.mxu0
        %v840 = vadd.f32 %v727, %v839
        %v841 = vpop.f32.mrf.mxu0
        %v842 = vpop.f32.mrf.mxu0
        %v843 = vadd.f32 %v730, %v842
        %v844 = vpop.f32.mrf.mxu0
        %845 = vmatprep.mubr.bf16.mxu0 0
        %846 = vmatmul.mubr.bf16.gmra.mxu0 %v470
        %v847 = vpop.f32.mrf.mxu0
        %v848 = vadd.f32 %v735, %v847
        %v849 = vpop.f32.mrf.mxu0
        %v850 = vpop.f32.mrf.mxu0
        %v851 = vadd.f32 %v738, %v850
        %v852 = vpop.f32.mrf.mxu0
        %853 = vmatprep.mubr.bf16.mxu0 0
        %854 = vmatmul.mubr.bf16.gmra.mxu0 %v473
        %v855 = vpop.f32.mrf.mxu0
        %v856 = vadd.f32 %v743, %v855
        %v857 = vpop.f32.mrf.mxu0
        %v858 = vpop.f32.mrf.mxu0
        %v859 = vadd.f32 %v746, %v858
        %v860 = vpop.f32.mrf.mxu0
        %861 = vmatprep.mubr.bf16.mxu0 0
        %862 = vmatmul.mubr.bf16.gmra.mxu0 %v476
        %v863 = vpop.f32.mrf.mxu0
        %v864 = vadd.f32 %v751, %v863
        %v865 = vpop.f32.mrf.mxu0
        %v866 = vpop.f32.mrf.mxu0
        %v867 = vadd.f32 %v754, %v866
        %v868 = vpop.f32.mrf.mxu0
        %869 = vmatprep.mubr.bf16.mxu0 0
        %870 = vmatmul.mubr.bf16.gmra.mxu0 %v479
        %v871 = vpop.f32.mrf.mxu0
        %v872 = vadd.f32 %v759, %v871
        %v873 = vpop.f32.mrf.mxu0
        %v874 = vpop.f32.mrf.mxu0
        %v875 = vadd.f32 %v762, %v874
        %v876 = vpop.f32.mrf.mxu0
        %877 = vmatprep.mubr.bf16.mxu0 0
        %878 = vmatmul.mubr.bf16.gmra.mxu0 %v482
        %v879 = vpop.f32.mrf.mxu0
        %v880 = vadd.f32 %v767, %v879
        %v881 = vpop.f32.mrf.mxu0
        %v882 = vpop.f32.mrf.mxu0
        %v883 = vadd.f32 %v770, %v882
        %v884 = vpop.f32.mrf.mxu0
        %885 = vmatprep.mubr.bf16.mxu0 0
        %886 = vmatmul.mubr.bf16.gmra.mxu0 %v485
        %v887 = vpop.f32.mrf.mxu0
        %v888 = vadd.f32 %v775, %v887
        %v889 = vpop.f32.mrf.mxu0
        %v890 = vpop.f32.mrf.mxu0
        %v891 = vadd.f32 %v778, %v890
        %v892 = vpop.f32.mrf.mxu0
        %893 = vmatprep.mubr.bf16.mxu0 0
        %894 = vmatmul.mubr.bf16.gmra.mxu0 %v488
        %v895 = vpop.f32.mrf.mxu0
        %v896 = vadd.f32 %v783, %v895
        %v897 = vpop.f32.mrf.mxu0
        %v898 = vpop.f32.mrf.mxu0
        %v899 = vadd.f32 %v786, %v898
        %v900 = vpop.f32.mrf.mxu0
        %901 = vmatprep.mubr.bf16.mxu0 0
        %902 = vmatmul.mubr.bf16.gmra.mxu0 %v491
        %v903 = vpop.f32.mrf.mxu0
        %v904 = vadd.f32 %v791, %v903
        %v905 = vpop.f32.mrf.mxu0
        %v906 = vpop.f32.mrf.mxu0
        %v907 = vadd.f32 %v794, %v906
        %v908 = vpop.f32.mrf.mxu0
        %909 = vdwg.mxu0
        %v910 = vadd.f32 %v258, %v832
        %v911 = vadd.f32 %v258, %v835
        %v912 = vadd.f32 %v258, %v840
        %v913 = vadd.f32 %v258, %v843
        %v914 = vadd.f32 %v258, %v848
        %v915 = vadd.f32 %v258, %v851
        %v916 = vadd.f32 %v258, %v856
        %v917 = vadd.f32 %v258, %v859
        %v918 = vadd.f32 %v258, %v864
        %v919 = vadd.f32 %v258, %v867
        %v920 = vadd.f32 %v258, %v872
        %v921 = vadd.f32 %v258, %v875
        %v922 = vadd.f32 %v258, %v880
        %v923 = vadd.f32 %v258, %v883
        %v924 = vadd.f32 %v258, %v888
        %v925 = vadd.f32 %v258, %v891
        %v926 = vadd.f32 %v258, %v896
        %v927 = vadd.f32 %v258, %v899
        %v928 = vadd.f32 %v258, %v904
        %v929 = vadd.f32 %v258, %v907
        %s930 = scalar_lea.vmem %s248, 24
        %v931 = vld [vmem:[%s930] sm:$0xff]
        %v932 = vld [vmem:[%s930 + $0x8] sm:$0xff]
        %v933 = vld [vmem:[%s930 + $0x10] sm:$0x3]
        %v934 = vld [vmem:[%s930 + $0x18] sm:$0xff]
        %v935 = vld [vmem:[%s930 + $0x20] sm:$0xff]
        %v936 = vld [vmem:[%s930 + $0x28] sm:$0x3]
        %v937 = vld [vmem:[%s930 + $0x30] sm:$0xff]
        %v938 = vld [vmem:[%s930 + $0x38] sm:$0xff]
        %v939 = vld [vmem:[%s930 + $0x40] sm:$0x3]
        %v940 = vld [vmem:[%s930 + $0x48] sm:$0xff]
        %v941 = vld [vmem:[%s930 + $0x50] sm:$0xff]
        %v942 = vld [vmem:[%s930 + $0x58] sm:$0x3]
        %v943 = vld [vmem:[%s930 + $0x60] sm:$0xff]
        %v944 = vld [vmem:[%s930 + $0x68] sm:$0xff]
        %v945 = vld [vmem:[%s930 + $0x70] sm:$0x3]
        %v946 = vld [vmem:[%s930 + $0x78] sm:$0xff]
        %v947 = vld [vmem:[%s930 + $0x80] sm:$0xff]
        %v948 = vld [vmem:[%s930 + $0x88] sm:$0x3]
        %v949 = vld [vmem:[%s930 + $0x90] sm:$0xff]
        %v950 = vld [vmem:[%s930 + $0x98] sm:$0xff]
        %v951 = vld [vmem:[%s930 + $0xa0] sm:$0x3]
        %v952 = vld [vmem:[%s930 + $0xa8] sm:$0xff]
        %v953 = vld [vmem:[%s930 + $0xb0] sm:$0xff]
        %v954 = vld [vmem:[%s930 + $0xb8] sm:$0x3]
        %v955 = vld [vmem:[%s930 + $0xc0] sm:$0xff]
        %v956 = vld [vmem:[%s930 + $0xc8] sm:$0xff]
        %v957 = vld [vmem:[%s930 + $0xd0] sm:$0x3]
        %v958 = vld [vmem:[%s930 + $0xd8] sm:$0xff]
        %v959 = vld [vmem:[%s930 + $0xe0] sm:$0xff]
        %v960 = vld [vmem:[%s930 + $0xe8] sm:$0x3]
        %v991 = vrot.slane %v931, 1
        %v992 = vrot.slane %v932, 1
        %v993 = vsel %vm320, %v991, %v992
        %v994 = vrot.slane %v933, 1
        %v995 = vsel %vm320, %v992, %v994
        %v996 = vrot.slane %v934, 1
        %v997 = vrot.slane %v935, 1
        %v998 = vsel %vm320, %v996, %v997
        %v999 = vrot.slane %v936, 1
        %v1000 = vsel %vm320, %v997, %v999
        %v1001 = vrot.slane %v937, 1
        %v1002 = vrot.slane %v938, 1
        %v1003 = vsel %vm320, %v1001, %v1002
        %v1004 = vrot.slane %v939, 1
        %v1005 = vsel %vm320, %v1002, %v1004
        %v1006 = vrot.slane %v940, 1
        %v1007 = vrot.slane %v941, 1
        %v1008 = vsel %vm320, %v1006, %v1007
        %v1009 = vrot.slane %v942, 1
        %v1010 = vsel %vm320, %v1007, %v1009
        %v1011 = vrot.slane %v943, 1
        %v1012 = vrot.slane %v944, 1
        %v1013 = vsel %vm320, %v1011, %v1012
        %v1014 = vrot.slane %v945, 1
        %v1015 = vsel %vm320, %v1012, %v1014
        %v1016 = vrot.slane %v946, 1
        %v1017 = vrot.slane %v947, 1
        %v1018 = vsel %vm320, %v1016, %v1017
        %v1019 = vrot.slane %v948, 1
        %v1020 = vsel %vm320, %v1017, %v1019
        %v1021 = vrot.slane %v949, 1
        %v1022 = vrot.slane %v950, 1
        %v1023 = vsel %vm320, %v1021, %v1022
        %v1024 = vrot.slane %v951, 1
        %v1025 = vsel %vm320, %v1022, %v1024
        %v1026 = vrot.slane %v952, 1
        %v1027 = vrot.slane %v953, 1
        %v1028 = vsel %vm320, %v1026, %v1027
        %v1029 = vrot.slane %v954, 1
        %v1030 = vsel %vm320, %v1027, %v1029
        %v1031 = vrot.slane %v955, 1
        %v1032 = vrot.slane %v956, 1
        %v1033 = vsel %vm320, %v1031, %v1032
        %v1034 = vrot.slane %v957, 1
        %v1035 = vsel %vm320, %v1032, %v1034
        %v1036 = vrot.slane %v958, 1
        %v1037 = vrot.slane %v959, 1
        %v1038 = vsel %vm320, %v1036, %v1037
        %v1039 = vrot.slane %v960, 1
        %v1040 = vsel %vm320, %v1037, %v1039
        %v1061 = vrot.slane %v931, 2
        %v1062 = vrot.slane %v932, 2
        %v1063 = vsel %vm391, %v1061, %v1062
        %v1064 = vrot.slane %v933, 2
        %v1065 = vsel %vm391, %v1062, %v1064
        %v1066 = vrot.slane %v934, 2
        %v1067 = vrot.slane %v935, 2
        %v1068 = vsel %vm391, %v1066, %v1067
        %v1069 = vrot.slane %v936, 2
        %v1070 = vsel %vm391, %v1067, %v1069
        %v1071 = vrot.slane %v937, 2
        %v1072 = vrot.slane %v938, 2
        %v1073 = vsel %vm391, %v1071, %v1072
        %v1074 = vrot.slane %v939, 2
        %v1075 = vsel %vm391, %v1072, %v1074
        %v1076 = vrot.slane %v940, 2
        %v1077 = vrot.slane %v941, 2
        %v1078 = vsel %vm391, %v1076, %v1077
        %v1079 = vrot.slane %v942, 2
        %v1080 = vsel %vm391, %v1077, %v1079
        %v1081 = vrot.slane %v943, 2
        %v1082 = vrot.slane %v944, 2
        %v1083 = vsel %vm391, %v1081, %v1082
        %v1084 = vrot.slane %v945, 2
        %v1085 = vsel %vm391, %v1082, %v1084
        %v1086 = vrot.slane %v946, 2
        %v1087 = vrot.slane %v947, 2
        %v1088 = vsel %vm391, %v1086, %v1087
        %v1089 = vrot.slane %v948, 2
        %v1090 = vsel %vm391, %v1087, %v1089
        %v1091 = vrot.slane %v949, 2
        %v1092 = vrot.slane %v950, 2
        %v1093 = vsel %vm391, %v1091, %v1092
        %v1094 = vrot.slane %v951, 2
        %v1095 = vsel %vm391, %v1092, %v1094
        %v1096 = vrot.slane %v952, 2
        %v1097 = vrot.slane %v953, 2
        %v1098 = vsel %vm391, %v1096, %v1097
        %v1099 = vrot.slane %v954, 2
        %v1100 = vsel %vm391, %v1097, %v1099
        %v1101 = vrot.slane %v955, 2
        %v1102 = vrot.slane %v956, 2
        %v1103 = vsel %vm391, %v1101, %v1102
        %v1104 = vrot.slane %v957, 2
        %v1105 = vsel %vm391, %v1102, %v1104
        %v1106 = vrot.slane %v958, 2
        %v1107 = vrot.slane %v959, 2
        %v1108 = vsel %vm391, %v1106, %v1107
        %v1109 = vrot.slane %v960, 2
        %v1110 = vsel %vm391, %v1107, %v1109
        %v1131 = vpack.c.bf16 %v932, %v931
        %v1132 = vpack.c.bf16 %v995, %v993
        %v1133 = vpack.c.bf16 %v1065, %v1063
        %v1134 = vpack.c.bf16 %v935, %v934
        %v1135 = vpack.c.bf16 %v1000, %v998
        %v1136 = vpack.c.bf16 %v1070, %v1068
        %v1137 = vpack.c.bf16 %v938, %v937
        %v1138 = vpack.c.bf16 %v1005, %v1003
        %v1139 = vpack.c.bf16 %v1075, %v1073
        %v1140 = vpack.c.bf16 %v941, %v940
        %v1141 = vpack.c.bf16 %v1010, %v1008
        %v1142 = vpack.c.bf16 %v1080, %v1078
        %v1143 = vpack.c.bf16 %v944, %v943
        %v1144 = vpack.c.bf16 %v1015, %v1013
        %v1145 = vpack.c.bf16 %v1085, %v1083
        %v1146 = vpack.c.bf16 %v947, %v946
        %v1147 = vpack.c.bf16 %v1020, %v1018
        %v1148 = vpack.c.bf16 %v1090, %v1088
        %v1149 = vpack.c.bf16 %v950, %v949
        %v1150 = vpack.c.bf16 %v1025, %v1023
        %v1151 = vpack.c.bf16 %v1095, %v1093
        %v1152 = vpack.c.bf16 %v953, %v952
        %v1153 = vpack.c.bf16 %v1030, %v1028
        %v1154 = vpack.c.bf16 %v1100, %v1098
        %v1155 = vpack.c.bf16 %v956, %v955
        %v1156 = vpack.c.bf16 %v1035, %v1033
        %v1157 = vpack.c.bf16 %v1105, %v1103
        %v1158 = vpack.c.bf16 %v959, %v958
        %v1159 = vpack.c.bf16 %v1040, %v1038
        %v1160 = vpack.c.bf16 %v1110, %v1108
        %s1161 = scalar_lea.vmem %s1, 192
        %v1162 = vld [vmem:[%s1161] sm:$0xf]
        %v1163 = vld [vmem:[%s1161 + $0x4] sm:$0xf]
        %v1164 = vld [vmem:[%s1161 + $0x8] sm:$0xf]
        %v1165 = vld [vmem:[%s1161 + $0xc] sm:$0xf]
        %v1166 = vld [vmem:[%s1161 + $0x10] sm:$0xf]
        %v1167 = vld [vmem:[%s1161 + $0x14] sm:$0xf]
        %v1168 = vld [vmem:[%s1161 + $0x18] sm:$0xf]
        %v1169 = vld [vmem:[%s1161 + $0x1c] sm:$0xf]
        %v1170 = vld [vmem:[%s1161 + $0x20] sm:$0xf]
        %v1171 = vld [vmem:[%s1161 + $0x24] sm:$0xf]
        %v1172 = vld [vmem:[%s1161 + $0x28] sm:$0xf]
        %v1173 = vld [vmem:[%s1161 + $0x2c] sm:$0xf]
        %v1174 = vld [vmem:[%s1161 + $0x30] sm:$0xf]
        %v1175 = vld [vmem:[%s1161 + $0x34] sm:$0xf]
        %v1176 = vld [vmem:[%s1161 + $0x38] sm:$0xf]
        %v1177 = vld [vmem:[%s1161 + $0x3c] sm:$0xf]
        %v1178 = vld [vmem:[%s1161 + $0x40] sm:$0xf]
        %v1179 = vld [vmem:[%s1161 + $0x44] sm:$0xf]
        %v1180 = vld [vmem:[%s1161 + $0x48] sm:$0xf]
        %v1181 = vld [vmem:[%s1161 + $0x4c] sm:$0xf]
        %v1182 = vld [vmem:[%s1161 + $0x50] sm:$0xf]
        %v1183 = vld [vmem:[%s1161 + $0x54] sm:$0xf]
        %v1184 = vld [vmem:[%s1161 + $0x58] sm:$0xf]
        %v1185 = vld [vmem:[%s1161 + $0x5c] sm:$0xf]
        %v1186 = vld [vmem:[%s1161 + $0x60] sm:$0xf]
        %v1187 = vld [vmem:[%s1161 + $0x64] sm:$0xf]
        %v1188 = vld [vmem:[%s1161 + $0x68] sm:$0xf]
        %v1189 = vld [vmem:[%s1161 + $0x6c] sm:$0xf]
        %v1190 = vld [vmem:[%s1161 + $0x70] sm:$0xf]
        %v1191 = vld [vmem:[%s1161 + $0x74] sm:$0xf]
        %v1192 = vld [vmem:[%s1161 + $0x78] sm:$0xf]
        %v1193 = vld [vmem:[%s1161 + $0x7c] sm:$0xf]
        %v1194 = vld [vmem:[%s1161 + $0x80] sm:$0xf]
        %v1195 = vld [vmem:[%s1161 + $0x84] sm:$0xf]
        %v1196 = vld [vmem:[%s1161 + $0x88] sm:$0xf]
        %v1197 = vld [vmem:[%s1161 + $0x8c] sm:$0xf]
        %v1198 = vld [vmem:[%s1161 + $0x90] sm:$0xf]
        %v1199 = vld [vmem:[%s1161 + $0x94] sm:$0xf]
        %v1200 = vld [vmem:[%s1161 + $0x98] sm:$0xf]
        %v1201 = vld [vmem:[%s1161 + $0x9c] sm:$0xf]
        %v1202 = vld [vmem:[%s1161 + $0xa0] sm:$0xf]
        %v1203 = vld [vmem:[%s1161 + $0xa4] sm:$0xf]
        %v1204 = vld [vmem:[%s1161 + $0xa8] sm:$0xf]
        %v1205 = vld [vmem:[%s1161 + $0xac] sm:$0xf]
        %v1206 = vld [vmem:[%s1161 + $0xb0] sm:$0xf]
        %v1207 = vld [vmem:[%s1161 + $0xb4] sm:$0xf]
        %v1208 = vld [vmem:[%s1161 + $0xb8] sm:$0xf]
        %v1209 = vld [vmem:[%s1161 + $0xbc] sm:$0xf]
        %v1258 = vunpack.c.l.b16 %v1162
        %v1259 = vunpack.c.l.b16 %v1163
        %v1260 = vunpack.c.l.b16 %v1164
        %v1261 = vunpack.c.l.b16 %v1165
        %v1262 = vunpack.c.l.b16 %v1166
        %v1263 = vunpack.c.l.b16 %v1167
        %v1264 = vunpack.c.l.b16 %v1168
        %v1265 = vunpack.c.l.b16 %v1169
        %v1266 = vunpack.c.l.b16 %v1170
        %v1267 = vunpack.c.l.b16 %v1171
        %v1268 = vunpack.c.l.b16 %v1172
        %v1269 = vunpack.c.l.b16 %v1173
        %v1270 = vunpack.c.l.b16 %v1174
        %v1271 = vunpack.c.l.b16 %v1175
        %v1272 = vunpack.c.l.b16 %v1176
        %v1273 = vunpack.c.l.b16 %v1177
        %v1274 = vunpack.c.l.b16 %v1178
        %v1275 = vunpack.c.l.b16 %v1179
        %v1276 = vunpack.c.l.b16 %v1180
        %v1277 = vunpack.c.l.b16 %v1181
        %v1278 = vunpack.c.l.b16 %v1182
        %v1279 = vunpack.c.l.b16 %v1183
        %v1280 = vunpack.c.l.b16 %v1184
        %v1281 = vunpack.c.l.b16 %v1185
        %v1282 = vunpack.c.l.b16 %v1186
        %v1283 = vunpack.c.l.b16 %v1187
        %v1284 = vunpack.c.l.b16 %v1188
        %v1285 = vunpack.c.l.b16 %v1189
        %v1286 = vunpack.c.l.b16 %v1190
        %v1287 = vunpack.c.l.b16 %v1191
        %v1288 = vunpack.c.l.b16 %v1192
        %v1289 = vunpack.c.l.b16 %v1193
        %v1290 = vunpack.c.l.b16 %v1194
        %v1291 = vunpack.c.l.b16 %v1195
        %v1292 = vunpack.c.l.b16 %v1196
        %v1293 = vunpack.c.l.b16 %v1197
        %v1294 = vunpack.c.l.b16 %v1198
        %v1295 = vunpack.c.l.b16 %v1199
        %v1296 = vunpack.c.l.b16 %v1200
        %v1297 = vunpack.c.l.b16 %v1201
        %v1298 = vunpack.c.l.b16 %v1202
        %v1299 = vunpack.c.l.b16 %v1203
        %v1300 = vunpack.c.l.b16 %v1204
        %v1301 = vunpack.c.l.b16 %v1205
        %v1302 = vunpack.c.l.b16 %v1206
        %v1303 = vunpack.c.l.b16 %v1207
        %v1304 = vunpack.c.l.b16 %v1208
        %v1305 = vunpack.c.l.b16 %v1209
        %v1306 = vpack.c.b16 %v1259, %v1258
        %v1307 = vpack.c.b16 %v1261, %v1260
        %v1308 = vpack.c.b16 %v1263, %v1262
        %v1309 = vpack.c.b16 %v1265, %v1264
        %v1310 = vpack.c.b16 %v1267, %v1266
        %v1311 = vpack.c.b16 %v1269, %v1268
        %v1312 = vpack.c.b16 %v1271, %v1270
        %v1313 = vpack.c.b16 %v1273, %v1272
        %v1314 = vpack.c.b16 %v1275, %v1274
        %v1315 = vpack.c.b16 %v1277, %v1276
        %v1316 = vpack.c.b16 %v1279, %v1278
        %v1317 = vpack.c.b16 %v1281, %v1280
        %v1318 = vpack.c.b16 %v1283, %v1282
        %v1319 = vpack.c.b16 %v1285, %v1284
        %v1320 = vpack.c.b16 %v1287, %v1286
        %v1321 = vpack.c.b16 %v1289, %v1288
        %v1322 = vpack.c.b16 %v1291, %v1290
        %v1323 = vpack.c.b16 %v1293, %v1292
        %v1324 = vpack.c.b16 %v1295, %v1294
        %v1325 = vpack.c.b16 %v1297, %v1296
        %v1326 = vpack.c.b16 %v1299, %v1298
        %v1327 = vpack.c.b16 %v1301, %v1300
        %v1328 = vpack.c.b16 %v1303, %v1302
        %v1329 = vpack.c.b16 %v1305, %v1304
        %1354 = vmatprep.subr.bf16.mxu0 0
        %1355 = vmatpush1.bf16.msra.mxu0 %v1313
        %1356 = vmatprep.subr.bf16.mxu0 0
        %1357 = vmatpush1.bf16.msra.mxu0 %v1312
        %1358 = vmatprep.subr.bf16.mxu0 0
        %1359 = vmatpush1.bf16.msra.mxu0 %v1311
        %1360 = vmatprep.subr.bf16.mxu0 0
        %1361 = vmatpush1.bf16.msra.mxu0 %v1310
        %1362 = vmatprep.subr.bf16.mxu0 0
        %1363 = vmatpush1.bf16.msra.mxu0 %v1309
        %1364 = vmatprep.subr.bf16.mxu0 0
        %1365 = vmatpush1.bf16.msra.mxu0 %v1308
        %1366 = vmatprep.subr.bf16.mxu0 0
        %1367 = vmatpush1.bf16.msra.mxu0 %v1307
        %1368 = vmatprep.subr.bf16.mxu0 0
        %1369 = vmatpush1.bf16.msra.mxu0 %v1306
        %1370 = vmatprep.subr.bf16.mxu0 0
        %1371 = vmatpush2.bf16.msra.mxu0 %v1321
        %1372 = vmatprep.subr.bf16.mxu0 0
        %1373 = vmatpush2.bf16.msra.mxu0 %v1320
        %1374 = vmatprep.subr.bf16.mxu0 0
        %1375 = vmatpush2.bf16.msra.mxu0 %v1319
        %1376 = vmatprep.subr.bf16.mxu0 0
        %1377 = vmatpush2.bf16.msra.mxu0 %v1318
        %1378 = vmatprep.subr.bf16.mxu0 0
        %1379 = vmatpush2.bf16.msra.mxu0 %v1317
        %1380 = vmatprep.subr.bf16.mxu0 0
        %1381 = vmatpush2.bf16.msra.mxu0 %v1316
        %1382 = vmatprep.subr.bf16.mxu0 0
        %1383 = vmatpush2.bf16.msra.mxu0 %v1315
        %1384 = vmatprep.subr.bf16.mxu0 0
        %1385 = vmatpush2.bf16.msra.mxu0 %v1314
        %1386 = vmatprep.mubr.bf16.mxu0 %v1132
        %1387 = vmatmul.mubr.bf16.gmra.mxu0 %v1131
        %v1388 = vpop.f32.mrf.mxu0
        %v1389 = vadd.f32 0.0, %v1388
        %v1390 = vpop.f32.mrf.mxu0
        %v1391 = vpop.f32.mrf.mxu0
        %v1392 = vadd.f32 0.0, %v1391
        %v1393 = vpop.f32.mrf.mxu0
        %1394 = vmatprep.mubr.bf16.mxu0 %v1135
        %1395 = vmatmul.mubr.bf16.gmra.mxu0 %v1134
        %v1396 = vpop.f32.mrf.mxu0
        %v1397 = vadd.f32 0.0, %v1396
        %v1398 = vpop.f32.mrf.mxu0
        %v1399 = vpop.f32.mrf.mxu0
        %v1400 = vadd.f32 0.0, %v1399
        %v1401 = vpop.f32.mrf.mxu0
        %1402 = vmatprep.mubr.bf16.mxu0 %v1138
        %1403 = vmatmul.mubr.bf16.gmra.mxu0 %v1137
        %v1404 = vpop.f32.mrf.mxu0
        %v1405 = vadd.f32 0.0, %v1404
        %v1406 = vpop.f32.mrf.mxu0
        %v1407 = vpop.f32.mrf.mxu0
        %v1408 = vadd.f32 0.0, %v1407
        %v1409 = vpop.f32.mrf.mxu0
        %1410 = vmatprep.mubr.bf16.mxu0 %v1141
        %1411 = vmatmul.mubr.bf16.gmra.mxu0 %v1140
        %v1412 = vpop.f32.mrf.mxu0
        %v1413 = vadd.f32 0.0, %v1412
        %v1414 = vpop.f32.mrf.mxu0
        %v1415 = vpop.f32.mrf.mxu0
        %v1416 = vadd.f32 0.0, %v1415
        %v1417 = vpop.f32.mrf.mxu0
        %1418 = vmatprep.mubr.bf16.mxu0 %v1144
        %1419 = vmatmul.mubr.bf16.gmra.mxu0 %v1143
        %v1420 = vpop.f32.mrf.mxu0
        %v1421 = vadd.f32 0.0, %v1420
        %v1422 = vpop.f32.mrf.mxu0
        %v1423 = vpop.f32.mrf.mxu0
        %v1424 = vadd.f32 0.0, %v1423
        %v1425 = vpop.f32.mrf.mxu0
        %1426 = vmatprep.mubr.bf16.mxu0 %v1147
        %1427 = vmatmul.mubr.bf16.gmra.mxu0 %v1146
        %v1428 = vpop.f32.mrf.mxu0
        %v1429 = vadd.f32 0.0, %v1428
        %v1430 = vpop.f32.mrf.mxu0
        %v1431 = vpop.f32.mrf.mxu0
        %v1432 = vadd.f32 0.0, %v1431
        %v1433 = vpop.f32.mrf.mxu0
        %1434 = vmatprep.mubr.bf16.mxu0 %v1150
        %1435 = vmatmul.mubr.bf16.gmra.mxu0 %v1149
        %v1436 = vpop.f32.mrf.mxu0
        %v1437 = vadd.f32 0.0, %v1436
        %v1438 = vpop.f32.mrf.mxu0
        %v1439 = vpop.f32.mrf.mxu0
        %v1440 = vadd.f32 0.0, %v1439
        %v1441 = vpop.f32.mrf.mxu0
        %1442 = vmatprep.mubr.bf16.mxu0 %v1153
        %1443 = vmatmul.mubr.bf16.gmra.mxu0 %v1152
        %v1444 = vpop.f32.mrf.mxu0
        %v1445 = vadd.f32 0.0, %v1444
        %v1446 = vpop.f32.mrf.mxu0
        %v1447 = vpop.f32.mrf.mxu0
        %v1448 = vadd.f32 0.0, %v1447
        %v1449 = vpop.f32.mrf.mxu0
        %1450 = vmatprep.mubr.bf16.mxu0 %v1156
        %1451 = vmatmul.mubr.bf16.gmra.mxu0 %v1155
        %v1452 = vpop.f32.mrf.mxu0
        %v1453 = vadd.f32 0.0, %v1452
        %v1454 = vpop.f32.mrf.mxu0
        %v1455 = vpop.f32.mrf.mxu0
        %v1456 = vadd.f32 0.0, %v1455
        %v1457 = vpop.f32.mrf.mxu0
        %1458 = vmatprep.mubr.bf16.mxu0 %v1159
        %1459 = vmatmul.mubr.bf16.gmra.mxu0 %v1158
        %v1460 = vpop.f32.mrf.mxu0
        %v1461 = vadd.f32 0.0, %v1460
        %v1462 = vpop.f32.mrf.mxu0
        %v1463 = vpop.f32.mrf.mxu0
        %v1464 = vadd.f32 0.0, %v1463
        %v1465 = vpop.f32.mrf.mxu0
        %1466 = vdwg.mxu0
        %1467 = vmatprep.subr.bf16.mxu0 0
        %1468 = vmatpush1.bf16.msra.mxu0 %v1329
        %1469 = vmatprep.subr.bf16.mxu0 0
        %1470 = vmatpush1.bf16.msra.mxu0 %v1328
        %1471 = vmatprep.subr.bf16.mxu0 0
        %1472 = vmatpush1.bf16.msra.mxu0 %v1327
        %1473 = vmatprep.subr.bf16.mxu0 0
        %1474 = vmatpush1.bf16.msra.mxu0 %v1326
        %1475 = vmatprep.subr.bf16.mxu0 0
        %1476 = vmatpush1.bf16.msra.mxu0 %v1325
        %1477 = vmatprep.subr.bf16.mxu0 0
        %1478 = vmatpush1.bf16.msra.mxu0 %v1324
        %1479 = vmatprep.subr.bf16.mxu0 0
        %1480 = vmatpush1.bf16.msra.mxu0 %v1323
        %1481 = vmatprep.subr.bf16.mxu0 0
        %1482 = vmatpush1.bf16.msra.mxu0 %v1322
        %1483 = vmatprep.subr.bf16.mxu0 0
        %1484 = vmatpush2.bf16.msra.mxu0 0
        %1485 = vmatprep.subr.bf16.mxu0 0
        %1486 = vmatpush2.bf16.msra.mxu0 0
        %1487 = vmatprep.subr.bf16.mxu0 0
        %1488 = vmatpush2.bf16.msra.mxu0 0
        %1489 = vmatprep.subr.bf16.mxu0 0
        %1490 = vmatpush2.bf16.msra.mxu0 0
        %1491 = vmatprep.subr.bf16.mxu0 0
        %1492 = vmatpush2.bf16.msra.mxu0 0
        %1493 = vmatprep.subr.bf16.mxu0 0
        %1494 = vmatpush2.bf16.msra.mxu0 0
        %1495 = vmatprep.subr.bf16.mxu0 0
        %1496 = vmatpush2.bf16.msra.mxu0 0
        %1497 = vmatprep.subr.bf16.mxu0 0
        %1498 = vmatpush2.bf16.msra.mxu0 0
        %1499 = vmatprep.mubr.bf16.mxu0 0
        %1500 = vmatmul.mubr.bf16.gmra.mxu0 %v1133
        %v1501 = vpop.f32.mrf.mxu0
        %v1502 = vadd.f32 %v1389, %v1501
        %v1503 = vpop.f32.mrf.mxu0
        %v1504 = vpop.f32.mrf.mxu0
        %v1505 = vadd.f32 %v1392, %v1504
        %v1506 = vpop.f32.mrf.mxu0
        %1507 = vmatprep.mubr.bf16.mxu0 0
        %1508 = vmatmul.mubr.bf16.gmra.mxu0 %v1136
        %v1509 = vpop.f32.mrf.mxu0
        %v1510 = vadd.f32 %v1397, %v1509
        %v1511 = vpop.f32.mrf.mxu0
        %v1512 = vpop.f32.mrf.mxu0
        %v1513 = vadd.f32 %v1400, %v1512
        %v1514 = vpop.f32.mrf.mxu0
        %1515 = vmatprep.mubr.bf16.mxu0 0
        %1516 = vmatmul.mubr.bf16.gmra.mxu0 %v1139
        %v1517 = vpop.f32.mrf.mxu0
        %v1518 = vadd.f32 %v1405, %v1517
        %v1519 = vpop.f32.mrf.mxu0
        %v1520 = vpop.f32.mrf.mxu0
        %v1521 = vadd.f32 %v1408, %v1520
        %v1522 = vpop.f32.mrf.mxu0
        %1523 = vmatprep.mubr.bf16.mxu0 0
        %1524 = vmatmul.mubr.bf16.gmra.mxu0 %v1142
        %v1525 = vpop.f32.mrf.mxu0
        %v1526 = vadd.f32 %v1413, %v1525
        %v1527 = vpop.f32.mrf.mxu0
        %v1528 = vpop.f32.mrf.mxu0
        %v1529 = vadd.f32 %v1416, %v1528
        %v1530 = vpop.f32.mrf.mxu0
        %1531 = vmatprep.mubr.bf16.mxu0 0
        %1532 = vmatmul.mubr.bf16.gmra.mxu0 %v1145
        %v1533 = vpop.f32.mrf.mxu0
        %v1534 = vadd.f32 %v1421, %v1533
        %v1535 = vpop.f32.mrf.mxu0
        %v1536 = vpop.f32.mrf.mxu0
        %v1537 = vadd.f32 %v1424, %v1536
        %v1538 = vpop.f32.mrf.mxu0
        %1539 = vmatprep.mubr.bf16.mxu0 0
        %1540 = vmatmul.mubr.bf16.gmra.mxu0 %v1148
        %v1541 = vpop.f32.mrf.mxu0
        %v1542 = vadd.f32 %v1429, %v1541
        %v1543 = vpop.f32.mrf.mxu0
        %v1544 = vpop.f32.mrf.mxu0
        %v1545 = vadd.f32 %v1432, %v1544
        %v1546 = vpop.f32.mrf.mxu0
        %1547 = vmatprep.mubr.bf16.mxu0 0
        %1548 = vmatmul.mubr.bf16.gmra.mxu0 %v1151
        %v1549 = vpop.f32.mrf.mxu0
        %v1550 = vadd.f32 %v1437, %v1549
        %v1551 = vpop.f32.mrf.mxu0
        %v1552 = vpop.f32.mrf.mxu0
        %v1553 = vadd.f32 %v1440, %v1552
        %v1554 = vpop.f32.mrf.mxu0
        %1555 = vmatprep.mubr.bf16.mxu0 0
        %1556 = vmatmul.mubr.bf16.gmra.mxu0 %v1154
        %v1557 = vpop.f32.mrf.mxu0
        %v1558 = vadd.f32 %v1445, %v1557
        %v1559 = vpop.f32.mrf.mxu0
        %v1560 = vpop.f32.mrf.mxu0
        %v1561 = vadd.f32 %v1448, %v1560
        %v1562 = vpop.f32.mrf.mxu0
        %1563 = vmatprep.mubr.bf16.mxu0 0
        %1564 = vmatmul.mubr.bf16.gmra.mxu0 %v1157
        %v1565 = vpop.f32.mrf.mxu0
        %v1566 = vadd.f32 %v1453, %v1565
        %v1567 = vpop.f32.mrf.mxu0
        %v1568 = vpop.f32.mrf.mxu0
        %v1569 = vadd.f32 %v1456, %v1568
        %v1570 = vpop.f32.mrf.mxu0
        %1571 = vmatprep.mubr.bf16.mxu0 0
        %1572 = vmatmul.mubr.bf16.gmra.mxu0 %v1160
        %v1573 = vpop.f32.mrf.mxu0
        %v1574 = vadd.f32 %v1461, %v1573
        %v1575 = vpop.f32.mrf.mxu0
        %v1576 = vpop.f32.mrf.mxu0
        %v1577 = vadd.f32 %v1464, %v1576
        %v1578 = vpop.f32.mrf.mxu0
        %1579 = vdwg.mxu0
        %v1580 = vadd.f32 %v910, %v1502
        %v1581 = vadd.f32 %v911, %v1505
        %v1582 = vadd.f32 %v912, %v1510
        %v1583 = vadd.f32 %v913, %v1513
        %v1584 = vadd.f32 %v914, %v1518
        %v1585 = vadd.f32 %v915, %v1521
        %v1586 = vadd.f32 %v916, %v1526
        %v1587 = vadd.f32 %v917, %v1529
        %v1588 = vadd.f32 %v918, %v1534
        %v1589 = vadd.f32 %v919, %v1537
        %v1590 = vadd.f32 %v920, %v1542
        %v1591 = vadd.f32 %v921, %v1545
        %v1592 = vadd.f32 %v922, %v1550
        %v1593 = vadd.f32 %v923, %v1553
        %v1594 = vadd.f32 %v924, %v1558
        %v1595 = vadd.f32 %v925, %v1561
        %v1596 = vadd.f32 %v926, %v1566
        %v1597 = vadd.f32 %v927, %v1569
        %v1598 = vadd.f32 %v928, %v1574
        %v1599 = vadd.f32 %v929, %v1577
        %s1600 = scalar_lea.vmem %s248, 48
        %v1601 = vld [vmem:[%s1600] sm:$0xff]
        %v1602 = vld [vmem:[%s1600 + $0x8] sm:$0xff]
        %v1603 = vld [vmem:[%s1600 + $0x10] sm:$0x3]
        %v1604 = vld [vmem:[%s1600 + $0x18] sm:$0xff]
        %v1605 = vld [vmem:[%s1600 + $0x20] sm:$0xff]
        %v1606 = vld [vmem:[%s1600 + $0x28] sm:$0x3]
        %v1607 = vld [vmem:[%s1600 + $0x30] sm:$0xff]
        %v1608 = vld [vmem:[%s1600 + $0x38] sm:$0xff]
        %v1609 = vld [vmem:[%s1600 + $0x40] sm:$0x3]
        %v1610 = vld [vmem:[%s1600 + $0x48] sm:$0xff]
        %v1611 = vld [vmem:[%s1600 + $0x50] sm:$0xff]
        %v1612 = vld [vmem:[%s1600 + $0x58] sm:$0x3]
        %v1613 = vld [vmem:[%s1600 + $0x60] sm:$0xff]
        %v1614 = vld [vmem:[%s1600 + $0x68] sm:$0xff]
        %v1615 = vld [vmem:[%s1600 + $0x70] sm:$0x3]
        %v1616 = vld [vmem:[%s1600 + $0x78] sm:$0xff]
        %v1617 = vld [vmem:[%s1600 + $0x80] sm:$0xff]
        %v1618 = vld [vmem:[%s1600 + $0x88] sm:$0x3]
        %v1619 = vld [vmem:[%s1600 + $0x90] sm:$0xff]
        %v1620 = vld [vmem:[%s1600 + $0x98] sm:$0xff]
        %v1621 = vld [vmem:[%s1600 + $0xa0] sm:$0x3]
        %v1622 = vld [vmem:[%s1600 + $0xa8] sm:$0xff]
        %v1623 = vld [vmem:[%s1600 + $0xb0] sm:$0xff]
        %v1624 = vld [vmem:[%s1600 + $0xb8] sm:$0x3]
        %v1625 = vld [vmem:[%s1600 + $0xc0] sm:$0xff]
        %v1626 = vld [vmem:[%s1600 + $0xc8] sm:$0xff]
        %v1627 = vld [vmem:[%s1600 + $0xd0] sm:$0x3]
        %v1628 = vld [vmem:[%s1600 + $0xd8] sm:$0xff]
        %v1629 = vld [vmem:[%s1600 + $0xe0] sm:$0xff]
        %v1630 = vld [vmem:[%s1600 + $0xe8] sm:$0x3]
        %v1661 = vrot.slane %v1601, 1
        %v1662 = vrot.slane %v1602, 1
        %v1663 = vsel %vm320, %v1661, %v1662
        %v1664 = vrot.slane %v1603, 1
        %v1665 = vsel %vm320, %v1662, %v1664
        %v1666 = vrot.slane %v1604, 1
        %v1667 = vrot.slane %v1605, 1
        %v1668 = vsel %vm320, %v1666, %v1667
        %v1669 = vrot.slane %v1606, 1
        %v1670 = vsel %vm320, %v1667, %v1669
        %v1671 = vrot.slane %v1607, 1
        %v1672 = vrot.slane %v1608, 1
        %v1673 = vsel %vm320, %v1671, %v1672
        %v1674 = vrot.slane %v1609, 1
        %v1675 = vsel %vm320, %v1672, %v1674
        %v1676 = vrot.slane %v1610, 1
        %v1677 = vrot.slane %v1611, 1
        %v1678 = vsel %vm320, %v1676, %v1677
        %v1679 = vrot.slane %v1612, 1
        %v1680 = vsel %vm320, %v1677, %v1679
        %v1681 = vrot.slane %v1613, 1
        %v1682 = vrot.slane %v1614, 1
        %v1683 = vsel %vm320, %v1681, %v1682
        %v1684 = vrot.slane %v1615, 1
        %v1685 = vsel %vm320, %v1682, %v1684
        %v1686 = vrot.slane %v1616, 1
        %v1687 = vrot.slane %v1617, 1
        %v1688 = vsel %vm320, %v1686, %v1687
        %v1689 = vrot.slane %v1618, 1
        %v1690 = vsel %vm320, %v1687, %v1689
        %v1691 = vrot.slane %v1619, 1
        %v1692 = vrot.slane %v1620, 1
        %v1693 = vsel %vm320, %v1691, %v1692
        %v1694 = vrot.slane %v1621, 1
        %v1695 = vsel %vm320, %v1692, %v1694
        %v1696 = vrot.slane %v1622, 1
        %v1697 = vrot.slane %v1623, 1
        %v1698 = vsel %vm320, %v1696, %v1697
        %v1699 = vrot.slane %v1624, 1
        %v1700 = vsel %vm320, %v1697, %v1699
        %v1701 = vrot.slane %v1625, 1
        %v1702 = vrot.slane %v1626, 1
        %v1703 = vsel %vm320, %v1701, %v1702
        %v1704 = vrot.slane %v1627, 1
        %v1705 = vsel %vm320, %v1702, %v1704
        %v1706 = vrot.slane %v1628, 1
        %v1707 = vrot.slane %v1629, 1
        %v1708 = vsel %vm320, %v1706, %v1707
        %v1709 = vrot.slane %v1630, 1
        %v1710 = vsel %vm320, %v1707, %v1709
        %v1731 = vrot.slane %v1601, 2
        %v1732 = vrot.slane %v1602, 2
        %v1733 = vsel %vm391, %v1731, %v1732
        %v1734 = vrot.slane %v1603, 2
        %v1735 = vsel %vm391, %v1732, %v1734
        %v1736 = vrot.slane %v1604, 2
        %v1737 = vrot.slane %v1605, 2
        %v1738 = vsel %vm391, %v1736, %v1737
        %v1739 = vrot.slane %v1606, 2
        %v1740 = vsel %vm391, %v1737, %v1739
        %v1741 = vrot.slane %v1607, 2
        %v1742 = vrot.slane %v1608, 2
        %v1743 = vsel %vm391, %v1741, %v1742
        %v1744 = vrot.slane %v1609, 2
        %v1745 = vsel %vm391, %v1742, %v1744
        %v1746 = vrot.slane %v1610, 2
        %v1747 = vrot.slane %v1611, 2
        %v1748 = vsel %vm391, %v1746, %v1747
        %v1749 = vrot.slane %v1612, 2
        %v1750 = vsel %vm391, %v1747, %v1749
        %v1751 = vrot.slane %v1613, 2
        %v1752 = vrot.slane %v1614, 2
        %v1753 = vsel %vm391, %v1751, %v1752
        %v1754 = vrot.slane %v1615, 2
        %v1755 = vsel %vm391, %v1752, %v1754
        %v1756 = vrot.slane %v1616, 2
        %v1757 = vrot.slane %v1617, 2
        %v1758 = vsel %vm391, %v1756, %v1757
        %v1759 = vrot.slane %v1618, 2
        %v1760 = vsel %vm391, %v1757, %v1759
        %v1761 = vrot.slane %v1619, 2
        %v1762 = vrot.slane %v1620, 2
        %v1763 = vsel %vm391, %v1761, %v1762
        %v1764 = vrot.slane %v1621, 2
        %v1765 = vsel %vm391, %v1762, %v1764
        %v1766 = vrot.slane %v1622, 2
        %v1767 = vrot.slane %v1623, 2
        %v1768 = vsel %vm391, %v1766, %v1767
        %v1769 = vrot.slane %v1624, 2
        %v1770 = vsel %vm391, %v1767, %v1769
        %v1771 = vrot.slane %v1625, 2
        %v1772 = vrot.slane %v1626, 2
        %v1773 = vsel %vm391, %v1771, %v1772
        %v1774 = vrot.slane %v1627, 2
        %v1775 = vsel %vm391, %v1772, %v1774
        %v1776 = vrot.slane %v1628, 2
        %v1777 = vrot.slane %v1629, 2
        %v1778 = vsel %vm391, %v1776, %v1777
        %v1779 = vrot.slane %v1630, 2
        %v1780 = vsel %vm391, %v1777, %v1779
        %v1801 = vpack.c.bf16 %v1602, %v1601
        %v1802 = vpack.c.bf16 %v1665, %v1663
        %v1803 = vpack.c.bf16 %v1735, %v1733
        %v1804 = vpack.c.bf16 %v1605, %v1604
        %v1805 = vpack.c.bf16 %v1670, %v1668
        %v1806 = vpack.c.bf16 %v1740, %v1738
        %v1807 = vpack.c.bf16 %v1608, %v1607
        %v1808 = vpack.c.bf16 %v1675, %v1673
        %v1809 = vpack.c.bf16 %v1745, %v1743
        %v1810 = vpack.c.bf16 %v1611, %v1610
        %v1811 = vpack.c.bf16 %v1680, %v1678
        %v1812 = vpack.c.bf16 %v1750, %v1748
        %v1813 = vpack.c.bf16 %v1614, %v1613
        %v1814 = vpack.c.bf16 %v1685, %v1683
        %v1815 = vpack.c.bf16 %v1755, %v1753
        %v1816 = vpack.c.bf16 %v1617, %v1616
        %v1817 = vpack.c.bf16 %v1690, %v1688
        %v1818 = vpack.c.bf16 %v1760, %v1758
        %v1819 = vpack.c.bf16 %v1620, %v1619
        %v1820 = vpack.c.bf16 %v1695, %v1693
        %v1821 = vpack.c.bf16 %v1765, %v1763
        %v1822 = vpack.c.bf16 %v1623, %v1622
        %v1823 = vpack.c.bf16 %v1700, %v1698
        %v1824 = vpack.c.bf16 %v1770, %v1768
        %v1825 = vpack.c.bf16 %v1626, %v1625
        %v1826 = vpack.c.bf16 %v1705, %v1703
        %v1827 = vpack.c.bf16 %v1775, %v1773
        %v1828 = vpack.c.bf16 %v1629, %v1628
        %v1829 = vpack.c.bf16 %v1710, %v1708
        %v1830 = vpack.c.bf16 %v1780, %v1778
        %s1831 = scalar_lea.vmem %s1, 384
        %v1832 = vld [vmem:[%s1831] sm:$0xf]
        %v1833 = vld [vmem:[%s1831 + $0x4] sm:$0xf]
        %v1834 = vld [vmem:[%s1831 + $0x8] sm:$0xf]
        %v1835 = vld [vmem:[%s1831 + $0xc] sm:$0xf]
        %v1836 = vld [vmem:[%s1831 + $0x10] sm:$0xf]
        %v1837 = vld [vmem:[%s1831 + $0x14] sm:$0xf]
        %v1838 = vld [vmem:[%s1831 + $0x18] sm:$0xf]
        %v1839 = vld [vmem:[%s1831 + $0x1c] sm:$0xf]
        %v1840 = vld [vmem:[%s1831 + $0x20] sm:$0xf]
        %v1841 = vld [vmem:[%s1831 + $0x24] sm:$0xf]
        %v1842 = vld [vmem:[%s1831 + $0x28] sm:$0xf]
        %v1843 = vld [vmem:[%s1831 + $0x2c] sm:$0xf]
        %v1844 = vld [vmem:[%s1831 + $0x30] sm:$0xf]
        %v1845 = vld [vmem:[%s1831 + $0x34] sm:$0xf]
        %v1846 = vld [vmem:[%s1831 + $0x38] sm:$0xf]
        %v1847 = vld [vmem:[%s1831 + $0x3c] sm:$0xf]
        %v1848 = vld [vmem:[%s1831 + $0x40] sm:$0xf]
        %v1849 = vld [vmem:[%s1831 + $0x44] sm:$0xf]
        %v1850 = vld [vmem:[%s1831 + $0x48] sm:$0xf]
        %v1851 = vld [vmem:[%s1831 + $0x4c] sm:$0xf]
        %v1852 = vld [vmem:[%s1831 + $0x50] sm:$0xf]
        %v1853 = vld [vmem:[%s1831 + $0x54] sm:$0xf]
        %v1854 = vld [vmem:[%s1831 + $0x58] sm:$0xf]
        %v1855 = vld [vmem:[%s1831 + $0x5c] sm:$0xf]
        %v1856 = vld [vmem:[%s1831 + $0x60] sm:$0xf]
        %v1857 = vld [vmem:[%s1831 + $0x64] sm:$0xf]
        %v1858 = vld [vmem:[%s1831 + $0x68] sm:$0xf]
        %v1859 = vld [vmem:[%s1831 + $0x6c] sm:$0xf]
        %v1860 = vld [vmem:[%s1831 + $0x70] sm:$0xf]
        %v1861 = vld [vmem:[%s1831 + $0x74] sm:$0xf]
        %v1862 = vld [vmem:[%s1831 + $0x78] sm:$0xf]
        %v1863 = vld [vmem:[%s1831 + $0x7c] sm:$0xf]
        %v1864 = vld [vmem:[%s1831 + $0x80] sm:$0xf]
        %v1865 = vld [vmem:[%s1831 + $0x84] sm:$0xf]
        %v1866 = vld [vmem:[%s1831 + $0x88] sm:$0xf]
        %v1867 = vld [vmem:[%s1831 + $0x8c] sm:$0xf]
        %v1868 = vld [vmem:[%s1831 + $0x90] sm:$0xf]
        %v1869 = vld [vmem:[%s1831 + $0x94] sm:$0xf]
        %v1870 = vld [vmem:[%s1831 + $0x98] sm:$0xf]
        %v1871 = vld [vmem:[%s1831 + $0x9c] sm:$0xf]
        %v1872 = vld [vmem:[%s1831 + $0xa0] sm:$0xf]
        %v1873 = vld [vmem:[%s1831 + $0xa4] sm:$0xf]
        %v1874 = vld [vmem:[%s1831 + $0xa8] sm:$0xf]
        %v1875 = vld [vmem:[%s1831 + $0xac] sm:$0xf]
        %v1876 = vld [vmem:[%s1831 + $0xb0] sm:$0xf]
        %v1877 = vld [vmem:[%s1831 + $0xb4] sm:$0xf]
        %v1878 = vld [vmem:[%s1831 + $0xb8] sm:$0xf]
        %v1879 = vld [vmem:[%s1831 + $0xbc] sm:$0xf]
        %v1928 = vunpack.c.l.b16 %v1832
        %v1929 = vunpack.c.l.b16 %v1833
        %v1930 = vunpack.c.l.b16 %v1834
        %v1931 = vunpack.c.l.b16 %v1835
        %v1932 = vunpack.c.l.b16 %v1836
        %v1933 = vunpack.c.l.b16 %v1837
        %v1934 = vunpack.c.l.b16 %v1838
        %v1935 = vunpack.c.l.b16 %v1839
        %v1936 = vunpack.c.l.b16 %v1840
        %v1937 = vunpack.c.l.b16 %v1841
        %v1938 = vunpack.c.l.b16 %v1842
        %v1939 = vunpack.c.l.b16 %v1843
        %v1940 = vunpack.c.l.b16 %v1844
        %v1941 = vunpack.c.l.b16 %v1845
        %v1942 = vunpack.c.l.b16 %v1846
        %v1943 = vunpack.c.l.b16 %v1847
        %v1944 = vunpack.c.l.b16 %v1848
        %v1945 = vunpack.c.l.b16 %v1849
        %v1946 = vunpack.c.l.b16 %v1850
        %v1947 = vunpack.c.l.b16 %v1851
        %v1948 = vunpack.c.l.b16 %v1852
        %v1949 = vunpack.c.l.b16 %v1853
        %v1950 = vunpack.c.l.b16 %v1854
        %v1951 = vunpack.c.l.b16 %v1855
        %v1952 = vunpack.c.l.b16 %v1856
        %v1953 = vunpack.c.l.b16 %v1857
        %v1954 = vunpack.c.l.b16 %v1858
        %v1955 = vunpack.c.l.b16 %v1859
        %v1956 = vunpack.c.l.b16 %v1860
        %v1957 = vunpack.c.l.b16 %v1861
        %v1958 = vunpack.c.l.b16 %v1862
        %v1959 = vunpack.c.l.b16 %v1863
        %v1960 = vunpack.c.l.b16 %v1864
        %v1961 = vunpack.c.l.b16 %v1865
        %v1962 = vunpack.c.l.b16 %v1866
        %v1963 = vunpack.c.l.b16 %v1867
        %v1964 = vunpack.c.l.b16 %v1868
        %v1965 = vunpack.c.l.b16 %v1869
        %v1966 = vunpack.c.l.b16 %v1870
        %v1967 = vunpack.c.l.b16 %v1871
        %v1968 = vunpack.c.l.b16 %v1872
        %v1969 = vunpack.c.l.b16 %v1873
        %v1970 = vunpack.c.l.b16 %v1874
        %v1971 = vunpack.c.l.b16 %v1875
        %v1972 = vunpack.c.l.b16 %v1876
        %v1973 = vunpack.c.l.b16 %v1877
        %v1974 = vunpack.c.l.b16 %v1878
        %v1975 = vunpack.c.l.b16 %v1879
        %v1976 = vpack.c.b16 %v1929, %v1928
        %v1977 = vpack.c.b16 %v1931, %v1930
        %v1978 = vpack.c.b16 %v1933, %v1932
        %v1979 = vpack.c.b16 %v1935, %v1934
        %v1980 = vpack.c.b16 %v1937, %v1936
        %v1981 = vpack.c.b16 %v1939, %v1938
        %v1982 = vpack.c.b16 %v1941, %v1940
        %v1983 = vpack.c.b16 %v1943, %v1942
        %v1984 = vpack.c.b16 %v1945, %v1944
        %v1985 = vpack.c.b16 %v1947, %v1946
        %v1986 = vpack.c.b16 %v1949, %v1948
        %v1987 = vpack.c.b16 %v1951, %v1950
        %v1988 = vpack.c.b16 %v1953, %v1952
        %v1989 = vpack.c.b16 %v1955, %v1954
        %v1990 = vpack.c.b16 %v1957, %v1956
        %v1991 = vpack.c.b16 %v1959, %v1958
        %v1992 = vpack.c.b16 %v1961, %v1960
        %v1993 = vpack.c.b16 %v1963, %v1962
        %v1994 = vpack.c.b16 %v1965, %v1964
        %v1995 = vpack.c.b16 %v1967, %v1966
        %v1996 = vpack.c.b16 %v1969, %v1968
        %v1997 = vpack.c.b16 %v1971, %v1970
        %v1998 = vpack.c.b16 %v1973, %v1972
        %v1999 = vpack.c.b16 %v1975, %v1974
        %2024 = vmatprep.subr.bf16.mxu0 0
        %2025 = vmatpush1.bf16.msra.mxu0 %v1983
        %2026 = vmatprep.subr.bf16.mxu0 0
        %2027 = vmatpush1.bf16.msra.mxu0 %v1982
        %2028 = vmatprep.subr.bf16.mxu0 0
        %2029 = vmatpush1.bf16.msra.mxu0 %v1981
        %2030 = vmatprep.subr.bf16.mxu0 0
        %2031 = vmatpush1.bf16.msra.mxu0 %v1980
        %2032 = vmatprep.subr.bf16.mxu0 0
        %2033 = vmatpush1.bf16.msra.mxu0 %v1979
        %2034 = vmatprep.subr.bf16.mxu0 0
        %2035 = vmatpush1.bf16.msra.mxu0 %v1978
        %2036 = vmatprep.subr.bf16.mxu0 0
        %2037 = vmatpush1.bf16.msra.mxu0 %v1977
        %2038 = vmatprep.subr.bf16.mxu0 0
        %2039 = vmatpush1.bf16.msra.mxu0 %v1976
        %2040 = vmatprep.subr.bf16.mxu0 0
        %2041 = vmatpush2.bf16.msra.mxu0 %v1991
        %2042 = vmatprep.subr.bf16.mxu0 0
        %2043 = vmatpush2.bf16.msra.mxu0 %v1990
        %2044 = vmatprep.subr.bf16.mxu0 0
        %2045 = vmatpush2.bf16.msra.mxu0 %v1989
        %2046 = vmatprep.subr.bf16.mxu0 0
        %2047 = vmatpush2.bf16.msra.mxu0 %v1988
        %2048 = vmatprep.subr.bf16.mxu0 0
        %2049 = vmatpush2.bf16.msra.mxu0 %v1987
        %2050 = vmatprep.subr.bf16.mxu0 0
        %2051 = vmatpush2.bf16.msra.mxu0 %v1986
        %2052 = vmatprep.subr.bf16.mxu0 0
        %2053 = vmatpush2.bf16.msra.mxu0 %v1985
        %2054 = vmatprep.subr.bf16.mxu0 0
        %2055 = vmatpush2.bf16.msra.mxu0 %v1984
        %2056 = vmatprep.mubr.bf16.mxu0 %v1802
        %2057 = vmatmul.mubr.bf16.gmra.mxu0 %v1801
        %v2058 = vpop.f32.mrf.mxu0
        %v2059 = vadd.f32 0.0, %v2058
        %v2060 = vpop.f32.mrf.mxu0
        %v2061 = vpop.f32.mrf.mxu0
        %v2062 = vadd.f32 0.0, %v2061
        %v2063 = vpop.f32.mrf.mxu0
        %2064 = vmatprep.mubr.bf16.mxu0 %v1805
        %2065 = vmatmul.mubr.bf16.gmra.mxu0 %v1804
        %v2066 = vpop.f32.mrf.mxu0
        %v2067 = vadd.f32 0.0, %v2066
        %v2068 = vpop.f32.mrf.mxu0
        %v2069 = vpop.f32.mrf.mxu0
        %v2070 = vadd.f32 0.0, %v2069
        %v2071 = vpop.f32.mrf.mxu0
        %2072 = vmatprep.mubr.bf16.mxu0 %v1808
        %2073 = vmatmul.mubr.bf16.gmra.mxu0 %v1807
        %v2074 = vpop.f32.mrf.mxu0
        %v2075 = vadd.f32 0.0, %v2074
        %v2076 = vpop.f32.mrf.mxu0
        %v2077 = vpop.f32.mrf.mxu0
        %v2078 = vadd.f32 0.0, %v2077
        %v2079 = vpop.f32.mrf.mxu0
        %2080 = vmatprep.mubr.bf16.mxu0 %v1811
        %2081 = vmatmul.mubr.bf16.gmra.mxu0 %v1810
        %v2082 = vpop.f32.mrf.mxu0
        %v2083 = vadd.f32 0.0, %v2082
        %v2084 = vpop.f32.mrf.mxu0
        %v2085 = vpop.f32.mrf.mxu0
        %v2086 = vadd.f32 0.0, %v2085
        %v2087 = vpop.f32.mrf.mxu0
        %2088 = vmatprep.mubr.bf16.mxu0 %v1814
        %2089 = vmatmul.mubr.bf16.gmra.mxu0 %v1813
        %v2090 = vpop.f32.mrf.mxu0
        %v2091 = vadd.f32 0.0, %v2090
        %v2092 = vpop.f32.mrf.mxu0
        %v2093 = vpop.f32.mrf.mxu0
        %v2094 = vadd.f32 0.0, %v2093
        %v2095 = vpop.f32.mrf.mxu0
        %2096 = vmatprep.mubr.bf16.mxu0 %v1817
        %2097 = vmatmul.mubr.bf16.gmra.mxu0 %v1816
        %v2098 = vpop.f32.mrf.mxu0
        %v2099 = vadd.f32 0.0, %v2098
        %v2100 = vpop.f32.mrf.mxu0
        %v2101 = vpop.f32.mrf.mxu0
        %v2102 = vadd.f32 0.0, %v2101
        %v2103 = vpop.f32.mrf.mxu0
        %2104 = vmatprep.mubr.bf16.mxu0 %v1820
        %2105 = vmatmul.mubr.bf16.gmra.mxu0 %v1819
        %v2106 = vpop.f32.mrf.mxu0
        %v2107 = vadd.f32 0.0, %v2106
        %v2108 = vpop.f32.mrf.mxu0
        %v2109 = vpop.f32.mrf.mxu0
        %v2110 = vadd.f32 0.0, %v2109
        %v2111 = vpop.f32.mrf.mxu0
        %2112 = vmatprep.mubr.bf16.mxu0 %v1823
        %2113 = vmatmul.mubr.bf16.gmra.mxu0 %v1822
        %v2114 = vpop.f32.mrf.mxu0
        %v2115 = vadd.f32 0.0, %v2114
        %v2116 = vpop.f32.mrf.mxu0
        %v2117 = vpop.f32.mrf.mxu0
        %v2118 = vadd.f32 0.0, %v2117
        %v2119 = vpop.f32.mrf.mxu0
        %2120 = vmatprep.mubr.bf16.mxu0 %v1826
        %2121 = vmatmul.mubr.bf16.gmra.mxu0 %v1825
        %v2122 = vpop.f32.mrf.mxu0
        %v2123 = vadd.f32 0.0, %v2122
        %v2124 = vpop.f32.mrf.mxu0
        %v2125 = vpop.f32.mrf.mxu0
        %v2126 = vadd.f32 0.0, %v2125
        %v2127 = vpop.f32.mrf.mxu0
        %2128 = vmatprep.mubr.bf16.mxu0 %v1829
        %2129 = vmatmul.mubr.bf16.gmra.mxu0 %v1828
        %v2130 = vpop.f32.mrf.mxu0
        %v2131 = vadd.f32 0.0, %v2130
        %v2132 = vpop.f32.mrf.mxu0
        %v2133 = vpop.f32.mrf.mxu0
        %v2134 = vadd.f32 0.0, %v2133
        %v2135 = vpop.f32.mrf.mxu0
        %2136 = vdwg.mxu0
        %2137 = vmatprep.subr.bf16.mxu0 0
        %2138 = vmatpush1.bf16.msra.mxu0 %v1999
        %2139 = vmatprep.subr.bf16.mxu0 0
        %2140 = vmatpush1.bf16.msra.mxu0 %v1998
        %2141 = vmatprep.subr.bf16.mxu0 0
        %2142 = vmatpush1.bf16.msra.mxu0 %v1997
        %2143 = vmatprep.subr.bf16.mxu0 0
        %2144 = vmatpush1.bf16.msra.mxu0 %v1996
        %2145 = vmatprep.subr.bf16.mxu0 0
        %2146 = vmatpush1.bf16.msra.mxu0 %v1995
        %2147 = vmatprep.subr.bf16.mxu0 0
        %2148 = vmatpush1.bf16.msra.mxu0 %v1994
        %2149 = vmatprep.subr.bf16.mxu0 0
        %2150 = vmatpush1.bf16.msra.mxu0 %v1993
        %2151 = vmatprep.subr.bf16.mxu0 0
        %2152 = vmatpush1.bf16.msra.mxu0 %v1992
        %2153 = vmatprep.subr.bf16.mxu0 0
        %2154 = vmatpush2.bf16.msra.mxu0 0
        %2155 = vmatprep.subr.bf16.mxu0 0
        %2156 = vmatpush2.bf16.msra.mxu0 0
        %2157 = vmatprep.subr.bf16.mxu0 0
        %2158 = vmatpush2.bf16.msra.mxu0 0
        %2159 = vmatprep.subr.bf16.mxu0 0
        %2160 = vmatpush2.bf16.msra.mxu0 0
        %2161 = vmatprep.subr.bf16.mxu0 0
        %2162 = vmatpush2.bf16.msra.mxu0 0
        %2163 = vmatprep.subr.bf16.mxu0 0
        %2164 = vmatpush2.bf16.msra.mxu0 0
        %2165 = vmatprep.subr.bf16.mxu0 0
        %2166 = vmatpush2.bf16.msra.mxu0 0
        %2167 = vmatprep.subr.bf16.mxu0 0
        %2168 = vmatpush2.bf16.msra.mxu0 0
        %2169 = vmatprep.mubr.bf16.mxu0 0
        %2170 = vmatmul.mubr.bf16.gmra.mxu0 %v1803
        %v2171 = vpop.f32.mrf.mxu0
        %v2172 = vadd.f32 %v2059, %v2171
        %v2173 = vpop.f32.mrf.mxu0
        %v2174 = vpop.f32.mrf.mxu0
        %v2175 = vadd.f32 %v2062, %v2174
        %v2176 = vpop.f32.mrf.mxu0
        %2177 = vmatprep.mubr.bf16.mxu0 0
        %2178 = vmatmul.mubr.bf16.gmra.mxu0 %v1806
        %v2179 = vpop.f32.mrf.mxu0
        %v2180 = vadd.f32 %v2067, %v2179
        %v2181 = vpop.f32.mrf.mxu0
        %v2182 = vpop.f32.mrf.mxu0
        %v2183 = vadd.f32 %v2070, %v2182
        %v2184 = vpop.f32.mrf.mxu0
        %2185 = vmatprep.mubr.bf16.mxu0 0
        %2186 = vmatmul.mubr.bf16.gmra.mxu0 %v1809
        %v2187 = vpop.f32.mrf.mxu0
        %v2188 = vadd.f32 %v2075, %v2187
        %v2189 = vpop.f32.mrf.mxu0
        %v2190 = vpop.f32.mrf.mxu0
        %v2191 = vadd.f32 %v2078, %v2190
        %v2192 = vpop.f32.mrf.mxu0
        %2193 = vmatprep.mubr.bf16.mxu0 0
        %2194 = vmatmul.mubr.bf16.gmra.mxu0 %v1812
        %v2195 = vpop.f32.mrf.mxu0
        %v2196 = vadd.f32 %v2083, %v2195
        %v2197 = vpop.f32.mrf.mxu0
        %v2198 = vpop.f32.mrf.mxu0
        %v2199 = vadd.f32 %v2086, %v2198
        %v2200 = vpop.f32.mrf.mxu0
        %2201 = vmatprep.mubr.bf16.mxu0 0
        %2202 = vmatmul.mubr.bf16.gmra.mxu0 %v1815
        %v2203 = vpop.f32.mrf.mxu0
        %v2204 = vadd.f32 %v2091, %v2203
        %v2205 = vpop.f32.mrf.mxu0
        %v2206 = vpop.f32.mrf.mxu0
        %v2207 = vadd.f32 %v2094, %v2206
        %v2208 = vpop.f32.mrf.mxu0
        %2209 = vmatprep.mubr.bf16.mxu0 0
        %2210 = vmatmul.mubr.bf16.gmra.mxu0 %v1818
        %v2211 = vpop.f32.mrf.mxu0
        %v2212 = vadd.f32 %v2099, %v2211
        %v2213 = vpop.f32.mrf.mxu0
        %v2214 = vpop.f32.mrf.mxu0
        %v2215 = vadd.f32 %v2102, %v2214
        %v2216 = vpop.f32.mrf.mxu0
        %2217 = vmatprep.mubr.bf16.mxu0 0
        %2218 = vmatmul.mubr.bf16.gmra.mxu0 %v1821
        %v2219 = vpop.f32.mrf.mxu0
        %v2220 = vadd.f32 %v2107, %v2219
        %v2221 = vpop.f32.mrf.mxu0
        %v2222 = vpop.f32.mrf.mxu0
        %v2223 = vadd.f32 %v2110, %v2222
        %v2224 = vpop.f32.mrf.mxu0
        %2225 = vmatprep.mubr.bf16.mxu0 0
        %2226 = vmatmul.mubr.bf16.gmra.mxu0 %v1824
        %v2227 = vpop.f32.mrf.mxu0
        %v2228 = vadd.f32 %v2115, %v2227
        %v2229 = vpop.f32.mrf.mxu0
        %v2230 = vpop.f32.mrf.mxu0
        %v2231 = vadd.f32 %v2118, %v2230
        %v2232 = vpop.f32.mrf.mxu0
        %2233 = vmatprep.mubr.bf16.mxu0 0
        %2234 = vmatmul.mubr.bf16.gmra.mxu0 %v1827
        %v2235 = vpop.f32.mrf.mxu0
        %v2236 = vadd.f32 %v2123, %v2235
        %v2237 = vpop.f32.mrf.mxu0
        %v2238 = vpop.f32.mrf.mxu0
        %v2239 = vadd.f32 %v2126, %v2238
        %v2240 = vpop.f32.mrf.mxu0
        %2241 = vmatprep.mubr.bf16.mxu0 0
        %2242 = vmatmul.mubr.bf16.gmra.mxu0 %v1830
        %v2243 = vpop.f32.mrf.mxu0
        %v2244 = vadd.f32 %v2131, %v2243
        %v2245 = vpop.f32.mrf.mxu0
        %v2246 = vpop.f32.mrf.mxu0
        %v2247 = vadd.f32 %v2134, %v2246
        %v2248 = vpop.f32.mrf.mxu0
        %2249 = vdwg.mxu0
        %v2250 = vadd.f32 %v1580, %v2172
        %v2251 = vadd.f32 %v1581, %v2175
        %v2252 = vadd.f32 %v1582, %v2180
        %v2253 = vadd.f32 %v1583, %v2183
        %v2254 = vadd.f32 %v1584, %v2188
        %v2255 = vadd.f32 %v1585, %v2191
        %v2256 = vadd.f32 %v1586, %v2196
        %v2257 = vadd.f32 %v1587, %v2199
        %v2258 = vadd.f32 %v1588, %v2204
        %v2259 = vadd.f32 %v1589, %v2207
        %v2260 = vadd.f32 %v1590, %v2212
        %v2261 = vadd.f32 %v1591, %v2215
        %v2262 = vadd.f32 %v1592, %v2220
        %v2263 = vadd.f32 %v1593, %v2223
        %v2264 = vadd.f32 %v1594, %v2228
        %v2265 = vadd.f32 %v1595, %v2231
        %v2266 = vadd.f32 %v1596, %v2236
        %v2267 = vadd.f32 %v1597, %v2239
        %v2268 = vadd.f32 %v1598, %v2244
        %v2269 = vadd.f32 %v1599, %v2247
        %v2270 = vmax.f32 %v2250, 0.0
        %v2271 = vmax.f32 %v2251, 0.0
        %v2272 = vmax.f32 %v2252, 0.0
        %v2273 = vmax.f32 %v2253, 0.0
        %v2274 = vmax.f32 %v2254, 0.0
        %v2275 = vmax.f32 %v2255, 0.0
        %v2276 = vmax.f32 %v2256, 0.0
        %v2277 = vmax.f32 %v2257, 0.0
        %v2278 = vmax.f32 %v2258, 0.0
        %v2279 = vmax.f32 %v2259, 0.0
        %v2280 = vmax.f32 %v2260, 0.0
        %v2281 = vmax.f32 %v2261, 0.0
        %v2282 = vmax.f32 %v2262, 0.0
        %v2283 = vmax.f32 %v2263, 0.0
        %v2284 = vmax.f32 %v2264, 0.0
        %v2285 = vmax.f32 %v2265, 0.0
        %v2286 = vmax.f32 %v2266, 0.0
        %v2287 = vmax.f32 %v2267, 0.0
        %v2288 = vmax.f32 %v2268, 0.0
        %v2289 = vmax.f32 %v2269, 0.0
        %2290 = vst [vmem:[#allocation2 + $0x1] sm:$0xff] %v2270
        %2291 = vst [vmem:[#allocation2 + $0x9] sm:$0xff] %v2271
        %2292 = vst [vmem:[#allocation2 + $0x19] sm:$0xff] %v2272
        %2293 = vst [vmem:[#allocation2 + $0x21] sm:$0xff] %v2273
        %2294 = vst [vmem:[#allocation2 + $0x31] sm:$0xff] %v2274
        %2295 = vst [vmem:[#allocation2 + $0x39] sm:$0xff] %v2275
        %2296 = vst [vmem:[#allocation2 + $0x49] sm:$0xff] %v2276
        %2297 = vst [vmem:[#allocation2 + $0x51] sm:$0xff] %v2277
        %2298 = vst [vmem:[#allocation2 + $0x61] sm:$0xff] %v2278
        %2299 = vst [vmem:[#allocation2 + $0x69] sm:$0xff] %v2279
        %2300 = vst [vmem:[#allocation2 + $0x79] sm:$0xff] %v2280
        %2301 = vst [vmem:[#allocation2 + $0x81] sm:$0xff] %v2281
        %2302 = vst [vmem:[#allocation2 + $0x91] sm:$0xff] %v2282
        %2303 = vst [vmem:[#allocation2 + $0x99] sm:$0xff] %v2283
        %2304 = vst [vmem:[#allocation2 + $0xa9] sm:$0xff] %v2284
        %2305 = vst [vmem:[#allocation2 + $0xb1] sm:$0xff] %v2285
        %2306 = vst [vmem:[#allocation2 + $0xc1] sm:$0xff] %v2286
        %2307 = vst [vmem:[#allocation2 + $0xc9] sm:$0xff] %v2287
        %2308 = vst [vmem:[#allocation2 + $0xd9] sm:$0xff] %v2288
        %2309 = vst [vmem:[#allocation2 + $0xe1] sm:$0xff] %v2289
        %2310 = vst [vmem:[#allocation2] sm:$0x1] 0.0
        %2311 = vst [vmem:[#allocation2 + $0x18] sm:$0x1] 0.0
        %2312 = vst [vmem:[#allocation2 + $0x30] sm:$0x1] 0.0
        %2313 = vst [vmem:[#allocation2 + $0x48] sm:$0x1] 0.0
        %2314 = vst [vmem:[#allocation2 + $0x60] sm:$0x1] 0.0
        %2315 = vst [vmem:[#allocation2 + $0x78] sm:$0x1] 0.0
        %2316 = vst [vmem:[#allocation2 + $0x90] sm:$0x1] 0.0
        %2317 = vst [vmem:[#allocation2 + $0xa8] sm:$0x1] 0.0
        %2318 = vst [vmem:[#allocation2 + $0xc0] sm:$0x1] 0.0
        %2319 = vst [vmem:[#allocation2 + $0xd8] sm:$0x1] 0.0
        %2320 = vst [vmem:[#allocation2 + $0x11] sm:$0x1] 0.0
        %2321 = vst [vmem:[#allocation2 + $0x29] sm:$0x1] 0.0
        %2322 = vst [vmem:[#allocation2 + $0x41] sm:$0x1] 0.0
        %2323 = vst [vmem:[#allocation2 + $0x59] sm:$0x1] 0.0
        %2324 = vst [vmem:[#allocation2 + $0x71] sm:$0x1] 0.0
        %2325 = vst [vmem:[#allocation2 + $0x89] sm:$0x1] 0.0
        %2326 = vst [vmem:[#allocation2 + $0xa1] sm:$0x1] 0.0
        %2327 = vst [vmem:[#allocation2 + $0xb9] sm:$0x1] 0.0
        %2328 = vst [vmem:[#allocation2 + $0xd1] sm:$0x1] 0.0
        %2329 = vst [vmem:[#allocation2 + $0xe9] sm:$0x1] 0.0
        %p2330 = scmp.eq.s32.totalorder %s24, 0
        // Predicated region
        $region41: #{tpu_custom_call.1} parent=39 // pred_check
          %p2331 = pneg %p2330
        $region42: #{tpu_custom_call.1} parent=39 // pred_check_branch
          %2333 = sbr.rel (%p2331) target = $region44
        $region43: #{tpu_custom_call.1} parent=39 // pred_region
          %2334 = vst [vmem:[#allocation2] sm:$0xff] 0.0
          %2335 = vst [vmem:[#allocation2 + $0x8] sm:$0xff] 0.0
          %2336 = vst [vmem:[#allocation2 + $0x10] sm:$0x3] 0.0
        $region44: #{tpu_custom_call.1} parent=39 // pred_fallthru
          _
        %p2337 = scmp.eq.s32.totalorder %s24, 1
        // Predicated region
        $region45: #{tpu_custom_call.1} parent=39 // pred_check
          %p2338 = pneg %p2337
        $region46: #{tpu_custom_call.1} parent=39 // pred_check_branch
          %2340 = sbr.rel (%p2338) target = $region48
        $region47: #{tpu_custom_call.1} parent=39 // pred_region
          %s2341 = scalar_lea.vmem [#allocation2], 216
          %2342 = vst [vmem:[%s2341] sm:$0xff] 0.0
          %2343 = vst [vmem:[%s2341 + $0x8] sm:$0xff] 0.0
          %2344 = vst [vmem:[%s2341 + $0x10] sm:$0x3] 0.0
        $region48: #{tpu_custom_call.1} parent=39 // pred_fallthru
          _
        %v2345 = vld [vmem:[%s4] sm:$0x1]
        %v2347 = vlaneseq
        %v2348 = vshrl.u32 %v2347, 7
        %v2349 = vsub.s32 0, %v2348
        %v2350 = vrot.slane %v2345, %v2349
        %v2352 = vld [vmem:[#allocation2] sm:$0xff]
        %v2353 = vld [vmem:[#allocation2 + $0x8] sm:$0xff]
        %v2354 = vld [vmem:[#allocation2 + $0x10] sm:$0x3]
        %v2355 = vld [vmem:[#allocation2 + $0x18] sm:$0xff]
        %v2356 = vld [vmem:[#allocation2 + $0x20] sm:$0xff]
        %v2357 = vld [vmem:[#allocation2 + $0x28] sm:$0x3]
        %v2358 = vld [vmem:[#allocation2 + $0x30] sm:$0xff]
        %v2359 = vld [vmem:[#allocation2 + $0x38] sm:$0xff]
        %v2360 = vld [vmem:[#allocation2 + $0x40] sm:$0x3]
        %v2361 = vld [vmem:[#allocation2 + $0x48] sm:$0xff]
        %v2362 = vld [vmem:[#allocation2 + $0x50] sm:$0xff]
        %v2363 = vld [vmem:[#allocation2 + $0x58] sm:$0x3]
        %v2364 = vld [vmem:[#allocation2 + $0x60] sm:$0xff]
        %v2365 = vld [vmem:[#allocation2 + $0x68] sm:$0xff]
        %v2366 = vld [vmem:[#allocation2 + $0x70] sm:$0x3]
        %v2367 = vld [vmem:[#allocation2 + $0x78] sm:$0xff]
        %v2368 = vld [vmem:[#allocation2 + $0x80] sm:$0xff]
        %v2369 = vld [vmem:[#allocation2 + $0x88] sm:$0x3]
        %v2370 = vld [vmem:[#allocation2 + $0x90] sm:$0xff]
        %v2371 = vld [vmem:[#allocation2 + $0x98] sm:$0xff]
        %v2372 = vld [vmem:[#allocation2 + $0xa0] sm:$0x3]
        %v2373 = vld [vmem:[#allocation2 + $0xa8] sm:$0xff]
        %v2374 = vld [vmem:[#allocation2 + $0xb0] sm:$0xff]
        %v2375 = vld [vmem:[#allocation2 + $0xb8] sm:$0x3]
        %v2400 = vrot.slane %v2352, 1
        %v2401 = vrot.slane %v2353, 1
        %v2402 = vsel %vm320, %v2400, %v2401
        %v2403 = vrot.slane %v2354, 1
        %v2404 = vsel %vm320, %v2401, %v2403
        %v2405 = vrot.slane %v2355, 1
        %v2406 = vrot.slane %v2356, 1
        %v2407 = vsel %vm320, %v2405, %v2406
        %v2408 = vrot.slane %v2357, 1
        %v2409 = vsel %vm320, %v2406, %v2408
        %v2410 = vrot.slane %v2358, 1
        %v2411 = vrot.slane %v2359, 1
        %v2412 = vsel %vm320, %v2410, %v2411
        %v2413 = vrot.slane %v2360, 1
        %v2414 = vsel %vm320, %v2411, %v2413
        %v2415 = vrot.slane %v2361, 1
        %v2416 = vrot.slane %v2362, 1
        %v2417 = vsel %vm320, %v2415, %v2416
        %v2418 = vrot.slane %v2363, 1
        %v2419 = vsel %vm320, %v2416, %v2418
        %v2420 = vrot.slane %v2364, 1
        %v2421 = vrot.slane %v2365, 1
        %v2422 = vsel %vm320, %v2420, %v2421
        %v2423 = vrot.slane %v2366, 1
        %v2424 = vsel %vm320, %v2421, %v2423
        %v2425 = vrot.slane %v2367, 1
        %v2426 = vrot.slane %v2368, 1
        %v2427 = vsel %vm320, %v2425, %v2426
        %v2428 = vrot.slane %v2369, 1
        %v2429 = vsel %vm320, %v2426, %v2428
        %v2430 = vrot.slane %v2370, 1
        %v2431 = vrot.slane %v2371, 1
        %v2432 = vsel %vm320, %v2430, %v2431
        %v2433 = vrot.slane %v2372, 1
        %v2434 = vsel %vm320, %v2431, %v2433
        %v2435 = vrot.slane %v2373, 1
        %v2436 = vrot.slane %v2374, 1
        %v2437 = vsel %vm320, %v2435, %v2436
        %v2438 = vrot.slane %v2375, 1
        %v2439 = vsel %vm320, %v2436, %v2438
        %v2456 = vrot.slane %v2352, 2
        %v2457 = vrot.slane %v2353, 2
        %v2458 = vsel %vm391, %v2456, %v2457
        %v2459 = vrot.slane %v2354, 2
        %v2460 = vsel %vm391, %v2457, %v2459
        %v2461 = vrot.slane %v2355, 2
        %v2462 = vrot.slane %v2356, 2
        %v2463 = vsel %vm391, %v2461, %v2462
        %v2464 = vrot.slane %v2357, 2
        %v2465 = vsel %vm391, %v2462, %v2464
        %v2466 = vrot.slane %v2358, 2
        %v2467 = vrot.slane %v2359, 2
        %v2468 = vsel %vm391, %v2466, %v2467
        %v2469 = vrot.slane %v2360, 2
        %v2470 = vsel %vm391, %v2467, %v2469
        %v2471 = vrot.slane %v2361, 2
        %v2472 = vrot.slane %v2362, 2
        %v2473 = vsel %vm391, %v2471, %v2472
        %v2474 = vrot.slane %v2363, 2
        %v2475 = vsel %vm391, %v2472, %v2474
        %v2476 = vrot.slane %v2364, 2
        %v2477 = vrot.slane %v2365, 2
        %v2478 = vsel %vm391, %v2476, %v2477
        %v2479 = vrot.slane %v2366, 2
        %v2480 = vsel %vm391, %v2477, %v2479
        %v2481 = vrot.slane %v2367, 2
        %v2482 = vrot.slane %v2368, 2
        %v2483 = vsel %vm391, %v2481, %v2482
        %v2484 = vrot.slane %v2369, 2
        %v2485 = vsel %vm391, %v2482, %v2484
        %v2486 = vrot.slane %v2370, 2
        %v2487 = vrot.slane %v2371, 2
        %v2488 = vsel %vm391, %v2486, %v2487
        %v2489 = vrot.slane %v2372, 2
        %v2490 = vsel %vm391, %v2487, %v2489
        %v2491 = vrot.slane %v2373, 2
        %v2492 = vrot.slane %v2374, 2
        %v2493 = vsel %vm391, %v2491, %v2492
        %v2494 = vrot.slane %v2375, 2
        %v2495 = vsel %vm391, %v2492, %v2494
        %v2512 = vpack.c.bf16 %v2353, %v2352
        %v2513 = vpack.c.bf16 %v2404, %v2402
        %v2514 = vpack.c.bf16 %v2460, %v2458
        %v2515 = vpack.c.bf16 %v2356, %v2355
        %v2516 = vpack.c.bf16 %v2409, %v2407
        %v2517 = vpack.c.bf16 %v2465, %v2463
        %v2518 = vpack.c.bf16 %v2359, %v2358
        %v2519 = vpack.c.bf16 %v2414, %v2412
        %v2520 = vpack.c.bf16 %v2470, %v2468
        %v2521 = vpack.c.bf16 %v2362, %v2361
        %v2522 = vpack.c.bf16 %v2419, %v2417
        %v2523 = vpack.c.bf16 %v2475, %v2473
        %v2524 = vpack.c.bf16 %v2365, %v2364
        %v2525 = vpack.c.bf16 %v2424, %v2422
        %v2526 = vpack.c.bf16 %v2480, %v2478
        %v2527 = vpack.c.bf16 %v2368, %v2367
        %v2528 = vpack.c.bf16 %v2429, %v2427
        %v2529 = vpack.c.bf16 %v2485, %v2483
        %v2530 = vpack.c.bf16 %v2371, %v2370
        %v2531 = vpack.c.bf16 %v2434, %v2432
        %v2532 = vpack.c.bf16 %v2490, %v2488
        %v2533 = vpack.c.bf16 %v2374, %v2373
        %v2534 = vpack.c.bf16 %v2439, %v2437
        %v2535 = vpack.c.bf16 %v2495, %v2493
        %v2536 = vld [vmem:[%s3] sm:$0xf]
        %v2537 = vld [vmem:[%s3 + $0x4] sm:$0xf]
        %v2538 = vld [vmem:[%s3 + $0x8] sm:$0xf]
        %v2539 = vld [vmem:[%s3 + $0xc] sm:$0xf]
        %v2540 = vld [vmem:[%s3 + $0x10] sm:$0xf]
        %v2541 = vld [vmem:[%s3 + $0x14] sm:$0xf]
        %v2542 = vld [vmem:[%s3 + $0x18] sm:$0xf]
        %v2543 = vld [vmem:[%s3 + $0x1c] sm:$0xf]
        %v2544 = vld [vmem:[%s3 + $0x20] sm:$0xf]
        %v2545 = vld [vmem:[%s3 + $0x24] sm:$0xf]
        %v2546 = vld [vmem:[%s3 + $0x28] sm:$0xf]
        %v2547 = vld [vmem:[%s3 + $0x2c] sm:$0xf]
        %v2548 = vld [vmem:[%s3 + $0x30] sm:$0xf]
        %v2549 = vld [vmem:[%s3 + $0x34] sm:$0xf]
        %v2550 = vld [vmem:[%s3 + $0x38] sm:$0xf]
        %v2551 = vld [vmem:[%s3 + $0x3c] sm:$0xf]
        %v2552 = vld [vmem:[%s3 + $0x40] sm:$0xf]
        %v2553 = vld [vmem:[%s3 + $0x44] sm:$0xf]
        %v2554 = vld [vmem:[%s3 + $0x48] sm:$0xf]
        %v2555 = vld [vmem:[%s3 + $0x4c] sm:$0xf]
        %v2556 = vld [vmem:[%s3 + $0x50] sm:$0xf]
        %v2557 = vld [vmem:[%s3 + $0x54] sm:$0xf]
        %v2558 = vld [vmem:[%s3 + $0x58] sm:$0xf]
        %v2559 = vld [vmem:[%s3 + $0x5c] sm:$0xf]
        %v2560 = vld [vmem:[%s3 + $0x60] sm:$0xf]
        %v2561 = vld [vmem:[%s3 + $0x64] sm:$0xf]
        %v2562 = vld [vmem:[%s3 + $0x68] sm:$0xf]
        %v2563 = vld [vmem:[%s3 + $0x6c] sm:$0xf]
        %v2564 = vld [vmem:[%s3 + $0x70] sm:$0xf]
        %v2565 = vld [vmem:[%s3 + $0x74] sm:$0xf]
        %v2566 = vld [vmem:[%s3 + $0x78] sm:$0xf]
        %v2567 = vld [vmem:[%s3 + $0x7c] sm:$0xf]
        %v2568 = vld [vmem:[%s3 + $0x80] sm:$0xf]
        %v2569 = vld [vmem:[%s3 + $0x84] sm:$0xf]
        %v2570 = vld [vmem:[%s3 + $0x88] sm:$0xf]
        %v2571 = vld [vmem:[%s3 + $0x8c] sm:$0xf]
        %v2572 = vld [vmem:[%s3 + $0x90] sm:$0xf]
        %v2573 = vld [vmem:[%s3 + $0x94] sm:$0xf]
        %v2574 = vld [vmem:[%s3 + $0x98] sm:$0xf]
        %v2575 = vld [vmem:[%s3 + $0x9c] sm:$0xf]
        %v2576 = vld [vmem:[%s3 + $0xa0] sm:$0xf]
        %v2577 = vld [vmem:[%s3 + $0xa4] sm:$0xf]
        %v2578 = vld [vmem:[%s3 + $0xa8] sm:$0xf]
        %v2579 = vld [vmem:[%s3 + $0xac] sm:$0xf]
        %v2580 = vld [vmem:[%s3 + $0xb0] sm:$0xf]
        %v2581 = vld [vmem:[%s3 + $0xb4] sm:$0xf]
        %v2582 = vld [vmem:[%s3 + $0xb8] sm:$0xf]
        %v2583 = vld [vmem:[%s3 + $0xbc] sm:$0xf]
        %v2632 = vunpack.c.l.b16 %v2536
        %v2633 = vunpack.c.l.b16 %v2537
        %v2634 = vunpack.c.l.b16 %v2538
        %v2635 = vunpack.c.l.b16 %v2539
        %v2636 = vunpack.c.l.b16 %v2540
        %v2637 = vunpack.c.l.b16 %v2541
        %v2638 = vunpack.c.l.b16 %v2542
        %v2639 = vunpack.c.l.b16 %v2543
        %v2640 = vunpack.c.l.b16 %v2544
        %v2641 = vunpack.c.l.b16 %v2545
        %v2642 = vunpack.c.l.b16 %v2546
        %v2643 = vunpack.c.l.b16 %v2547
        %v2644 = vunpack.c.l.b16 %v2548
        %v2645 = vunpack.c.l.b16 %v2549
        %v2646 = vunpack.c.l.b16 %v2550
        %v2647 = vunpack.c.l.b16 %v2551
        %v2648 = vunpack.c.l.b16 %v2552
        %v2649 = vunpack.c.l.b16 %v2553
        %v2650 = vunpack.c.l.b16 %v2554
        %v2651 = vunpack.c.l.b16 %v2555
        %v2652 = vunpack.c.l.b16 %v2556
        %v2653 = vunpack.c.l.b16 %v2557
        %v2654 = vunpack.c.l.b16 %v2558
        %v2655 = vunpack.c.l.b16 %v2559
        %v2656 = vunpack.c.l.b16 %v2560
        %v2657 = vunpack.c.l.b16 %v2561
        %v2658 = vunpack.c.l.b16 %v2562
        %v2659 = vunpack.c.l.b16 %v2563
        %v2660 = vunpack.c.l.b16 %v2564
        %v2661 = vunpack.c.l.b16 %v2565
        %v2662 = vunpack.c.l.b16 %v2566
        %v2663 = vunpack.c.l.b16 %v2567
        %v2664 = vunpack.c.l.b16 %v2568
        %v2665 = vunpack.c.l.b16 %v2569
        %v2666 = vunpack.c.l.b16 %v2570
        %v2667 = vunpack.c.l.b16 %v2571
        %v2668 = vunpack.c.l.b16 %v2572
        %v2669 = vunpack.c.l.b16 %v2573
        %v2670 = vunpack.c.l.b16 %v2574
        %v2671 = vunpack.c.l.b16 %v2575
        %v2672 = vunpack.c.l.b16 %v2576
        %v2673 = vunpack.c.l.b16 %v2577
        %v2674 = vunpack.c.l.b16 %v2578
        %v2675 = vunpack.c.l.b16 %v2579
        %v2676 = vunpack.c.l.b16 %v2580
        %v2677 = vunpack.c.l.b16 %v2581
        %v2678 = vunpack.c.l.b16 %v2582
        %v2679 = vunpack.c.l.b16 %v2583
        %v2680 = vpack.c.b16 %v2633, %v2632
        %v2681 = vpack.c.b16 %v2635, %v2634
        %v2682 = vpack.c.b16 %v2637, %v2636
        %v2683 = vpack.c.b16 %v2639, %v2638
        %v2684 = vpack.c.b16 %v2641, %v2640
        %v2685 = vpack.c.b16 %v2643, %v2642
        %v2686 = vpack.c.b16 %v2645, %v2644
        %v2687 = vpack.c.b16 %v2647, %v2646
        %v2688 = vpack.c.b16 %v2649, %v2648
        %v2689 = vpack.c.b16 %v2651, %v2650
        %v2690 = vpack.c.b16 %v2653, %v2652
        %v2691 = vpack.c.b16 %v2655, %v2654
        %v2692 = vpack.c.b16 %v2657, %v2656
        %v2693 = vpack.c.b16 %v2659, %v2658
        %v2694 = vpack.c.b16 %v2661, %v2660
        %v2695 = vpack.c.b16 %v2663, %v2662
        %v2696 = vpack.c.b16 %v2665, %v2664
        %v2697 = vpack.c.b16 %v2667, %v2666
        %v2698 = vpack.c.b16 %v2669, %v2668
        %v2699 = vpack.c.b16 %v2671, %v2670
        %v2700 = vpack.c.b16 %v2673, %v2672
        %v2701 = vpack.c.b16 %v2675, %v2674
        %v2702 = vpack.c.b16 %v2677, %v2676
        %v2703 = vpack.c.b16 %v2679, %v2678
        %2728 = vmatprep.subr.bf16.mxu0 0
        %2729 = vmatpush1.bf16.msra.mxu0 %v2687
        %2730 = vmatprep.subr.bf16.mxu0 0
        %2731 = vmatpush1.bf16.msra.mxu0 %v2686
        %2732 = vmatprep.subr.bf16.mxu0 0
        %2733 = vmatpush1.bf16.msra.mxu0 %v2685
        %2734 = vmatprep.subr.bf16.mxu0 0
        %2735 = vmatpush1.bf16.msra.mxu0 %v2684
        %2736 = vmatprep.subr.bf16.mxu0 0
        %2737 = vmatpush1.bf16.msra.mxu0 %v2683
        %2738 = vmatprep.subr.bf16.mxu0 0
        %2739 = vmatpush1.bf16.msra.mxu0 %v2682
        %2740 = vmatprep.subr.bf16.mxu0 0
        %2741 = vmatpush1.bf16.msra.mxu0 %v2681
        %2742 = vmatprep.subr.bf16.mxu0 0
        %2743 = vmatpush1.bf16.msra.mxu0 %v2680
        %2744 = vmatprep.subr.bf16.mxu0 0
        %2745 = vmatpush2.bf16.msra.mxu0 %v2695
        %2746 = vmatprep.subr.bf16.mxu0 0
        %2747 = vmatpush2.bf16.msra.mxu0 %v2694
        %2748 = vmatprep.subr.bf16.mxu0 0
        %2749 = vmatpush2.bf16.msra.mxu0 %v2693
        %2750 = vmatprep.subr.bf16.mxu0 0
        %2751 = vmatpush2.bf16.msra.mxu0 %v2692
        %2752 = vmatprep.subr.bf16.mxu0 0
        %2753 = vmatpush2.bf16.msra.mxu0 %v2691
        %2754 = vmatprep.subr.bf16.mxu0 0
        %2755 = vmatpush2.bf16.msra.mxu0 %v2690
        %2756 = vmatprep.subr.bf16.mxu0 0
        %2757 = vmatpush2.bf16.msra.mxu0 %v2689
        %2758 = vmatprep.subr.bf16.mxu0 0
        %2759 = vmatpush2.bf16.msra.mxu0 %v2688
        %2760 = vmatprep.mubr.bf16.mxu0 %v2513
        %2761 = vmatmul.mubr.bf16.gmra.mxu0 %v2512
        %v2762 = vpop.f32.mrf.mxu0
        %v2763 = vadd.f32 0.0, %v2762
        %v2764 = vpop.f32.mrf.mxu0
        %v2765 = vpop.f32.mrf.mxu0
        %v2766 = vadd.f32 0.0, %v2765
        %v2767 = vpop.f32.mrf.mxu0
        %2768 = vmatprep.mubr.bf16.mxu0 %v2516
        %2769 = vmatmul.mubr.bf16.gmra.mxu0 %v2515
        %v2770 = vpop.f32.mrf.mxu0
        %v2771 = vadd.f32 0.0, %v2770
        %v2772 = vpop.f32.mrf.mxu0
        %v2773 = vpop.f32.mrf.mxu0
        %v2774 = vadd.f32 0.0, %v2773
        %v2775 = vpop.f32.mrf.mxu0
        %2776 = vmatprep.mubr.bf16.mxu0 %v2519
        %2777 = vmatmul.mubr.bf16.gmra.mxu0 %v2518
        %v2778 = vpop.f32.mrf.mxu0
        %v2779 = vadd.f32 0.0, %v2778
        %v2780 = vpop.f32.mrf.mxu0
        %v2781 = vpop.f32.mrf.mxu0
        %v2782 = vadd.f32 0.0, %v2781
        %v2783 = vpop.f32.mrf.mxu0
        %2784 = vmatprep.mubr.bf16.mxu0 %v2522
        %2785 = vmatmul.mubr.bf16.gmra.mxu0 %v2521
        %v2786 = vpop.f32.mrf.mxu0
        %v2787 = vadd.f32 0.0, %v2786
        %v2788 = vpop.f32.mrf.mxu0
        %v2789 = vpop.f32.mrf.mxu0
        %v2790 = vadd.f32 0.0, %v2789
        %v2791 = vpop.f32.mrf.mxu0
        %2792 = vmatprep.mubr.bf16.mxu0 %v2525
        %2793 = vmatmul.mubr.bf16.gmra.mxu0 %v2524
        %v2794 = vpop.f32.mrf.mxu0
        %v2795 = vadd.f32 0.0, %v2794
        %v2796 = vpop.f32.mrf.mxu0
        %v2797 = vpop.f32.mrf.mxu0
        %v2798 = vadd.f32 0.0, %v2797
        %v2799 = vpop.f32.mrf.mxu0
        %2800 = vmatprep.mubr.bf16.mxu0 %v2528
        %2801 = vmatmul.mubr.bf16.gmra.mxu0 %v2527
        %v2802 = vpop.f32.mrf.mxu0
        %v2803 = vadd.f32 0.0, %v2802
        %v2804 = vpop.f32.mrf.mxu0
        %v2805 = vpop.f32.mrf.mxu0
        %v2806 = vadd.f32 0.0, %v2805
        %v2807 = vpop.f32.mrf.mxu0
        %2808 = vmatprep.mubr.bf16.mxu0 %v2531
        %2809 = vmatmul.mubr.bf16.gmra.mxu0 %v2530
        %v2810 = vpop.f32.mrf.mxu0
        %v2811 = vadd.f32 0.0, %v2810
        %v2812 = vpop.f32.mrf.mxu0
        %v2813 = vpop.f32.mrf.mxu0
        %v2814 = vadd.f32 0.0, %v2813
        %v2815 = vpop.f32.mrf.mxu0
        %2816 = vmatprep.mubr.bf16.mxu0 %v2534
        %2817 = vmatmul.mubr.bf16.gmra.mxu0 %v2533
        %v2818 = vpop.f32.mrf.mxu0
        %v2819 = vadd.f32 0.0, %v2818
        %v2820 = vpop.f32.mrf.mxu0
        %v2821 = vpop.f32.mrf.mxu0
        %v2822 = vadd.f32 0.0, %v2821
        %v2823 = vpop.f32.mrf.mxu0
        %2824 = vdwg.mxu0
        %2825 = vmatprep.subr.bf16.mxu0 0
        %2826 = vmatpush1.bf16.msra.mxu0 %v2703
        %2827 = vmatprep.subr.bf16.mxu0 0
        %2828 = vmatpush1.bf16.msra.mxu0 %v2702
        %2829 = vmatprep.subr.bf16.mxu0 0
        %2830 = vmatpush1.bf16.msra.mxu0 %v2701
        %2831 = vmatprep.subr.bf16.mxu0 0
        %2832 = vmatpush1.bf16.msra.mxu0 %v2700
        %2833 = vmatprep.subr.bf16.mxu0 0
        %2834 = vmatpush1.bf16.msra.mxu0 %v2699
        %2835 = vmatprep.subr.bf16.mxu0 0
        %2836 = vmatpush1.bf16.msra.mxu0 %v2698
        %2837 = vmatprep.subr.bf16.mxu0 0
        %2838 = vmatpush1.bf16.msra.mxu0 %v2697
        %2839 = vmatprep.subr.bf16.mxu0 0
        %2840 = vmatpush1.bf16.msra.mxu0 %v2696
        %2841 = vmatprep.subr.bf16.mxu0 0
        %2842 = vmatpush2.bf16.msra.mxu0 0
        %2843 = vmatprep.subr.bf16.mxu0 0
        %2844 = vmatpush2.bf16.msra.mxu0 0
        %2845 = vmatprep.subr.bf16.mxu0 0
        %2846 = vmatpush2.bf16.msra.mxu0 0
        %2847 = vmatprep.subr.bf16.mxu0 0
        %2848 = vmatpush2.bf16.msra.mxu0 0
        %2849 = vmatprep.subr.bf16.mxu0 0
        %2850 = vmatpush2.bf16.msra.mxu0 0
        %2851 = vmatprep.subr.bf16.mxu0 0
        %2852 = vmatpush2.bf16.msra.mxu0 0
        %2853 = vmatprep.subr.bf16.mxu0 0
        %2854 = vmatpush2.bf16.msra.mxu0 0
        %2855 = vmatprep.subr.bf16.mxu0 0
        %2856 = vmatpush2.bf16.msra.mxu0 0
        %2857 = vmatprep.mubr.bf16.mxu0 0
        %2858 = vmatmul.mubr.bf16.gmra.mxu0 %v2514
        %v2859 = vpop.f32.mrf.mxu0
        %v2860 = vadd.f32 %v2763, %v2859
        %v2861 = vpop.f32.mrf.mxu0
        %v2862 = vpop.f32.mrf.mxu0
        %v2863 = vadd.f32 %v2766, %v2862
        %v2864 = vpop.f32.mrf.mxu0
        %2865 = vmatprep.mubr.bf16.mxu0 0
        %2866 = vmatmul.mubr.bf16.gmra.mxu0 %v2517
        %v2867 = vpop.f32.mrf.mxu0
        %v2868 = vadd.f32 %v2771, %v2867
        %v2869 = vpop.f32.mrf.mxu0
        %v2870 = vpop.f32.mrf.mxu0
        %v2871 = vadd.f32 %v2774, %v2870
        %v2872 = vpop.f32.mrf.mxu0
        %2873 = vmatprep.mubr.bf16.mxu0 0
        %2874 = vmatmul.mubr.bf16.gmra.mxu0 %v2520
        %v2875 = vpop.f32.mrf.mxu0
        %v2876 = vadd.f32 %v2779, %v2875
        %v2877 = vpop.f32.mrf.mxu0
        %v2878 = vpop.f32.mrf.mxu0
        %v2879 = vadd.f32 %v2782, %v2878
        %v2880 = vpop.f32.mrf.mxu0
        %2881 = vmatprep.mubr.bf16.mxu0 0
        %2882 = vmatmul.mubr.bf16.gmra.mxu0 %v2523
        %v2883 = vpop.f32.mrf.mxu0
        %v2884 = vadd.f32 %v2787, %v2883
        %v2885 = vpop.f32.mrf.mxu0
        %v2886 = vpop.f32.mrf.mxu0
        %v2887 = vadd.f32 %v2790, %v2886
        %v2888 = vpop.f32.mrf.mxu0
        %2889 = vmatprep.mubr.bf16.mxu0 0
        %2890 = vmatmul.mubr.bf16.gmra.mxu0 %v2526
        %v2891 = vpop.f32.mrf.mxu0
        %v2892 = vadd.f32 %v2795, %v2891
        %v2893 = vpop.f32.mrf.mxu0
        %v2894 = vpop.f32.mrf.mxu0
        %v2895 = vadd.f32 %v2798, %v2894
        %v2896 = vpop.f32.mrf.mxu0
        %2897 = vmatprep.mubr.bf16.mxu0 0
        %2898 = vmatmul.mubr.bf16.gmra.mxu0 %v2529
        %v2899 = vpop.f32.mrf.mxu0
        %v2900 = vadd.f32 %v2803, %v2899
        %v2901 = vpop.f32.mrf.mxu0
        %v2902 = vpop.f32.mrf.mxu0
        %v2903 = vadd.f32 %v2806, %v2902
        %v2904 = vpop.f32.mrf.mxu0
        %2905 = vmatprep.mubr.bf16.mxu0 0
        %2906 = vmatmul.mubr.bf16.gmra.mxu0 %v2532
        %v2907 = vpop.f32.mrf.mxu0
        %v2908 = vadd.f32 %v2811, %v2907
        %v2909 = vpop.f32.mrf.mxu0
        %v2910 = vpop.f32.mrf.mxu0
        %v2911 = vadd.f32 %v2814, %v2910
        %v2912 = vpop.f32.mrf.mxu0
        %2913 = vmatprep.mubr.bf16.mxu0 0
        %2914 = vmatmul.mubr.bf16.gmra.mxu0 %v2535
        %v2915 = vpop.f32.mrf.mxu0
        %v2916 = vadd.f32 %v2819, %v2915
        %v2917 = vpop.f32.mrf.mxu0
        %v2918 = vpop.f32.mrf.mxu0
        %v2919 = vadd.f32 %v2822, %v2918
        %v2920 = vpop.f32.mrf.mxu0
        %2921 = vdwg.mxu0
        %v2922 = vadd.f32 %v2350, %v2860
        %v2923 = vadd.f32 %v2350, %v2863
        %v2924 = vadd.f32 %v2350, %v2868
        %v2925 = vadd.f32 %v2350, %v2871
        %v2926 = vadd.f32 %v2350, %v2876
        %v2927 = vadd.f32 %v2350, %v2879
        %v2928 = vadd.f32 %v2350, %v2884
        %v2929 = vadd.f32 %v2350, %v2887
        %v2930 = vadd.f32 %v2350, %v2892
        %v2931 = vadd.f32 %v2350, %v2895
        %v2932 = vadd.f32 %v2350, %v2900
        %v2933 = vadd.f32 %v2350, %v2903
        %v2934 = vadd.f32 %v2350, %v2908
        %v2935 = vadd.f32 %v2350, %v2911
        %v2936 = vadd.f32 %v2350, %v2916
        %v2937 = vadd.f32 %v2350, %v2919
        %s2938 = scalar_lea.vmem [#allocation2], 24
        %v2939 = vld [vmem:[%s2938] sm:$0xff]
        %v2940 = vld [vmem:[%s2938 + $0x8] sm:$0xff]
        %v2941 = vld [vmem:[%s2938 + $0x10] sm:$0x3]
        %v2942 = vld [vmem:[%s2938 + $0x18] sm:$0xff]
        %v2943 = vld [vmem:[%s2938 + $0x20] sm:$0xff]
        %v2944 = vld [vmem:[%s2938 + $0x28] sm:$0x3]
        %v2945 = vld [vmem:[%s2938 + $0x30] sm:$0xff]
        %v2946 = vld [vmem:[%s2938 + $0x38] sm:$0xff]
        %v2947 = vld [vmem:[%s2938 + $0x40] sm:$0x3]
        %v2948 = vld [vmem:[%s2938 + $0x48] sm:$0xff]
        %v2949 = vld [vmem:[%s2938 + $0x50] sm:$0xff]
        %v2950 = vld [vmem:[%s2938 + $0x58] sm:$0x3]
        %v2951 = vld [vmem:[%s2938 + $0x60] sm:$0xff]
        %v2952 = vld [vmem:[%s2938 + $0x68] sm:$0xff]
        %v2953 = vld [vmem:[%s2938 + $0x70] sm:$0x3]
        %v2954 = vld [vmem:[%s2938 + $0x78] sm:$0xff]
        %v2955 = vld [vmem:[%s2938 + $0x80] sm:$0xff]
        %v2956 = vld [vmem:[%s2938 + $0x88] sm:$0x3]
        %v2957 = vld [vmem:[%s2938 + $0x90] sm:$0xff]
        %v2958 = vld [vmem:[%s2938 + $0x98] sm:$0xff]
        %v2959 = vld [vmem:[%s2938 + $0xa0] sm:$0x3]
        %v2960 = vld [vmem:[%s2938 + $0xa8] sm:$0xff]
        %v2961 = vld [vmem:[%s2938 + $0xb0] sm:$0xff]
        %v2962 = vld [vmem:[%s2938 + $0xb8] sm:$0x3]
        %v2987 = vrot.slane %v2939, 1
        %v2988 = vrot.slane %v2940, 1
        %v2989 = vsel %vm320, %v2987, %v2988
        %v2990 = vrot.slane %v2941, 1
        %v2991 = vsel %vm320, %v2988, %v2990
        %v2992 = vrot.slane %v2942, 1
        %v2993 = vrot.slane %v2943, 1
        %v2994 = vsel %vm320, %v2992, %v2993
        %v2995 = vrot.slane %v2944, 1
        %v2996 = vsel %vm320, %v2993, %v2995
        %v2997 = vrot.slane %v2945, 1
        %v2998 = vrot.slane %v2946, 1
        %v2999 = vsel %vm320, %v2997, %v2998
        %v3000 = vrot.slane %v2947, 1
        %v3001 = vsel %vm320, %v2998, %v3000
        %v3002 = vrot.slane %v2948, 1
        %v3003 = vrot.slane %v2949, 1
        %v3004 = vsel %vm320, %v3002, %v3003
        %v3005 = vrot.slane %v2950, 1
        %v3006 = vsel %vm320, %v3003, %v3005
        %v3007 = vrot.slane %v2951, 1
        %v3008 = vrot.slane %v2952, 1
        %v3009 = vsel %vm320, %v3007, %v3008
        %v3010 = vrot.slane %v2953, 1
        %v3011 = vsel %vm320, %v3008, %v3010
        %v3012 = vrot.slane %v2954, 1
        %v3013 = vrot.slane %v2955, 1
        %v3014 = vsel %vm320, %v3012, %v3013
        %v3015 = vrot.slane %v2956, 1
        %v3016 = vsel %vm320, %v3013, %v3015
        %v3017 = vrot.slane %v2957, 1
        %v3018 = vrot.slane %v2958, 1
        %v3019 = vsel %vm320, %v3017, %v3018
        %v3020 = vrot.slane %v2959, 1
        %v3021 = vsel %vm320, %v3018, %v3020
        %v3022 = vrot.slane %v2960, 1
        %v3023 = vrot.slane %v2961, 1
        %v3024 = vsel %vm320, %v3022, %v3023
        %v3025 = vrot.slane %v2962, 1
        %v3026 = vsel %vm320, %v3023, %v3025
        %v3043 = vrot.slane %v2939, 2
        %v3044 = vrot.slane %v2940, 2
        %v3045 = vsel %vm391, %v3043, %v3044
        %v3046 = vrot.slane %v2941, 2
        %v3047 = vsel %vm391, %v3044, %v3046
        %v3048 = vrot.slane %v2942, 2
        %v3049 = vrot.slane %v2943, 2
        %v3050 = vsel %vm391, %v3048, %v3049
        %v3051 = vrot.slane %v2944, 2
        %v3052 = vsel %vm391, %v3049, %v3051
        %v3053 = vrot.slane %v2945, 2
        %v3054 = vrot.slane %v2946, 2
        %v3055 = vsel %vm391, %v3053, %v3054
        %v3056 = vrot.slane %v2947, 2
        %v3057 = vsel %vm391, %v3054, %v3056
        %v3058 = vrot.slane %v2948, 2
        %v3059 = vrot.slane %v2949, 2
        %v3060 = vsel %vm391, %v3058, %v3059
        %v3061 = vrot.slane %v2950, 2
        %v3062 = vsel %vm391, %v3059, %v3061
        %v3063 = vrot.slane %v2951, 2
        %v3064 = vrot.slane %v2952, 2
        %v3065 = vsel %vm391, %v3063, %v3064
        %v3066 = vrot.slane %v2953, 2
        %v3067 = vsel %vm391, %v3064, %v3066
        %v3068 = vrot.slane %v2954, 2
        %v3069 = vrot.slane %v2955, 2
        %v3070 = vsel %vm391, %v3068, %v3069
        %v3071 = vrot.slane %v2956, 2
        %v3072 = vsel %vm391, %v3069, %v3071
        %v3073 = vrot.slane %v2957, 2
        %v3074 = vrot.slane %v2958, 2
        %v3075 = vsel %vm391, %v3073, %v3074
        %v3076 = vrot.slane %v2959, 2
        %v3077 = vsel %vm391, %v3074, %v3076
        %v3078 = vrot.slane %v2960, 2
        %v3079 = vrot.slane %v2961, 2
        %v3080 = vsel %vm391, %v3078, %v3079
        %v3081 = vrot.slane %v2962, 2
        %v3082 = vsel %vm391, %v3079, %v3081
        %v3099 = vpack.c.bf16 %v2940, %v2939
        %v3100 = vpack.c.bf16 %v2991, %v2989
        %v3101 = vpack.c.bf16 %v3047, %v3045
        %v3102 = vpack.c.bf16 %v2943, %v2942
        %v3103 = vpack.c.bf16 %v2996, %v2994
        %v3104 = vpack.c.bf16 %v3052, %v3050
        %v3105 = vpack.c.bf16 %v2946, %v2945
        %v3106 = vpack.c.bf16 %v3001, %v2999
        %v3107 = vpack.c.bf16 %v3057, %v3055
        %v3108 = vpack.c.bf16 %v2949, %v2948
        %v3109 = vpack.c.bf16 %v3006, %v3004
        %v3110 = vpack.c.bf16 %v3062, %v3060
        %v3111 = vpack.c.bf16 %v2952, %v2951
        %v3112 = vpack.c.bf16 %v3011, %v3009
        %v3113 = vpack.c.bf16 %v3067, %v3065
        %v3114 = vpack.c.bf16 %v2955, %v2954
        %v3115 = vpack.c.bf16 %v3016, %v3014
        %v3116 = vpack.c.bf16 %v3072, %v3070
        %v3117 = vpack.c.bf16 %v2958, %v2957
        %v3118 = vpack.c.bf16 %v3021, %v3019
        %v3119 = vpack.c.bf16 %v3077, %v3075
        %v3120 = vpack.c.bf16 %v2961, %v2960
        %v3121 = vpack.c.bf16 %v3026, %v3024
        %v3122 = vpack.c.bf16 %v3082, %v3080
        %s3123 = scalar_lea.vmem %s3, 192
        %v3124 = vld [vmem:[%s3123] sm:$0xf]
        %v3125 = vld [vmem:[%s3123 + $0x4] sm:$0xf]
        %v3126 = vld [vmem:[%s3123 + $0x8] sm:$0xf]
        %v3127 = vld [vmem:[%s3123 + $0xc] sm:$0xf]
        %v3128 = vld [vmem:[%s3123 + $0x10] sm:$0xf]
        %v3129 = vld [vmem:[%s3123 + $0x14] sm:$0xf]
        %v3130 = vld [vmem:[%s3123 + $0x18] sm:$0xf]
        %v3131 = vld [vmem:[%s3123 + $0x1c] sm:$0xf]
        %v3132 = vld [vmem:[%s3123 + $0x20] sm:$0xf]
        %v3133 = vld [vmem:[%s3123 + $0x24] sm:$0xf]
        %v3134 = vld [vmem:[%s3123 + $0x28] sm:$0xf]
        %v3135 = vld [vmem:[%s3123 + $0x2c] sm:$0xf]
        %v3136 = vld [vmem:[%s3123 + $0x30] sm:$0xf]
        %v3137 = vld [vmem:[%s3123 + $0x34] sm:$0xf]
        %v3138 = vld [vmem:[%s3123 + $0x38] sm:$0xf]
        %v3139 = vld [vmem:[%s3123 + $0x3c] sm:$0xf]
        %v3140 = vld [vmem:[%s3123 + $0x40] sm:$0xf]
        %v3141 = vld [vmem:[%s3123 + $0x44] sm:$0xf]
        %v3142 = vld [vmem:[%s3123 + $0x48] sm:$0xf]
        %v3143 = vld [vmem:[%s3123 + $0x4c] sm:$0xf]
        %v3144 = vld [vmem:[%s3123 + $0x50] sm:$0xf]
        %v3145 = vld [vmem:[%s3123 + $0x54] sm:$0xf]
        %v3146 = vld [vmem:[%s3123 + $0x58] sm:$0xf]
        %v3147 = vld [vmem:[%s3123 + $0x5c] sm:$0xf]
        %v3148 = vld [vmem:[%s3123 + $0x60] sm:$0xf]
        %v3149 = vld [vmem:[%s3123 + $0x64] sm:$0xf]
        %v3150 = vld [vmem:[%s3123 + $0x68] sm:$0xf]
        %v3151 = vld [vmem:[%s3123 + $0x6c] sm:$0xf]
        %v3152 = vld [vmem:[%s3123 + $0x70] sm:$0xf]
        %v3153 = vld [vmem:[%s3123 + $0x74] sm:$0xf]
        %v3154 = vld [vmem:[%s3123 + $0x78] sm:$0xf]
        %v3155 = vld [vmem:[%s3123 + $0x7c] sm:$0xf]
        %v3156 = vld [vmem:[%s3123 + $0x80] sm:$0xf]
        %v3157 = vld [vmem:[%s3123 + $0x84] sm:$0xf]
        %v3158 = vld [vmem:[%s3123 + $0x88] sm:$0xf]
        %v3159 = vld [vmem:[%s3123 + $0x8c] sm:$0xf]
        %v3160 = vld [vmem:[%s3123 + $0x90] sm:$0xf]
        %v3161 = vld [vmem:[%s3123 + $0x94] sm:$0xf]
        %v3162 = vld [vmem:[%s3123 + $0x98] sm:$0xf]
        %v3163 = vld [vmem:[%s3123 + $0x9c] sm:$0xf]
        %v3164 = vld [vmem:[%s3123 + $0xa0] sm:$0xf]
        %v3165 = vld [vmem:[%s3123 + $0xa4] sm:$0xf]
        %v3166 = vld [vmem:[%s3123 + $0xa8] sm:$0xf]
        %v3167 = vld [vmem:[%s3123 + $0xac] sm:$0xf]
        %v3168 = vld [vmem:[%s3123 + $0xb0] sm:$0xf]
        %v3169 = vld [vmem:[%s3123 + $0xb4] sm:$0xf]
        %v3170 = vld [vmem:[%s3123 + $0xb8] sm:$0xf]
        %v3171 = vld [vmem:[%s3123 + $0xbc] sm:$0xf]
        %v3220 = vunpack.c.l.b16 %v3124
        %v3221 = vunpack.c.l.b16 %v3125
        %v3222 = vunpack.c.l.b16 %v3126
        %v3223 = vunpack.c.l.b16 %v3127
        %v3224 = vunpack.c.l.b16 %v3128
        %v3225 = vunpack.c.l.b16 %v3129
        %v3226 = vunpack.c.l.b16 %v3130
        %v3227 = vunpack.c.l.b16 %v3131
        %v3228 = vunpack.c.l.b16 %v3132
        %v3229 = vunpack.c.l.b16 %v3133
        %v3230 = vunpack.c.l.b16 %v3134
        %v3231 = vunpack.c.l.b16 %v3135
        %v3232 = vunpack.c.l.b16 %v3136
        %v3233 = vunpack.c.l.b16 %v3137
        %v3234 = vunpack.c.l.b16 %v3138
        %v3235 = vunpack.c.l.b16 %v3139
        %v3236 = vunpack.c.l.b16 %v3140
        %v3237 = vunpack.c.l.b16 %v3141
        %v3238 = vunpack.c.l.b16 %v3142
        %v3239 = vunpack.c.l.b16 %v3143
        %v3240 = vunpack.c.l.b16 %v3144
        %v3241 = vunpack.c.l.b16 %v3145
        %v3242 = vunpack.c.l.b16 %v3146
        %v3243 = vunpack.c.l.b16 %v3147
        %v3244 = vunpack.c.l.b16 %v3148
        %v3245 = vunpack.c.l.b16 %v3149
        %v3246 = vunpack.c.l.b16 %v3150
        %v3247 = vunpack.c.l.b16 %v3151
        %v3248 = vunpack.c.l.b16 %v3152
        %v3249 = vunpack.c.l.b16 %v3153
        %v3250 = vunpack.c.l.b16 %v3154
        %v3251 = vunpack.c.l.b16 %v3155
        %v3252 = vunpack.c.l.b16 %v3156
        %v3253 = vunpack.c.l.b16 %v3157
        %v3254 = vunpack.c.l.b16 %v3158
        %v3255 = vunpack.c.l.b16 %v3159
        %v3256 = vunpack.c.l.b16 %v3160
        %v3257 = vunpack.c.l.b16 %v3161
        %v3258 = vunpack.c.l.b16 %v3162
        %v3259 = vunpack.c.l.b16 %v3163
        %v3260 = vunpack.c.l.b16 %v3164
        %v3261 = vunpack.c.l.b16 %v3165
        %v3262 = vunpack.c.l.b16 %v3166
        %v3263 = vunpack.c.l.b16 %v3167
        %v3264 = vunpack.c.l.b16 %v3168
        %v3265 = vunpack.c.l.b16 %v3169
        %v3266 = vunpack.c.l.b16 %v3170
        %v3267 = vunpack.c.l.b16 %v3171
        %v3268 = vpack.c.b16 %v3221, %v3220
        %v3269 = vpack.c.b16 %v3223, %v3222
        %v3270 = vpack.c.b16 %v3225, %v3224
        %v3271 = vpack.c.b16 %v3227, %v3226
        %v3272 = vpack.c.b16 %v3229, %v3228
        %v3273 = vpack.c.b16 %v3231, %v3230
        %v3274 = vpack.c.b16 %v3233, %v3232
        %v3275 = vpack.c.b16 %v3235, %v3234
        %v3276 = vpack.c.b16 %v3237, %v3236
        %v3277 = vpack.c.b16 %v3239, %v3238
        %v3278 = vpack.c.b16 %v3241, %v3240
        %v3279 = vpack.c.b16 %v3243, %v3242
        %v3280 = vpack.c.b16 %v3245, %v3244
        %v3281 = vpack.c.b16 %v3247, %v3246
        %v3282 = vpack.c.b16 %v3249, %v3248
        %v3283 = vpack.c.b16 %v3251, %v3250
        %v3284 = vpack.c.b16 %v3253, %v3252
        %v3285 = vpack.c.b16 %v3255, %v3254
        %v3286 = vpack.c.b16 %v3257, %v3256
        %v3287 = vpack.c.b16 %v3259, %v3258
        %v3288 = vpack.c.b16 %v3261, %v3260
        %v3289 = vpack.c.b16 %v3263, %v3262
        %v3290 = vpack.c.b16 %v3265, %v3264
        %v3291 = vpack.c.b16 %v3267, %v3266
        %3316 = vmatprep.subr.bf16.mxu0 0
        %3317 = vmatpush1.bf16.msra.mxu0 %v3275
        %3318 = vmatprep.subr.bf16.mxu0 0
        %3319 = vmatpush1.bf16.msra.mxu0 %v3274
        %3320 = vmatprep.subr.bf16.mxu0 0
        %3321 = vmatpush1.bf16.msra.mxu0 %v3273
        %3322 = vmatprep.subr.bf16.mxu0 0
        %3323 = vmatpush1.bf16.msra.mxu0 %v3272
        %3324 = vmatprep.subr.bf16.mxu0 0
        %3325 = vmatpush1.bf16.msra.mxu0 %v3271
        %3326 = vmatprep.subr.bf16.mxu0 0
        %3327 = vmatpush1.bf16.msra.mxu0 %v3270
        %3328 = vmatprep.subr.bf16.mxu0 0
        %3329 = vmatpush1.bf16.msra.mxu0 %v3269
        %3330 = vmatprep.subr.bf16.mxu0 0
        %3331 = vmatpush1.bf16.msra.mxu0 %v3268
        %3332 = vmatprep.subr.bf16.mxu0 0
        %3333 = vmatpush2.bf16.msra.mxu0 %v3283
        %3334 = vmatprep.subr.bf16.mxu0 0
        %3335 = vmatpush2.bf16.msra.mxu0 %v3282
        %3336 = vmatprep.subr.bf16.mxu0 0
        %3337 = vmatpush2.bf16.msra.mxu0 %v3281
        %3338 = vmatprep.subr.bf16.mxu0 0
        %3339 = vmatpush2.bf16.msra.mxu0 %v3280
        %3340 = vmatprep.subr.bf16.mxu0 0
        %3341 = vmatpush2.bf16.msra.mxu0 %v3279
        %3342 = vmatprep.subr.bf16.mxu0 0
        %3343 = vmatpush2.bf16.msra.mxu0 %v3278
        %3344 = vmatprep.subr.bf16.mxu0 0
        %3345 = vmatpush2.bf16.msra.mxu0 %v3277
        %3346 = vmatprep.subr.bf16.mxu0 0
        %3347 = vmatpush2.bf16.msra.mxu0 %v3276
        %3348 = vmatprep.mubr.bf16.mxu0 %v3100
        %3349 = vmatmul.mubr.bf16.gmra.mxu0 %v3099
        %v3350 = vpop.f32.mrf.mxu0
        %v3351 = vadd.f32 0.0, %v3350
        %v3352 = vpop.f32.mrf.mxu0
        %v3353 = vpop.f32.mrf.mxu0
        %v3354 = vadd.f32 0.0, %v3353
        %v3355 = vpop.f32.mrf.mxu0
        %3356 = vmatprep.mubr.bf16.mxu0 %v3103
        %3357 = vmatmul.mubr.bf16.gmra.mxu0 %v3102
        %v3358 = vpop.f32.mrf.mxu0
        %v3359 = vadd.f32 0.0, %v3358
        %v3360 = vpop.f32.mrf.mxu0
        %v3361 = vpop.f32.mrf.mxu0
        %v3362 = vadd.f32 0.0, %v3361
        %v3363 = vpop.f32.mrf.mxu0
        %3364 = vmatprep.mubr.bf16.mxu0 %v3106
        %3365 = vmatmul.mubr.bf16.gmra.mxu0 %v3105
        %v3366 = vpop.f32.mrf.mxu0
        %v3367 = vadd.f32 0.0, %v3366
        %v3368 = vpop.f32.mrf.mxu0
        %v3369 = vpop.f32.mrf.mxu0
        %v3370 = vadd.f32 0.0, %v3369
        %v3371 = vpop.f32.mrf.mxu0
        %3372 = vmatprep.mubr.bf16.mxu0 %v3109
        %3373 = vmatmul.mubr.bf16.gmra.mxu0 %v3108
        %v3374 = vpop.f32.mrf.mxu0
        %v3375 = vadd.f32 0.0, %v3374
        %v3376 = vpop.f32.mrf.mxu0
        %v3377 = vpop.f32.mrf.mxu0
        %v3378 = vadd.f32 0.0, %v3377
        %v3379 = vpop.f32.mrf.mxu0
        %3380 = vmatprep.mubr.bf16.mxu0 %v3112
        %3381 = vmatmul.mubr.bf16.gmra.mxu0 %v3111
        %v3382 = vpop.f32.mrf.mxu0
        %v3383 = vadd.f32 0.0, %v3382
        %v3384 = vpop.f32.mrf.mxu0
        %v3385 = vpop.f32.mrf.mxu0
        %v3386 = vadd.f32 0.0, %v3385
        %v3387 = vpop.f32.mrf.mxu0
        %3388 = vmatprep.mubr.bf16.mxu0 %v3115
        %3389 = vmatmul.mubr.bf16.gmra.mxu0 %v3114
        %v3390 = vpop.f32.mrf.mxu0
        %v3391 = vadd.f32 0.0, %v3390
        %v3392 = vpop.f32.mrf.mxu0
        %v3393 = vpop.f32.mrf.mxu0
        %v3394 = vadd.f32 0.0, %v3393
        %v3395 = vpop.f32.mrf.mxu0
        %3396 = vmatprep.mubr.bf16.mxu0 %v3118
        %3397 = vmatmul.mubr.bf16.gmra.mxu0 %v3117
        %v3398 = vpop.f32.mrf.mxu0
        %v3399 = vadd.f32 0.0, %v3398
        %v3400 = vpop.f32.mrf.mxu0
        %v3401 = vpop.f32.mrf.mxu0
        %v3402 = vadd.f32 0.0, %v3401
        %v3403 = vpop.f32.mrf.mxu0
        %3404 = vmatprep.mubr.bf16.mxu0 %v3121
        %3405 = vmatmul.mubr.bf16.gmra.mxu0 %v3120
        %v3406 = vpop.f32.mrf.mxu0
        %v3407 = vadd.f32 0.0, %v3406
        %v3408 = vpop.f32.mrf.mxu0
        %v3409 = vpop.f32.mrf.mxu0
        %v3410 = vadd.f32 0.0, %v3409
        %v3411 = vpop.f32.mrf.mxu0
        %3412 = vdwg.mxu0
        %3413 = vmatprep.subr.bf16.mxu0 0
        %3414 = vmatpush1.bf16.msra.mxu0 %v3291
        %3415 = vmatprep.subr.bf16.mxu0 0
        %3416 = vmatpush1.bf16.msra.mxu0 %v3290
        %3417 = vmatprep.subr.bf16.mxu0 0
        %3418 = vmatpush1.bf16.msra.mxu0 %v3289
        %3419 = vmatprep.subr.bf16.mxu0 0
        %3420 = vmatpush1.bf16.msra.mxu0 %v3288
        %3421 = vmatprep.subr.bf16.mxu0 0
        %3422 = vmatpush1.bf16.msra.mxu0 %v3287
        %3423 = vmatprep.subr.bf16.mxu0 0
        %3424 = vmatpush1.bf16.msra.mxu0 %v3286
        %3425 = vmatprep.subr.bf16.mxu0 0
        %3426 = vmatpush1.bf16.msra.mxu0 %v3285
        %3427 = vmatprep.subr.bf16.mxu0 0
        %3428 = vmatpush1.bf16.msra.mxu0 %v3284
        %3429 = vmatprep.subr.bf16.mxu0 0
        %3430 = vmatpush2.bf16.msra.mxu0 0
        %3431 = vmatprep.subr.bf16.mxu0 0
        %3432 = vmatpush2.bf16.msra.mxu0 0
        %3433 = vmatprep.subr.bf16.mxu0 0
        %3434 = vmatpush2.bf16.msra.mxu0 0
        %3435 = vmatprep.subr.bf16.mxu0 0
        %3436 = vmatpush2.bf16.msra.mxu0 0
        %3437 = vmatprep.subr.bf16.mxu0 0
        %3438 = vmatpush2.bf16.msra.mxu0 0
        %3439 = vmatprep.subr.bf16.mxu0 0
        %3440 = vmatpush2.bf16.msra.mxu0 0
        %3441 = vmatprep.subr.bf16.mxu0 0
        %3442 = vmatpush2.bf16.msra.mxu0 0
        %3443 = vmatprep.subr.bf16.mxu0 0
        %3444 = vmatpush2.bf16.msra.mxu0 0
        %3445 = vmatprep.mubr.bf16.mxu0 0
        %3446 = vmatmul.mubr.bf16.gmra.mxu0 %v3101
        %v3447 = vpop.f32.mrf.mxu0
        %v3448 = vadd.f32 %v3351, %v3447
        %v3449 = vpop.f32.mrf.mxu0
        %v3450 = vpop.f32.mrf.mxu0
        %v3451 = vadd.f32 %v3354, %v3450
        %v3452 = vpop.f32.mrf.mxu0
        %3453 = vmatprep.mubr.bf16.mxu0 0
        %3454 = vmatmul.mubr.bf16.gmra.mxu0 %v3104
        %v3455 = vpop.f32.mrf.mxu0
        %v3456 = vadd.f32 %v3359, %v3455
        %v3457 = vpop.f32.mrf.mxu0
        %v3458 = vpop.f32.mrf.mxu0
        %v3459 = vadd.f32 %v3362, %v3458
        %v3460 = vpop.f32.mrf.mxu0
        %3461 = vmatprep.mubr.bf16.mxu0 0
        %3462 = vmatmul.mubr.bf16.gmra.mxu0 %v3107
        %v3463 = vpop.f32.mrf.mxu0
        %v3464 = vadd.f32 %v3367, %v3463
        %v3465 = vpop.f32.mrf.mxu0
        %v3466 = vpop.f32.mrf.mxu0
        %v3467 = vadd.f32 %v3370, %v3466
        %v3468 = vpop.f32.mrf.mxu0
        %3469 = vmatprep.mubr.bf16.mxu0 0
        %3470 = vmatmul.mubr.bf16.gmra.mxu0 %v3110
        %v3471 = vpop.f32.mrf.mxu0
        %v3472 = vadd.f32 %v3375, %v3471
        %v3473 = vpop.f32.mrf.mxu0
        %v3474 = vpop.f32.mrf.mxu0
        %v3475 = vadd.f32 %v3378, %v3474
        %v3476 = vpop.f32.mrf.mxu0
        %3477 = vmatprep.mubr.bf16.mxu0 0
        %3478 = vmatmul.mubr.bf16.gmra.mxu0 %v3113
        %v3479 = vpop.f32.mrf.mxu0
        %v3480 = vadd.f32 %v3383, %v3479
        %v3481 = vpop.f32.mrf.mxu0
        %v3482 = vpop.f32.mrf.mxu0
        %v3483 = vadd.f32 %v3386, %v3482
        %v3484 = vpop.f32.mrf.mxu0
        %3485 = vmatprep.mubr.bf16.mxu0 0
        %3486 = vmatmul.mubr.bf16.gmra.mxu0 %v3116
        %v3487 = vpop.f32.mrf.mxu0
        %v3488 = vadd.f32 %v3391, %v3487
        %v3489 = vpop.f32.mrf.mxu0
        %v3490 = vpop.f32.mrf.mxu0
        %v3491 = vadd.f32 %v3394, %v3490
        %v3492 = vpop.f32.mrf.mxu0
        %3493 = vmatprep.mubr.bf16.mxu0 0
        %3494 = vmatmul.mubr.bf16.gmra.mxu0 %v3119
        %v3495 = vpop.f32.mrf.mxu0
        %v3496 = vadd.f32 %v3399, %v3495
        %v3497 = vpop.f32.mrf.mxu0
        %v3498 = vpop.f32.mrf.mxu0
        %v3499 = vadd.f32 %v3402, %v3498
        %v3500 = vpop.f32.mrf.mxu0
        %3501 = vmatprep.mubr.bf16.mxu0 0
        %3502 = vmatmul.mubr.bf16.gmra.mxu0 %v3122
        %v3503 = vpop.f32.mrf.mxu0
        %v3504 = vadd.f32 %v3407, %v3503
        %v3505 = vpop.f32.mrf.mxu0
        %v3506 = vpop.f32.mrf.mxu0
        %v3507 = vadd.f32 %v3410, %v3506
        %v3508 = vpop.f32.mrf.mxu0
        %3509 = vdwg.mxu0
        %v3510 = vadd.f32 %v2922, %v3448
        %v3511 = vadd.f32 %v2923, %v3451
        %v3512 = vadd.f32 %v2924, %v3456
        %v3513 = vadd.f32 %v2925, %v3459
        %v3514 = vadd.f32 %v2926, %v3464
        %v3515 = vadd.f32 %v2927, %v3467
        %v3516 = vadd.f32 %v2928, %v3472
        %v3517 = vadd.f32 %v2929, %v3475
        %v3518 = vadd.f32 %v2930, %v3480
        %v3519 = vadd.f32 %v2931, %v3483
        %v3520 = vadd.f32 %v2932, %v3488
        %v3521 = vadd.f32 %v2933, %v3491
        %v3522 = vadd.f32 %v2934, %v3496
        %v3523 = vadd.f32 %v2935, %v3499
        %v3524 = vadd.f32 %v2936, %v3504
        %v3525 = vadd.f32 %v2937, %v3507
        %s3526 = scalar_lea.vmem [#allocation2], 48
        %v3527 = vld [vmem:[%s3526] sm:$0xff]
        %v3528 = vld [vmem:[%s3526 + $0x8] sm:$0xff]
        %v3529 = vld [vmem:[%s3526 + $0x10] sm:$0x3]
        %v3530 = vld [vmem:[%s3526 + $0x18] sm:$0xff]
        %v3531 = vld [vmem:[%s3526 + $0x20] sm:$0xff]
        %v3532 = vld [vmem:[%s3526 + $0x28] sm:$0x3]
        %v3533 = vld [vmem:[%s3526 + $0x30] sm:$0xff]
        %v3534 = vld [vmem:[%s3526 + $0x38] sm:$0xff]
        %v3535 = vld [vmem:[%s3526 + $0x40] sm:$0x3]
        %v3536 = vld [vmem:[%s3526 + $0x48] sm:$0xff]
        %v3537 = vld [vmem:[%s3526 + $0x50] sm:$0xff]
        %v3538 = vld [vmem:[%s3526 + $0x58] sm:$0x3]
        %v3539 = vld [vmem:[%s3526 + $0x60] sm:$0xff]
        %v3540 = vld [vmem:[%s3526 + $0x68] sm:$0xff]
        %v3541 = vld [vmem:[%s3526 + $0x70] sm:$0x3]
        %v3542 = vld [vmem:[%s3526 + $0x78] sm:$0xff]
        %v3543 = vld [vmem:[%s3526 + $0x80] sm:$0xff]
        %v3544 = vld [vmem:[%s3526 + $0x88] sm:$0x3]
        %v3545 = vld [vmem:[%s3526 + $0x90] sm:$0xff]
        %v3546 = vld [vmem:[%s3526 + $0x98] sm:$0xff]
        %v3547 = vld [vmem:[%s3526 + $0xa0] sm:$0x3]
        %v3548 = vld [vmem:[%s3526 + $0xa8] sm:$0xff]
        %v3549 = vld [vmem:[%s3526 + $0xb0] sm:$0xff]
        %v3550 = vld [vmem:[%s3526 + $0xb8] sm:$0x3]
        %v3575 = vrot.slane %v3527, 1
        %v3576 = vrot.slane %v3528, 1
        %v3577 = vsel %vm320, %v3575, %v3576
        %v3578 = vrot.slane %v3529, 1
        %v3579 = vsel %vm320, %v3576, %v3578
        %v3580 = vrot.slane %v3530, 1
        %v3581 = vrot.slane %v3531, 1
        %v3582 = vsel %vm320, %v3580, %v3581
        %v3583 = vrot.slane %v3532, 1
        %v3584 = vsel %vm320, %v3581, %v3583
        %v3585 = vrot.slane %v3533, 1
        %v3586 = vrot.slane %v3534, 1
        %v3587 = vsel %vm320, %v3585, %v3586
        %v3588 = vrot.slane %v3535, 1
        %v3589 = vsel %vm320, %v3586, %v3588
        %v3590 = vrot.slane %v3536, 1
        %v3591 = vrot.slane %v3537, 1
        %v3592 = vsel %vm320, %v3590, %v3591
        %v3593 = vrot.slane %v3538, 1
        %v3594 = vsel %vm320, %v3591, %v3593
        %v3595 = vrot.slane %v3539, 1
        %v3596 = vrot.slane %v3540, 1
        %v3597 = vsel %vm320, %v3595, %v3596
        %v3598 = vrot.slane %v3541, 1
        %v3599 = vsel %vm320, %v3596, %v3598
        %v3600 = vrot.slane %v3542, 1
        %v3601 = vrot.slane %v3543, 1
        %v3602 = vsel %vm320, %v3600, %v3601
        %v3603 = vrot.slane %v3544, 1
        %v3604 = vsel %vm320, %v3601, %v3603
        %v3605 = vrot.slane %v3545, 1
        %v3606 = vrot.slane %v3546, 1
        %v3607 = vsel %vm320, %v3605, %v3606
        %v3608 = vrot.slane %v3547, 1
        %v3609 = vsel %vm320, %v3606, %v3608
        %v3610 = vrot.slane %v3548, 1
        %v3611 = vrot.slane %v3549, 1
        %v3612 = vsel %vm320, %v3610, %v3611
        %v3613 = vrot.slane %v3550, 1
        %v3614 = vsel %vm320, %v3611, %v3613
        %v3631 = vrot.slane %v3527, 2
        %v3632 = vrot.slane %v3528, 2
        %v3633 = vsel %vm391, %v3631, %v3632
        %v3634 = vrot.slane %v3529, 2
        %v3635 = vsel %vm391, %v3632, %v3634
        %v3636 = vrot.slane %v3530, 2
        %v3637 = vrot.slane %v3531, 2
        %v3638 = vsel %vm391, %v3636, %v3637
        %v3639 = vrot.slane %v3532, 2
        %v3640 = vsel %vm391, %v3637, %v3639
        %v3641 = vrot.slane %v3533, 2
        %v3642 = vrot.slane %v3534, 2
        %v3643 = vsel %vm391, %v3641, %v3642
        %v3644 = vrot.slane %v3535, 2
        %v3645 = vsel %vm391, %v3642, %v3644
        %v3646 = vrot.slane %v3536, 2
        %v3647 = vrot.slane %v3537, 2
        %v3648 = vsel %vm391, %v3646, %v3647
        %v3649 = vrot.slane %v3538, 2
        %v3650 = vsel %vm391, %v3647, %v3649
        %v3651 = vrot.slane %v3539, 2
        %v3652 = vrot.slane %v3540, 2
        %v3653 = vsel %vm391, %v3651, %v3652
        %v3654 = vrot.slane %v3541, 2
        %v3655 = vsel %vm391, %v3652, %v3654
        %v3656 = vrot.slane %v3542, 2
        %v3657 = vrot.slane %v3543, 2
        %v3658 = vsel %vm391, %v3656, %v3657
        %v3659 = vrot.slane %v3544, 2
        %v3660 = vsel %vm391, %v3657, %v3659
        %v3661 = vrot.slane %v3545, 2
        %v3662 = vrot.slane %v3546, 2
        %v3663 = vsel %vm391, %v3661, %v3662
        %v3664 = vrot.slane %v3547, 2
        %v3665 = vsel %vm391, %v3662, %v3664
        %v3666 = vrot.slane %v3548, 2
        %v3667 = vrot.slane %v3549, 2
        %v3668 = vsel %vm391, %v3666, %v3667
        %v3669 = vrot.slane %v3550, 2
        %v3670 = vsel %vm391, %v3667, %v3669
        %v3687 = vpack.c.bf16 %v3528, %v3527
        %v3688 = vpack.c.bf16 %v3579, %v3577
        %v3689 = vpack.c.bf16 %v3635, %v3633
        %v3690 = vpack.c.bf16 %v3531, %v3530
        %v3691 = vpack.c.bf16 %v3584, %v3582
        %v3692 = vpack.c.bf16 %v3640, %v3638
        %v3693 = vpack.c.bf16 %v3534, %v3533
        %v3694 = vpack.c.bf16 %v3589, %v3587
        %v3695 = vpack.c.bf16 %v3645, %v3643
        %v3696 = vpack.c.bf16 %v3537, %v3536
        %v3697 = vpack.c.bf16 %v3594, %v3592
        %v3698 = vpack.c.bf16 %v3650, %v3648
        %v3699 = vpack.c.bf16 %v3540, %v3539
        %v3700 = vpack.c.bf16 %v3599, %v3597
        %v3701 = vpack.c.bf16 %v3655, %v3653
        %v3702 = vpack.c.bf16 %v3543, %v3542
        %v3703 = vpack.c.bf16 %v3604, %v3602
        %v3704 = vpack.c.bf16 %v3660, %v3658
        %v3705 = vpack.c.bf16 %v3546, %v3545
        %v3706 = vpack.c.bf16 %v3609, %v3607
        %v3707 = vpack.c.bf16 %v3665, %v3663
        %v3708 = vpack.c.bf16 %v3549, %v3548
        %v3709 = vpack.c.bf16 %v3614, %v3612
        %v3710 = vpack.c.bf16 %v3670, %v3668
        %s3711 = scalar_lea.vmem %s3, 384
        %v3712 = vld [vmem:[%s3711] sm:$0xf]
        %v3713 = vld [vmem:[%s3711 + $0x4] sm:$0xf]
        %v3714 = vld [vmem:[%s3711 + $0x8] sm:$0xf]
        %v3715 = vld [vmem:[%s3711 + $0xc] sm:$0xf]
        %v3716 = vld [vmem:[%s3711 + $0x10] sm:$0xf]
        %v3717 = vld [vmem:[%s3711 + $0x14] sm:$0xf]
        %v3718 = vld [vmem:[%s3711 + $0x18] sm:$0xf]
        %v3719 = vld [vmem:[%s3711 + $0x1c] sm:$0xf]
        %v3720 = vld [vmem:[%s3711 + $0x20] sm:$0xf]
        %v3721 = vld [vmem:[%s3711 + $0x24] sm:$0xf]
        %v3722 = vld [vmem:[%s3711 + $0x28] sm:$0xf]
        %v3723 = vld [vmem:[%s3711 + $0x2c] sm:$0xf]
        %v3724 = vld [vmem:[%s3711 + $0x30] sm:$0xf]
        %v3725 = vld [vmem:[%s3711 + $0x34] sm:$0xf]
        %v3726 = vld [vmem:[%s3711 + $0x38] sm:$0xf]
        %v3727 = vld [vmem:[%s3711 + $0x3c] sm:$0xf]
        %v3728 = vld [vmem:[%s3711 + $0x40] sm:$0xf]
        %v3729 = vld [vmem:[%s3711 + $0x44] sm:$0xf]
        %v3730 = vld [vmem:[%s3711 + $0x48] sm:$0xf]
        %v3731 = vld [vmem:[%s3711 + $0x4c] sm:$0xf]
        %v3732 = vld [vmem:[%s3711 + $0x50] sm:$0xf]
        %v3733 = vld [vmem:[%s3711 + $0x54] sm:$0xf]
        %v3734 = vld [vmem:[%s3711 + $0x58] sm:$0xf]
        %v3735 = vld [vmem:[%s3711 + $0x5c] sm:$0xf]
        %v3736 = vld [vmem:[%s3711 + $0x60] sm:$0xf]
        %v3737 = vld [vmem:[%s3711 + $0x64] sm:$0xf]
        %v3738 = vld [vmem:[%s3711 + $0x68] sm:$0xf]
        %v3739 = vld [vmem:[%s3711 + $0x6c] sm:$0xf]
        %v3740 = vld [vmem:[%s3711 + $0x70] sm:$0xf]
        %v3741 = vld [vmem:[%s3711 + $0x74] sm:$0xf]
        %v3742 = vld [vmem:[%s3711 + $0x78] sm:$0xf]
        %v3743 = vld [vmem:[%s3711 + $0x7c] sm:$0xf]
        %v3744 = vld [vmem:[%s3711 + $0x80] sm:$0xf]
        %v3745 = vld [vmem:[%s3711 + $0x84] sm:$0xf]
        %v3746 = vld [vmem:[%s3711 + $0x88] sm:$0xf]
        %v3747 = vld [vmem:[%s3711 + $0x8c] sm:$0xf]
        %v3748 = vld [vmem:[%s3711 + $0x90] sm:$0xf]
        %v3749 = vld [vmem:[%s3711 + $0x94] sm:$0xf]
        %v3750 = vld [vmem:[%s3711 + $0x98] sm:$0xf]
        %v3751 = vld [vmem:[%s3711 + $0x9c] sm:$0xf]
        %v3752 = vld [vmem:[%s3711 + $0xa0] sm:$0xf]
        %v3753 = vld [vmem:[%s3711 + $0xa4] sm:$0xf]
        %v3754 = vld [vmem:[%s3711 + $0xa8] sm:$0xf]
        %v3755 = vld [vmem:[%s3711 + $0xac] sm:$0xf]
        %v3756 = vld [vmem:[%s3711 + $0xb0] sm:$0xf]
        %v3757 = vld [vmem:[%s3711 + $0xb4] sm:$0xf]
        %v3758 = vld [vmem:[%s3711 + $0xb8] sm:$0xf]
        %v3759 = vld [vmem:[%s3711 + $0xbc] sm:$0xf]
        %v3808 = vunpack.c.l.b16 %v3712
        %v3809 = vunpack.c.l.b16 %v3713
        %v3810 = vunpack.c.l.b16 %v3714
        %v3811 = vunpack.c.l.b16 %v3715
        %v3812 = vunpack.c.l.b16 %v3716
        %v3813 = vunpack.c.l.b16 %v3717
        %v3814 = vunpack.c.l.b16 %v3718
        %v3815 = vunpack.c.l.b16 %v3719
        %v3816 = vunpack.c.l.b16 %v3720
        %v3817 = vunpack.c.l.b16 %v3721
        %v3818 = vunpack.c.l.b16 %v3722
        %v3819 = vunpack.c.l.b16 %v3723
        %v3820 = vunpack.c.l.b16 %v3724
        %v3821 = vunpack.c.l.b16 %v3725
        %v3822 = vunpack.c.l.b16 %v3726
        %v3823 = vunpack.c.l.b16 %v3727
        %v3824 = vunpack.c.l.b16 %v3728
        %v3825 = vunpack.c.l.b16 %v3729
        %v3826 = vunpack.c.l.b16 %v3730
        %v3827 = vunpack.c.l.b16 %v3731
        %v3828 = vunpack.c.l.b16 %v3732
        %v3829 = vunpack.c.l.b16 %v3733
        %v3830 = vunpack.c.l.b16 %v3734
        %v3831 = vunpack.c.l.b16 %v3735
        %v3832 = vunpack.c.l.b16 %v3736
        %v3833 = vunpack.c.l.b16 %v3737
        %v3834 = vunpack.c.l.b16 %v3738
        %v3835 = vunpack.c.l.b16 %v3739
        %v3836 = vunpack.c.l.b16 %v3740
        %v3837 = vunpack.c.l.b16 %v3741
        %v3838 = vunpack.c.l.b16 %v3742
        %v3839 = vunpack.c.l.b16 %v3743
        %v3840 = vunpack.c.l.b16 %v3744
        %v3841 = vunpack.c.l.b16 %v3745
        %v3842 = vunpack.c.l.b16 %v3746
        %v3843 = vunpack.c.l.b16 %v3747
        %v3844 = vunpack.c.l.b16 %v3748
        %v3845 = vunpack.c.l.b16 %v3749
        %v3846 = vunpack.c.l.b16 %v3750
        %v3847 = vunpack.c.l.b16 %v3751
        %v3848 = vunpack.c.l.b16 %v3752
        %v3849 = vunpack.c.l.b16 %v3753
        %v3850 = vunpack.c.l.b16 %v3754
        %v3851 = vunpack.c.l.b16 %v3755
        %v3852 = vunpack.c.l.b16 %v3756
        %v3853 = vunpack.c.l.b16 %v3757
        %v3854 = vunpack.c.l.b16 %v3758
        %v3855 = vunpack.c.l.b16 %v3759
        %v3856 = vpack.c.b16 %v3809, %v3808
        %v3857 = vpack.c.b16 %v3811, %v3810
        %v3858 = vpack.c.b16 %v3813, %v3812
        %v3859 = vpack.c.b16 %v3815, %v3814
        %v3860 = vpack.c.b16 %v3817, %v3816
        %v3861 = vpack.c.b16 %v3819, %v3818
        %v3862 = vpack.c.b16 %v3821, %v3820
        %v3863 = vpack.c.b16 %v3823, %v3822
        %v3864 = vpack.c.b16 %v3825, %v3824
        %v3865 = vpack.c.b16 %v3827, %v3826
        %v3866 = vpack.c.b16 %v3829, %v3828
        %v3867 = vpack.c.b16 %v3831, %v3830
        %v3868 = vpack.c.b16 %v3833, %v3832
        %v3869 = vpack.c.b16 %v3835, %v3834
        %v3870 = vpack.c.b16 %v3837, %v3836
        %v3871 = vpack.c.b16 %v3839, %v3838
        %v3872 = vpack.c.b16 %v3841, %v3840
        %v3873 = vpack.c.b16 %v3843, %v3842
        %v3874 = vpack.c.b16 %v3845, %v3844
        %v3875 = vpack.c.b16 %v3847, %v3846
        %v3876 = vpack.c.b16 %v3849, %v3848
        %v3877 = vpack.c.b16 %v3851, %v3850
        %v3878 = vpack.c.b16 %v3853, %v3852
        %v3879 = vpack.c.b16 %v3855, %v3854
        %3904 = vmatprep.subr.bf16.mxu0 0
        %3905 = vmatpush1.bf16.msra.mxu0 %v3863
        %3906 = vmatprep.subr.bf16.mxu0 0
        %3907 = vmatpush1.bf16.msra.mxu0 %v3862
        %3908 = vmatprep.subr.bf16.mxu0 0
        %3909 = vmatpush1.bf16.msra.mxu0 %v3861
        %3910 = vmatprep.subr.bf16.mxu0 0
        %3911 = vmatpush1.bf16.msra.mxu0 %v3860
        %3912 = vmatprep.subr.bf16.mxu0 0
        %3913 = vmatpush1.bf16.msra.mxu0 %v3859
        %3914 = vmatprep.subr.bf16.mxu0 0
        %3915 = vmatpush1.bf16.msra.mxu0 %v3858
        %3916 = vmatprep.subr.bf16.mxu0 0
        %3917 = vmatpush1.bf16.msra.mxu0 %v3857
        %3918 = vmatprep.subr.bf16.mxu0 0
        %3919 = vmatpush1.bf16.msra.mxu0 %v3856
        %3920 = vmatprep.subr.bf16.mxu0 0
        %3921 = vmatpush2.bf16.msra.mxu0 %v3871
        %3922 = vmatprep.subr.bf16.mxu0 0
        %3923 = vmatpush2.bf16.msra.mxu0 %v3870
        %3924 = vmatprep.subr.bf16.mxu0 0
        %3925 = vmatpush2.bf16.msra.mxu0 %v3869
        %3926 = vmatprep.subr.bf16.mxu0 0
        %3927 = vmatpush2.bf16.msra.mxu0 %v3868
        %3928 = vmatprep.subr.bf16.mxu0 0
        %3929 = vmatpush2.bf16.msra.mxu0 %v3867
        %3930 = vmatprep.subr.bf16.mxu0 0
        %3931 = vmatpush2.bf16.msra.mxu0 %v3866
        %3932 = vmatprep.subr.bf16.mxu0 0
        %3933 = vmatpush2.bf16.msra.mxu0 %v3865
        %3934 = vmatprep.subr.bf16.mxu0 0
        %3935 = vmatpush2.bf16.msra.mxu0 %v3864
        %3936 = vmatprep.mubr.bf16.mxu0 %v3688
        %3937 = vmatmul.mubr.bf16.gmra.mxu0 %v3687
        %v3938 = vpop.f32.mrf.mxu0
        %v3939 = vadd.f32 0.0, %v3938
        %v3940 = vpop.f32.mrf.mxu0
        %v3941 = vpop.f32.mrf.mxu0
        %v3942 = vadd.f32 0.0, %v3941
        %v3943 = vpop.f32.mrf.mxu0
        %3944 = vmatprep.mubr.bf16.mxu0 %v3691
        %3945 = vmatmul.mubr.bf16.gmra.mxu0 %v3690
        %v3946 = vpop.f32.mrf.mxu0
        %v3947 = vadd.f32 0.0, %v3946
        %v3948 = vpop.f32.mrf.mxu0
        %v3949 = vpop.f32.mrf.mxu0
        %v3950 = vadd.f32 0.0, %v3949
        %v3951 = vpop.f32.mrf.mxu0
        %3952 = vmatprep.mubr.bf16.mxu0 %v3694
        %3953 = vmatmul.mubr.bf16.gmra.mxu0 %v3693
        %v3954 = vpop.f32.mrf.mxu0
        %v3955 = vadd.f32 0.0, %v3954
        %v3956 = vpop.f32.mrf.mxu0
        %v3957 = vpop.f32.mrf.mxu0
        %v3958 = vadd.f32 0.0, %v3957
        %v3959 = vpop.f32.mrf.mxu0
        %3960 = vmatprep.mubr.bf16.mxu0 %v3697
        %3961 = vmatmul.mubr.bf16.gmra.mxu0 %v3696
        %v3962 = vpop.f32.mrf.mxu0
        %v3963 = vadd.f32 0.0, %v3962
        %v3964 = vpop.f32.mrf.mxu0
        %v3965 = vpop.f32.mrf.mxu0
        %v3966 = vadd.f32 0.0, %v3965
        %v3967 = vpop.f32.mrf.mxu0
        %3968 = vmatprep.mubr.bf16.mxu0 %v3700
        %3969 = vmatmul.mubr.bf16.gmra.mxu0 %v3699
        %v3970 = vpop.f32.mrf.mxu0
        %v3971 = vadd.f32 0.0, %v3970
        %v3972 = vpop.f32.mrf.mxu0
        %v3973 = vpop.f32.mrf.mxu0
        %v3974 = vadd.f32 0.0, %v3973
        %v3975 = vpop.f32.mrf.mxu0
        %3976 = vmatprep.mubr.bf16.mxu0 %v3703
        %3977 = vmatmul.mubr.bf16.gmra.mxu0 %v3702
        %v3978 = vpop.f32.mrf.mxu0
        %v3979 = vadd.f32 0.0, %v3978
        %v3980 = vpop.f32.mrf.mxu0
        %v3981 = vpop.f32.mrf.mxu0
        %v3982 = vadd.f32 0.0, %v3981
        %v3983 = vpop.f32.mrf.mxu0
        %3984 = vmatprep.mubr.bf16.mxu0 %v3706
        %3985 = vmatmul.mubr.bf16.gmra.mxu0 %v3705
        %v3986 = vpop.f32.mrf.mxu0
        %v3987 = vadd.f32 0.0, %v3986
        %v3988 = vpop.f32.mrf.mxu0
        %v3989 = vpop.f32.mrf.mxu0
        %v3990 = vadd.f32 0.0, %v3989
        %v3991 = vpop.f32.mrf.mxu0
        %3992 = vmatprep.mubr.bf16.mxu0 %v3709
        %3993 = vmatmul.mubr.bf16.gmra.mxu0 %v3708
        %v3994 = vpop.f32.mrf.mxu0
        %v3995 = vadd.f32 0.0, %v3994
        %v3996 = vpop.f32.mrf.mxu0
        %v3997 = vpop.f32.mrf.mxu0
        %v3998 = vadd.f32 0.0, %v3997
        %v3999 = vpop.f32.mrf.mxu0
        %4000 = vdwg.mxu0
        %4001 = vmatprep.subr.bf16.mxu0 0
        %4002 = vmatpush1.bf16.msra.mxu0 %v3879
        %4003 = vmatprep.subr.bf16.mxu0 0
        %4004 = vmatpush1.bf16.msra.mxu0 %v3878
        %4005 = vmatprep.subr.bf16.mxu0 0
        %4006 = vmatpush1.bf16.msra.mxu0 %v3877
        %4007 = vmatprep.subr.bf16.mxu0 0
        %4008 = vmatpush1.bf16.msra.mxu0 %v3876
        %4009 = vmatprep.subr.bf16.mxu0 0
        %4010 = vmatpush1.bf16.msra.mxu0 %v3875
        %4011 = vmatprep.subr.bf16.mxu0 0
        %4012 = vmatpush1.bf16.msra.mxu0 %v3874
        %4013 = vmatprep.subr.bf16.mxu0 0
        %4014 = vmatpush1.bf16.msra.mxu0 %v3873
        %4015 = vmatprep.subr.bf16.mxu0 0
        %4016 = vmatpush1.bf16.msra.mxu0 %v3872
        %4017 = vmatprep.subr.bf16.mxu0 0
        %4018 = vmatpush2.bf16.msra.mxu0 0
        %4019 = vmatprep.subr.bf16.mxu0 0
        %4020 = vmatpush2.bf16.msra.mxu0 0
        %4021 = vmatprep.subr.bf16.mxu0 0
        %4022 = vmatpush2.bf16.msra.mxu0 0
        %4023 = vmatprep.subr.bf16.mxu0 0
        %4024 = vmatpush2.bf16.msra.mxu0 0
        %4025 = vmatprep.subr.bf16.mxu0 0
        %4026 = vmatpush2.bf16.msra.mxu0 0
        %4027 = vmatprep.subr.bf16.mxu0 0
        %4028 = vmatpush2.bf16.msra.mxu0 0
        %4029 = vmatprep.subr.bf16.mxu0 0
        %4030 = vmatpush2.bf16.msra.mxu0 0
        %4031 = vmatprep.subr.bf16.mxu0 0
        %4032 = vmatpush2.bf16.msra.mxu0 0
        %4033 = vmatprep.mubr.bf16.mxu0 0
        %4034 = vmatmul.mubr.bf16.gmra.mxu0 %v3689
        %v4035 = vpop.f32.mrf.mxu0
        %v4036 = vadd.f32 %v3939, %v4035
        %v4037 = vpop.f32.mrf.mxu0
        %v4038 = vpop.f32.mrf.mxu0
        %v4039 = vadd.f32 %v3942, %v4038
        %v4040 = vpop.f32.mrf.mxu0
        %4041 = vmatprep.mubr.bf16.mxu0 0
        %4042 = vmatmul.mubr.bf16.gmra.mxu0 %v3692
        %v4043 = vpop.f32.mrf.mxu0
        %v4044 = vadd.f32 %v3947, %v4043
        %v4045 = vpop.f32.mrf.mxu0
        %v4046 = vpop.f32.mrf.mxu0
        %v4047 = vadd.f32 %v3950, %v4046
        %v4048 = vpop.f32.mrf.mxu0
        %4049 = vmatprep.mubr.bf16.mxu0 0
        %4050 = vmatmul.mubr.bf16.gmra.mxu0 %v3695
        %v4051 = vpop.f32.mrf.mxu0
        %v4052 = vadd.f32 %v3955, %v4051
        %v4053 = vpop.f32.mrf.mxu0
        %v4054 = vpop.f32.mrf.mxu0
        %v4055 = vadd.f32 %v3958, %v4054
        %v4056 = vpop.f32.mrf.mxu0
        %4057 = vmatprep.mubr.bf16.mxu0 0
        %4058 = vmatmul.mubr.bf16.gmra.mxu0 %v3698
        %v4059 = vpop.f32.mrf.mxu0
        %v4060 = vadd.f32 %v3963, %v4059
        %v4061 = vpop.f32.mrf.mxu0
        %v4062 = vpop.f32.mrf.mxu0
        %v4063 = vadd.f32 %v3966, %v4062
        %v4064 = vpop.f32.mrf.mxu0
        %4065 = vmatprep.mubr.bf16.mxu0 0
        %4066 = vmatmul.mubr.bf16.gmra.mxu0 %v3701
        %v4067 = vpop.f32.mrf.mxu0
        %v4068 = vadd.f32 %v3971, %v4067
        %v4069 = vpop.f32.mrf.mxu0
        %v4070 = vpop.f32.mrf.mxu0
        %v4071 = vadd.f32 %v3974, %v4070
        %v4072 = vpop.f32.mrf.mxu0
        %4073 = vmatprep.mubr.bf16.mxu0 0
        %4074 = vmatmul.mubr.bf16.gmra.mxu0 %v3704
        %v4075 = vpop.f32.mrf.mxu0
        %v4076 = vadd.f32 %v3979, %v4075
        %v4077 = vpop.f32.mrf.mxu0
        %v4078 = vpop.f32.mrf.mxu0
        %v4079 = vadd.f32 %v3982, %v4078
        %v4080 = vpop.f32.mrf.mxu0
        %4081 = vmatprep.mubr.bf16.mxu0 0
        %4082 = vmatmul.mubr.bf16.gmra.mxu0 %v3707
        %v4083 = vpop.f32.mrf.mxu0
        %v4084 = vadd.f32 %v3987, %v4083
        %v4085 = vpop.f32.mrf.mxu0
        %v4086 = vpop.f32.mrf.mxu0
        %v4087 = vadd.f32 %v3990, %v4086
        %v4088 = vpop.f32.mrf.mxu0
        %4089 = vmatprep.mubr.bf16.mxu0 0
        %4090 = vmatmul.mubr.bf16.gmra.mxu0 %v3710
        %v4091 = vpop.f32.mrf.mxu0
        %v4092 = vadd.f32 %v3995, %v4091
        %v4093 = vpop.f32.mrf.mxu0
        %v4094 = vpop.f32.mrf.mxu0
        %v4095 = vadd.f32 %v3998, %v4094
        %v4096 = vpop.f32.mrf.mxu0
        %4097 = vdwg.mxu0
        %v4098 = vadd.f32 %v3510, %v4036
        %v4099 = vadd.f32 %v3511, %v4039
        %v4100 = vadd.f32 %v3512, %v4044
        %v4101 = vadd.f32 %v3513, %v4047
        %v4102 = vadd.f32 %v3514, %v4052
        %v4103 = vadd.f32 %v3515, %v4055
        %v4104 = vadd.f32 %v3516, %v4060
        %v4105 = vadd.f32 %v3517, %v4063
        %v4106 = vadd.f32 %v3518, %v4068
        %v4107 = vadd.f32 %v3519, %v4071
        %v4108 = vadd.f32 %v3520, %v4076
        %v4109 = vadd.f32 %v3521, %v4079
        %v4110 = vadd.f32 %v3522, %v4084
        %v4111 = vadd.f32 %v3523, %v4087
        %v4112 = vadd.f32 %v3524, %v4092
        %v4113 = vadd.f32 %v3525, %v4095
        %v4114 = vld [vmem:[%s1600 + $0x1] sm:$0xff]
        %v4115 = vld [vmem:[%s1600 + $0x9] sm:$0xff]
        %v4116 = vld [vmem:[%s1600 + $0x19] sm:$0xff]
        %v4117 = vld [vmem:[%s1600 + $0x21] sm:$0xff]
        %v4118 = vld [vmem:[%s1600 + $0x31] sm:$0xff]
        %v4119 = vld [vmem:[%s1600 + $0x39] sm:$0xff]
        %v4120 = vld [vmem:[%s1600 + $0x49] sm:$0xff]
        %v4121 = vld [vmem:[%s1600 + $0x51] sm:$0xff]
        %v4122 = vld [vmem:[%s1600 + $0x61] sm:$0xff]
        %v4123 = vld [vmem:[%s1600 + $0x69] sm:$0xff]
        %v4124 = vld [vmem:[%s1600 + $0x79] sm:$0xff]
        %v4125 = vld [vmem:[%s1600 + $0x81] sm:$0xff]
        %v4126 = vld [vmem:[%s1600 + $0x91] sm:$0xff]
        %v4127 = vld [vmem:[%s1600 + $0x99] sm:$0xff]
        %v4128 = vld [vmem:[%s1600 + $0xa9] sm:$0xff]
        %v4129 = vld [vmem:[%s1600 + $0xb1] sm:$0xff]
        %v4130 = vadd.f32 %v4098, %v4114
        %v4131 = vadd.f32 %v4099, %v4115
        %v4132 = vadd.f32 %v4100, %v4116
        %v4133 = vadd.f32 %v4101, %v4117
        %v4134 = vadd.f32 %v4102, %v4118
        %v4135 = vadd.f32 %v4103, %v4119
        %v4136 = vadd.f32 %v4104, %v4120
        %v4137 = vadd.f32 %v4105, %v4121
        %v4138 = vadd.f32 %v4106, %v4122
        %v4139 = vadd.f32 %v4107, %v4123
        %v4140 = vadd.f32 %v4108, %v4124
        %v4141 = vadd.f32 %v4109, %v4125
        %v4142 = vadd.f32 %v4110, %v4126
        %v4143 = vadd.f32 %v4111, %v4127
        %v4144 = vadd.f32 %v4112, %v4128
        %v4145 = vadd.f32 %v4113, %v4129
        %4146 = vst [vmem:[%s241] sm:$0xff] %v4130
        %4147 = vst [vmem:[%s241 + $0x8] sm:$0xff] %v4131
        %4148 = vst [vmem:[%s241 + $0x10] sm:$0xff] %v4132
        %4149 = vst [vmem:[%s241 + $0x18] sm:$0xff] %v4133
        %4150 = vst [vmem:[%s241 + $0x20] sm:$0xff] %v4134
        %4151 = vst [vmem:[%s241 + $0x28] sm:$0xff] %v4135
        %4152 = vst [vmem:[%s241 + $0x30] sm:$0xff] %v4136
        %4153 = vst [vmem:[%s241 + $0x38] sm:$0xff] %v4137
        %4154 = vst [vmem:[%s241 + $0x40] sm:$0xff] %v4138
        %4155 = vst [vmem:[%s241 + $0x48] sm:$0xff] %v4139
        %4156 = vst [vmem:[%s241 + $0x50] sm:$0xff] %v4140
        %4157 = vst [vmem:[%s241 + $0x58] sm:$0xff] %v4141
        %4158 = vst [vmem:[%s241 + $0x60] sm:$0xff] %v4142
        %4159 = vst [vmem:[%s241 + $0x68] sm:$0xff] %v4143
        %4160 = vst [vmem:[%s241 + $0x70] sm:$0xff] %v4144
        %4161 = vst [vmem:[%s241 + $0x78] sm:$0xff] %v4145
        %s4162 = sand.u32 %s155, 1
        %s4163 = scalar_lea.sflag [#allocation4], %s4162
        %s4164 = sand.u32 %s155, 1
        %s4165 = smul.addr %s4164, 128
        %s4166 = scalar_lea.vmem [#allocation3], %s4165
        // Predicated region
        $region49: #{tpu_custom_call.1} parent=39 // pred_check
          %p4167 = pneg %p165
        $region50: #{tpu_custom_call.1} parent=39 // pred_check_branch
          %4169 = sbr.rel (%p4167) target = $region52
        $region51: #{tpu_custom_call.1} parent=39 // pred_region
          %s4170 = smul.u32 8, %s24
          %s4172 = ssub.s32 2048, 2048
          %4173 = vsyncadd %s4163, %s4172
          %s4174 = smul.addr %s4170, 2
          %s4175 = smul.addr %s23, 32
          %s4176 = sadd.s32 %s4174, %s4175
          %s4177 = smul.addr %s4176, 128
          %s4178 = scalar_lea.hbm %s5, %s4177
          %s4179 = sshll.u32 %s4166, 4
          %s4180 = int_to_ptr.vmem [resolvable:$true] %s4179
          %4185 = dma.vmem_to_hbm [thread:$0]  %s4180, 2048, %s4178, %s4163, 128, 128, 8
        $region52: #{tpu_custom_call.1} parent=39 // pred_fallthru
          _
      $region40: #{tpu_custom_call.1} parent=5 // pred_fallthru
        _
      %p4186 = scmp.le.s32.totalorder 2, %s14
      // Predicated region
      $region53: #{tpu_custom_call.1} parent=5 // pred_check
        %p4187 = pneg %p4186
      $region54: #{tpu_custom_call.1} parent=5 // pred_check_branch
        %4189 = sbr.rel (%p4187) target = $region56
      $region55: #{tpu_custom_call.1} parent=5 // pred_region
        %s4190 = ssub.s32 %s14, 2
        // Predicated region
        $region57: #{tpu_custom_call.1} parent=55 // pred_check
          %p4191 = pneg %p171
        $region58: #{tpu_custom_call.1} parent=55 // pred_check_branch
          %4193 = sbr.rel (%p4191) target = $region60
        $region59: #{tpu_custom_call.1} parent=55 // pred_region
          %s4194 = sand.u32 %s156, 1
          %s4195 = scalar_lea.sflag [#allocation4], %s4194
          %s4196 = sand.u32 %s156, 1
          %s4197 = smul.addr %s4196, 128
          %s4198 = scalar_lea.vmem [#allocation3], %s4197
          %4199 = dma.done %s4195, 2048
        $region60: #{tpu_custom_call.1} parent=55 // pred_fallthru
          _
      $region56: #{tpu_custom_call.1} parent=5 // pred_fallthru
        _
    $region6: #{tpu_custom_call.1} parent=1 // loop_footer
      %s18 = sadd.s32 1, %s14
    $region7: #{tpu_custom_call.1} parent=1 // loop_footer_branch
      %13 = sbr.rel target = $region3
    $region8: #{tpu_custom_call.1} parent=1 // loop_exit
      _
    %4200 = vsyncpa [#allocation4], 1
    %s4201 = scalar_lea.sflag [#allocation4], 1
    %4202 = vsyncpa %s4201, 1

</llo_original>
